<compile_context>
chip_gen: v7x
topology: tpu7x:2x2x1
jax: 0.10.0
libtpu: 0.0.40
codegen_flags: <defaults>
</compile_context>

<pallas_src>
import jax
import jax.numpy as jnp
import numpy as np
from jax import lax
from jax.experimental import pallas as pl
from jax.experimental.pallas import tpu as pltpu

EPS = 1e-5   # nn.BatchNorm2d default eps
_LPAD = 8    # left spatial pad inside the scratch -> interior stores are sublane-aligned


# ---------------------------------- kernel -----------------------------------
def _entry_block_kernel(x_ref, wsc_ref, bsc_ref,
                        dw1_ref, pw1_ref, b1_ref,
                        dw2_ref, pw2_ref, b2_ref,
                        o_ref, pad1_ref, pad2_ref):
    H, W, Cin = x_ref.shape
    H2, W2, Cout = o_ref.shape

    def fill_and_store(pad_ref, value, fill):
        # Border fill + interior store; interior starts at sublane-aligned col _LPAD.
        pad_ref[...] = jnp.full(pad_ref.shape, fill, jnp.float32)
        pad_ref[pl.ds(1, H), pl.ds(_LPAD, W), :] = value

    def depthwise3x3(pad_ref, dw_ref):
        # 3x3 depthwise conv (stride 1, pad 1): 9 shifted window reads from the
        # zero-bordered scratch.  dw_ref is (9, C), row k = tap (dy, dx) = (k//3, k%3).
        acc = None
        for dy in range(3):
            for dx in range(3):
                tap = pad_ref[pl.ds(dy, H), pl.ds(_LPAD - 1 + dx, W), :]
                contrib = tap * dw_ref[3 * dy + dx]
                acc = contrib if acc is None else acc + contrib
        return acc

    def pointwise(a, pw_ref, b_ref, rows):
        # 1x1 conv with BN folded into (pw, b); bf16 MXU operands, f32 accumulation.
        cin = a.shape[-1]
        z = jnp.dot(a.reshape(rows, cin).astype(jnp.bfloat16), pw_ref[...],
                    preferred_element_type=jnp.float32)
        return z + b_ref[0]

    # ---- shortcut: 1x1 conv, stride 2, BN folded (no activation) ----
    xs = x_ref[pl.ds(0, H2, stride=2), pl.ds(0, W2, stride=2), :]   # strided subsample
    residual = pointwise(xs, wsc_ref, bsc_ref, H2 * W2).reshape(H2, W2, Cout)

    # ---- conv1: depthwise 3x3 -> pointwise 1x1 (+folded BN) -> ReLU ----
    fill_and_store(pad1_ref, x_ref[...], 0.0)
    d1 = depthwise3x3(pad1_ref, dw1_ref)                            # (H, W, Cin) f32
    a1 = pointwise(d1, pw1_ref, b1_ref, H * W)
    a1 = jnp.maximum(a1, 0.0).reshape(H, W, Cout)

    # ---- conv2: depthwise 3x3 -> pointwise 1x1 (+folded BN), no activation ----
    fill_and_store(pad2_ref, a1, 0.0)
    d2 = depthwise3x3(pad2_ref, dw2_ref)                            # (H, W, Cout) f32
    a2 = pointwise(d2, pw2_ref, b2_ref, H * W).reshape(H, W, Cout)

    # ---- MaxPool2d(kernel=3, stride=2, padding=1), computed at output resolution ----
    fill_and_store(pad2_ref, a2, -jnp.inf)                          # reuse pad2 scratch
    pooled = None
    for dy in range(3):
        for dx in range(3):
            tap = pad2_ref[pl.ds(dy, H2, stride=2),
                           pl.ds(_LPAD - 1 + dx, W2, stride=2), :]  # (H2, W2, Cout)
            pooled = tap if pooled is None else jnp.maximum(pooled, tap)

    o_ref[...] = (residual + pooled).astype(o_ref.dtype)


# --------------------------------- wrapper -----------------------------------
def entry_block_forward(x, p):
    """x: (N, H, W, Cin) float32 (NHWC).  Returns (N, H//2, W//2, Cout)."""
    N, H, W, Cin = x.shape
    Cout = p["w_sc"].shape[1]
    assert H % 2 == 0 and W % 2 == 0
    H2, W2 = H // 2, W // 2

    # ---- fold inference BatchNorm + biases into the pointwise / shortcut weights ----
    def fold(w, b, bn_stats):
        gamma, beta, mean, var = bn_stats
        s = gamma * lax.rsqrt(var + EPS)
        w_f = (w * s[None, :]).astype(jnp.bfloat16)          # bf16 MXU operand
        b_f = ((b - mean) * s + beta)[None, :].astype(jnp.float32)
        return w_f, b_f

    wsc, bsc = fold(p["w_sc"], p["b_sc"], p["bn_sc"])
    pw1, b1 = fold(p["pw1"], p["db1"] @ p["pw1"] + p["pb1"], p["bn1"])
    pw2, b2 = fold(p["pw2"], p["db2"] @ p["pw2"] + p["pb2"], p["bn2"])
    dw1 = p["dw1"].reshape(9, Cin).astype(jnp.float32)        # depthwise stays f32 (VPU)
    dw2 = p["dw2"].reshape(9, Cout).astype(jnp.float32)

    def rep(shape):
        nd = len(shape)
        return pl.BlockSpec(shape, lambda n, _nd=nd: (0,) * _nd)

    in_specs = [
        pl.BlockSpec((pl.Squeezed(), H, W, Cin), lambda n: (n, 0, 0, 0)),  # x
        rep(wsc.shape), rep(bsc.shape),                                    # shortcut
        rep(dw1.shape), rep(pw1.shape), rep(b1.shape),                     # conv1
        rep(dw2.shape), rep(pw2.shape), rep(b2.shape),                     # conv2
    ]
    out_spec = pl.BlockSpec((pl.Squeezed(), H2, W2, Cout), lambda n: (n, 0, 0, 0))

    return pl.pallas_call(
        _entry_block_kernel,
        out_shape=jax.ShapeDtypeStruct((N, H2, W2, Cout), x.dtype),
        grid=(N,),
        in_specs=in_specs,
        out_specs=out_spec,
        scratch_shapes=[
            pltpu.VMEM((H + 2, W + _LPAD + 2, Cin), jnp.float32),   # padded x
            pltpu.VMEM((H + 2, W + _LPAD + 2, Cout), jnp.float32),  # padded a1 / a2
        ],
        compiler_params=pltpu.CompilerParams(dimension_semantics=("parallel",)),
    )(x, wsc, bsc, dw1, pw1, b1, dw2, pw2, b2)


# ------------------------- pure-JAX reference check --------------------------
def _bn_ref(z, bn_stats):
    gamma, beta, mean, var = bn_stats
    return (z - mean) * gamma / jnp.sqrt(var + EPS) + beta


def _dw_ref(a, dw, db, groups):
    y = lax.conv_general_dilated(a, dw[:, :, None, :], (1, 1), ((1, 1), (1, 1)),
                                 dimension_numbers=("NHWC", "HWIO", "NHWC"),
                                 feature_group_count=groups)
    return y + db


def entry_block_reference(x, p):
    Cin = x.shape[-1]
    Cout = p["w_sc"].shape[1]
    # shortcut: 1x1 conv stride 2 + BN
    r = x[:, ::2, ::2, :]
    r = jnp.einsum("nhwc,cd->nhwd", r, p["w_sc"]) + p["b_sc"]
    r = _bn_ref(r, p["bn_sc"])
    # conv1: separable (Cin -> Cout) + BN + ReLU
    a = _dw_ref(x, p["dw1"], p["db1"], Cin)
    a = jnp.einsum("nhwc,cd->nhwd", a, p["pw1"]) + p["pb1"]
    a = jax.nn.relu(_bn_ref(a, p["bn1"]))
    # conv2: separable (Cout -> Cout) + BN, no activation
    a = _dw_ref(a, p["dw2"], p["db2"], Cout)
    a = jnp.einsum("nhwc,cd->nhwd", a, p["pw2"]) + p["pb2"]
    a = _bn_ref(a, p["bn2"])
    # maxpool 3x3, stride 2, pad 1
    pooled = lax.reduce_window(a, -jnp.inf, lax.max, (1, 3, 3, 1), (1, 2, 2, 1),
                               padding=((0, 0), (1, 1), (1, 1), (0, 0)))
    return r + pooled


# ----------------------------------- main ------------------------------------
if __name__ == "__main__":
    N, H, W = 2, 16, 16
    Cin, Cout = 4, 8

    key = jax.random.PRNGKey(0)
    ks = jax.random.split(key, 16)

    def nrm(k, shape, scale=0.2):
        return scale * jax.random.normal(k, shape, jnp.float32)

    def bn_stats(k, c):
        k1, k2, k3, k4 = jax.random.split(k, 4)
        gamma = jax.random.uniform(k1, (c,), jnp.float32, 0.8, 1.2)
        beta = nrm(k2, (c,), 0.1)
        mean = nrm(k3, (c,), 0.1)
        var = jax.random.uniform(k4, (c,), jnp.float32, 0.5, 1.5)
        return (gamma, beta, mean, var)

    params = dict(
        # shortcut: Conv2d(Cin, Cout, 1, stride=2) + BN
        w_sc=nrm(ks[0], (Cin, Cout)), b_sc=nrm(ks[1], (Cout,), 0.1), bn_sc=bn_stats(ks[2], Cout),
        # conv1: SeparableConv(Cin -> Cout, 3x3) + BN (+ ReLU after)
        dw1=nrm(ks[3], (3, 3, Cin)), db1=nrm(ks[4], (Cin,), 0.1),
        pw1=nrm(ks[5], (Cin, Cout)), pb1=nrm(ks[6], (Cout,), 0.1), bn1=bn_stats(ks[7], Cout),
        # conv2: SeparableConv(Cout -> Cout, 3x3) + BN (no act)
        dw2=nrm(ks[8], (3, 3, Cout)), db2=nrm(ks[9], (Cout,), 0.1),
        pw2=nrm(ks[10], (Cout, Cout)), pb2=nrm(ks[11], (Cout,), 0.1), bn2=bn_stats(ks[12], Cout),
    )

    x = jax.random.normal(ks[13], (N, H, W, Cin), jnp.float32)

    out = jax.block_until_ready(entry_block_forward(x, params))
    ref = entry_block_reference(x, params)

    # Tolerance accounts for bf16 MXU operands in the kernel vs. f32 reference.
    np.testing.assert_allclose(np.asarray(out), np.asarray(ref), rtol=3e-2, atol=3e-2)

    print("KERNEL_OK")
</pallas_src>

<mosaic_0001>
module attributes {stable_mosaic.version = 11 : i64} {
  func.func @_entry_block_kernel(%arg0: i32, %arg1: memref<1x16x16x4xf32, #tpu.memory_space<vmem>>, %arg2: memref<4x8xbf16, #tpu.memory_space<vmem>>, %arg3: memref<1x8xf32, #tpu.memory_space<vmem>>, %arg4: memref<9x4xf32, #tpu.memory_space<vmem>>, %arg5: memref<4x8xbf16, #tpu.memory_space<vmem>>, %arg6: memref<1x8xf32, #tpu.memory_space<vmem>>, %arg7: memref<9x8xf32, #tpu.memory_space<vmem>>, %arg8: memref<8x8xbf16, #tpu.memory_space<vmem>>, %arg9: memref<1x8xf32, #tpu.memory_space<vmem>>, %arg10: memref<1x8x8x8xf32, #tpu.memory_space<vmem>>, %arg11: memref<18x26x4xf32, #tpu.memory_space<vmem>>, %arg12: memref<18x26x8xf32, #tpu.memory_space<vmem>>) attributes {dimension_semantics = [#tpu.dimension_semantics<parallel>], iteration_bounds = array<i64: 2>, scalar_prefetch = 0 : i64, scratch_operands = 2 : i64, tpu.core_type = #tpu.core_type<tc>, window_params = [{transform_indices = @transform_0, window_bounds = array<i64: 1, 16, 16, 4>}, {pipeline_mode = #tpu.pipeline_mode<synchronous>, transform_indices = @transform_1, window_bounds = array<i64: 4, 8>}, {pipeline_mode = #tpu.pipeline_mode<synchronous>, transform_indices = @transform_2, window_bounds = array<i64: 1, 8>}, {pipeline_mode = #tpu.pipeline_mode<synchronous>, transform_indices = @transform_3, window_bounds = array<i64: 9, 4>}, {pipeline_mode = #tpu.pipeline_mode<synchronous>, transform_indices = @transform_4, window_bounds = array<i64: 4, 8>}, {pipeline_mode = #tpu.pipeline_mode<synchronous>, transform_indices = @transform_5, window_bounds = array<i64: 1, 8>}, {pipeline_mode = #tpu.pipeline_mode<synchronous>, transform_indices = @transform_6, window_bounds = array<i64: 9, 8>}, {pipeline_mode = #tpu.pipeline_mode<synchronous>, transform_indices = @transform_7, window_bounds = array<i64: 8, 8>}, {pipeline_mode = #tpu.pipeline_mode<synchronous>, transform_indices = @transform_8, window_bounds = array<i64: 1, 8>}, {transform_indices = @transform_9, window_bounds = array<i64: 1, 8, 8, 8>}]} {
    %c0 = arith.constant 0 : index
    %c0_0 = arith.constant 0 : index
    %c0_1 = arith.constant 0 : index
    %c0_2 = arith.constant 0 : index
    %0 = tpu.strided_load %arg1[%c0, %c0_0, %c0_1, %c0_2] {strides = array<i32: 1, 2, 2, 1>} : memref<1x16x16x4xf32, #tpu.memory_space<vmem>>, vector<1x8x8x4xf32>
    %1 = vector.shape_cast %0 : vector<1x8x8x4xf32> to vector<8x8x4xf32>
    %2 = vector.shape_cast %1 : vector<8x8x4xf32> to vector<64x4xf32>
    %3 = arith.truncf %2 : vector<64x4xf32> to vector<64x4xbf16>
    %c0_3 = arith.constant 0 : index
    %c0_4 = arith.constant 0 : index
    %4 = vector.load %arg2[%c0_3, %c0_4] : memref<4x8xbf16, #tpu.memory_space<vmem>>, vector<4x8xbf16>
    %cst = arith.constant dense<0.000000e+00> : vector<64x8xf32>
    %5 = tpu.matmul %3, %4, %cst {dimension_numbers = #tpu.dot_dimension_numbers<[1], [0], [0], [1], [0, 0, 1, 1], [], []>} : vector<64x4xbf16>, vector<4x8xbf16>, vector<64x8xf32> -> vector<64x8xf32>
    %c0_5 = arith.constant 0 : index
    %c0_6 = arith.constant 0 : index
    %6 = vector.load %arg3[%c0_5, %c0_6] : memref<1x8xf32, #tpu.memory_space<vmem>>, vector<1x8xf32>
    %7 = vector.shape_cast %6 : vector<1x8xf32> to vector<8xf32>
    %8 = vector.shape_cast %7 : vector<8xf32> to vector<1x8xf32>
    %9 = vector.broadcast %8 : vector<1x8xf32> to vector<64x8xf32>
    %10 = arith.addf %5, %9 : vector<64x8xf32>
    %11 = vector.shape_cast %10 : vector<64x8xf32> to vector<8x8x8xf32>
    %c0_7 = arith.constant 0 : index
    %c0_8 = arith.constant 0 : index
    %c0_9 = arith.constant 0 : index
    %c0_10 = arith.constant 0 : index
    %12 = vector.load %arg1[%c0_7, %c0_8, %c0_9, %c0_10] : memref<1x16x16x4xf32, #tpu.memory_space<vmem>>, vector<1x16x16x4xf32>
    %13 = vector.shape_cast %12 : vector<1x16x16x4xf32> to vector<16x16x4xf32>
    %cst_11 = arith.constant 0.000000e+00 : f32
    %14 = vector.broadcast %cst_11 : f32 to vector<18x26x4xf32>
    %c0_12 = arith.constant 0 : index
    %c0_13 = arith.constant 0 : index
    %c0_14 = arith.constant 0 : index
    %15 = vector.load %arg11[%c0_12, %c0_13, %c0_14] : memref<18x26x4xf32, #tpu.memory_space<vmem>>, vector<18x26x4xf32>
    tpu.vector_store %arg11[%c0_12, %c0_13, %c0_14], %14 {strides = array<i32>} : memref<18x26x4xf32, #tpu.memory_space<vmem>>, vector<18x26x4xf32>,
    %c1 = arith.constant 1 : index
    %c8 = arith.constant 8 : index
    %c0_15 = arith.constant 0 : index
    %16 = vector.load %arg11[%c1, %c8, %c0_15] : memref<18x26x4xf32, #tpu.memory_space<vmem>>, vector<16x16x4xf32>
    tpu.vector_store %arg11[%c1, %c8, %c0_15], %13 {strides = array<i32>} : memref<18x26x4xf32, #tpu.memory_space<vmem>>, vector<16x16x4xf32>,
    %c0_16 = arith.constant 0 : index
    %c7 = arith.constant 7 : index
    %c0_17 = arith.constant 0 : index
    %17 = vector.load %arg11[%c0_16, %c7, %c0_17] : memref<18x26x4xf32, #tpu.memory_space<vmem>>, vector<16x16x4xf32>
    %c0_18 = arith.constant 0 : index
    %c0_19 = arith.constant 0 : index
    %18 = vector.load %arg4[%c0_18, %c0_19] : memref<9x4xf32, #tpu.memory_space<vmem>>, vector<1x4xf32>
    %19 = vector.shape_cast %18 : vector<1x4xf32> to vector<4xf32>
    %20 = vector.shape_cast %19 : vector<4xf32> to vector<1x1x4xf32>
    %21 = vector.broadcast %20 : vector<1x1x4xf32> to vector<16x16x4xf32>
    %22 = arith.mulf %17, %21 : vector<16x16x4xf32>
    %c0_20 = arith.constant 0 : index
    %c8_21 = arith.constant 8 : index
    %c0_22 = arith.constant 0 : index
    %23 = vector.load %arg11[%c0_20, %c8_21, %c0_22] : memref<18x26x4xf32, #tpu.memory_space<vmem>>, vector<16x16x4xf32>
    %c1_23 = arith.constant 1 : index
    %c0_24 = arith.constant 0 : index
    %24 = vector.load %arg4[%c1_23, %c0_24] : memref<9x4xf32, #tpu.memory_space<vmem>>, vector<1x4xf32>
    %25 = vector.shape_cast %24 : vector<1x4xf32> to vector<4xf32>
    %26 = vector.shape_cast %25 : vector<4xf32> to vector<1x1x4xf32>
    %27 = vector.broadcast %26 : vector<1x1x4xf32> to vector<16x16x4xf32>
    %28 = arith.mulf %23, %27 : vector<16x16x4xf32>
    %29 = arith.addf %22, %28 : vector<16x16x4xf32>
    %c0_25 = arith.constant 0 : index
    %c9 = arith.constant 9 : index
    %c0_26 = arith.constant 0 : index
    %30 = vector.load %arg11[%c0_25, %c9, %c0_26] : memref<18x26x4xf32, #tpu.memory_space<vmem>>, vector<16x16x4xf32>
    %c2 = arith.constant 2 : index
    %c0_27 = arith.constant 0 : index
    %31 = vector.load %arg4[%c2, %c0_27] : memref<9x4xf32, #tpu.memory_space<vmem>>, vector<1x4xf32>
    %32 = vector.shape_cast %31 : vector<1x4xf32> to vector<4xf32>
    %33 = vector.shape_cast %32 : vector<4xf32> to vector<1x1x4xf32>
    %34 = vector.broadcast %33 : vector<1x1x4xf32> to vector<16x16x4xf32>
    %35 = arith.mulf %30, %34 : vector<16x16x4xf32>
    %36 = arith.addf %29, %35 : vector<16x16x4xf32>
    %c1_28 = arith.constant 1 : index
    %c7_29 = arith.constant 7 : index
    %c0_30 = arith.constant 0 : index
    %37 = vector.load %arg11[%c1_28, %c7_29, %c0_30] : memref<18x26x4xf32, #tpu.memory_space<vmem>>, vector<16x16x4xf32>
    %c3 = arith.constant 3 : index
    %c0_31 = arith.constant 0 : index
    %38 = vector.load %arg4[%c3, %c0_31] : memref<9x4xf32, #tpu.memory_space<vmem>>, vector<1x4xf32>
    %39 = vector.shape_cast %38 : vector<1x4xf32> to vector<4xf32>
    %40 = vector.shape_cast %39 : vector<4xf32> to vector<1x1x4xf32>
    %41 = vector.broadcast %40 : vector<1x1x4xf32> to vector<16x16x4xf32>
    %42 = arith.mulf %37, %41 : vector<16x16x4xf32>
    %43 = arith.addf %36, %42 : vector<16x16x4xf32>
    %c1_32 = arith.constant 1 : index
    %c8_33 = arith.constant 8 : index
    %c0_34 = arith.constant 0 : index
    %44 = vector.load %arg11[%c1_32, %c8_33, %c0_34] : memref<18x26x4xf32, #tpu.memory_space<vmem>>, vector<16x16x4xf32>
    %c4 = arith.constant 4 : index
    %c0_35 = arith.constant 0 : index
    %45 = vector.load %arg4[%c4, %c0_35] : memref<9x4xf32, #tpu.memory_space<vmem>>, vector<1x4xf32>
    %46 = vector.shape_cast %45 : vector<1x4xf32> to vector<4xf32>
    %47 = vector.shape_cast %46 : vector<4xf32> to vector<1x1x4xf32>
    %48 = vector.broadcast %47 : vector<1x1x4xf32> to vector<16x16x4xf32>
    %49 = arith.mulf %44, %48 : vector<16x16x4xf32>
    %50 = arith.addf %43, %49 : vector<16x16x4xf32>
    %c1_36 = arith.constant 1 : index
    %c9_37 = arith.constant 9 : index
    %c0_38 = arith.constant 0 : index
    %51 = vector.load %arg11[%c1_36, %c9_37, %c0_38] : memref<18x26x4xf32, #tpu.memory_space<vmem>>, vector<16x16x4xf32>
    %c5 = arith.constant 5 : index
    %c0_39 = arith.constant 0 : index
    %52 = vector.load %arg4[%c5, %c0_39] : memref<9x4xf32, #tpu.memory_space<vmem>>, vector<1x4xf32>
    %53 = vector.shape_cast %52 : vector<1x4xf32> to vector<4xf32>
    %54 = vector.shape_cast %53 : vector<4xf32> to vector<1x1x4xf32>
    %55 = vector.broadcast %54 : vector<1x1x4xf32> to vector<16x16x4xf32>
    %56 = arith.mulf %51, %55 : vector<16x16x4xf32>
    %57 = arith.addf %50, %56 : vector<16x16x4xf32>
    %c2_40 = arith.constant 2 : index
    %c7_41 = arith.constant 7 : index
    %c0_42 = arith.constant 0 : index
    %58 = vector.load %arg11[%c2_40, %c7_41, %c0_42] : memref<18x26x4xf32, #tpu.memory_space<vmem>>, vector<16x16x4xf32>
    %c6 = arith.constant 6 : index
    %c0_43 = arith.constant 0 : index
    %59 = vector.load %arg4[%c6, %c0_43] : memref<9x4xf32, #tpu.memory_space<vmem>>, vector<1x4xf32>
    %60 = vector.shape_cast %59 : vector<1x4xf32> to vector<4xf32>
    %61 = vector.shape_cast %60 : vector<4xf32> to vector<1x1x4xf32>
    %62 = vector.broadcast %61 : vector<1x1x4xf32> to vector<16x16x4xf32>
    %63 = arith.mulf %58, %62 : vector<16x16x4xf32>
    %64 = arith.addf %57, %63 : vector<16x16x4xf32>
    %c2_44 = arith.constant 2 : index
    %c8_45 = arith.constant 8 : index
    %c0_46 = arith.constant 0 : index
    %65 = vector.load %arg11[%c2_44, %c8_45, %c0_46] : memref<18x26x4xf32, #tpu.memory_space<vmem>>, vector<16x16x4xf32>
    %c7_47 = arith.constant 7 : index
    %c0_48 = arith.constant 0 : index
    %66 = vector.load %arg4[%c7_47, %c0_48] : memref<9x4xf32, #tpu.memory_space<vmem>>, vector<1x4xf32>
    %67 = vector.shape_cast %66 : vector<1x4xf32> to vector<4xf32>
    %68 = vector.shape_cast %67 : vector<4xf32> to vector<1x1x4xf32>
    %69 = vector.broadcast %68 : vector<1x1x4xf32> to vector<16x16x4xf32>
    %70 = arith.mulf %65, %69 : vector<16x16x4xf32>
    %71 = arith.addf %64, %70 : vector<16x16x4xf32>
    %c2_49 = arith.constant 2 : index
    %c9_50 = arith.constant 9 : index
    %c0_51 = arith.constant 0 : index
    %72 = vector.load %arg11[%c2_49, %c9_50, %c0_51] : memref<18x26x4xf32, #tpu.memory_space<vmem>>, vector<16x16x4xf32>
    %c8_52 = arith.constant 8 : index
    %c0_53 = arith.constant 0 : index
    %73 = vector.load %arg4[%c8_52, %c0_53] : memref<9x4xf32, #tpu.memory_space<vmem>>, vector<1x4xf32>
    %74 = vector.shape_cast %73 : vector<1x4xf32> to vector<4xf32>
    %75 = vector.shape_cast %74 : vector<4xf32> to vector<1x1x4xf32>
    %76 = vector.broadcast %75 : vector<1x1x4xf32> to vector<16x16x4xf32>
    %77 = arith.mulf %72, %76 : vector<16x16x4xf32>
    %78 = arith.addf %71, %77 : vector<16x16x4xf32>
    %79 = vector.shape_cast %78 : vector<16x16x4xf32> to vector<256x4xf32>
    %80 = arith.truncf %79 : vector<256x4xf32> to vector<256x4xbf16>
    %c0_54 = arith.constant 0 : index
    %c0_55 = arith.constant 0 : index
    %81 = vector.load %arg5[%c0_54, %c0_55] : memref<4x8xbf16, #tpu.memory_space<vmem>>, vector<4x8xbf16>
    %cst_56 = arith.constant dense<0.000000e+00> : vector<256x8xf32>
    %82 = tpu.matmul %80, %81, %cst_56 {dimension_numbers = #tpu.dot_dimension_numbers<[1], [0], [0], [1], [0, 0, 1, 1], [], []>} : vector<256x4xbf16>, vector<4x8xbf16>, vector<256x8xf32> -> vector<256x8xf32>
    %c0_57 = arith.constant 0 : index
    %c0_58 = arith.constant 0 : index
    %83 = vector.load %arg6[%c0_57, %c0_58] : memref<1x8xf32, #tpu.memory_space<vmem>>, vector<1x8xf32>
    %84 = vector.shape_cast %83 : vector<1x8xf32> to vector<8xf32>
    %85 = vector.shape_cast %84 : vector<8xf32> to vector<1x8xf32>
    %86 = vector.broadcast %85 : vector<1x8xf32> to vector<256x8xf32>
    %87 = arith.addf %82, %86 : vector<256x8xf32>
    %cst_59 = arith.constant 0.000000e+00 : f32
    %88 = vector.broadcast %cst_59 : f32 to vector<256x8xf32>
    %89 = arith.maximumf %87, %88 : vector<256x8xf32>
    %90 = vector.shape_cast %89 : vector<256x8xf32> to vector<16x16x8xf32>
    %cst_60 = arith.constant 0.000000e+00 : f32
    %91 = vector.broadcast %cst_60 : f32 to vector<18x26x8xf32>
    %c0_61 = arith.constant 0 : index
    %c0_62 = arith.constant 0 : index
    %c0_63 = arith.constant 0 : index
    %92 = vector.load %arg12[%c0_61, %c0_62, %c0_63] : memref<18x26x8xf32, #tpu.memory_space<vmem>>, vector<18x26x8xf32>
    tpu.vector_store %arg12[%c0_61, %c0_62, %c0_63], %91 {strides = array<i32>} : memref<18x26x8xf32, #tpu.memory_space<vmem>>, vector<18x26x8xf32>,
    %c1_64 = arith.constant 1 : index
    %c8_65 = arith.constant 8 : index
    %c0_66 = arith.constant 0 : index
    %93 = vector.load %arg12[%c1_64, %c8_65, %c0_66] : memref<18x26x8xf32, #tpu.memory_space<vmem>>, vector<16x16x8xf32>
    tpu.vector_store %arg12[%c1_64, %c8_65, %c0_66], %90 {strides = array<i32>} : memref<18x26x8xf32, #tpu.memory_space<vmem>>, vector<16x16x8xf32>,
    %c0_67 = arith.constant 0 : index
    %c7_68 = arith.constant 7 : index
    %c0_69 = arith.constant 0 : index
    %94 = vector.load %arg12[%c0_67, %c7_68, %c0_69] : memref<18x26x8xf32, #tpu.memory_space<vmem>>, vector<16x16x8xf32>
    %c0_70 = arith.constant 0 : index
    %c0_71 = arith.constant 0 : index
    %95 = vector.load %arg7[%c0_70, %c0_71] : memref<9x8xf32, #tpu.memory_space<vmem>>, vector<1x8xf32>
    %96 = vector.shape_cast %95 : vector<1x8xf32> to vector<8xf32>
    %97 = vector.shape_cast %96 : vector<8xf32> to vector<1x1x8xf32>
    %98 = vector.broadcast %97 : vector<1x1x8xf32> to vector<16x16x8xf32>
    %99 = arith.mulf %94, %98 : vector<16x16x8xf32>
    %c0_72 = arith.constant 0 : index
    %c8_73 = arith.constant 8 : index
    %c0_74 = arith.constant 0 : index
    %100 = vector.load %arg12[%c0_72, %c8_73, %c0_74] : memref<18x26x8xf32, #tpu.memory_space<vmem>>, vector<16x16x8xf32>
    %c1_75 = arith.constant 1 : index
    %c0_76 = arith.constant 0 : index
    %101 = vector.load %arg7[%c1_75, %c0_76] : memref<9x8xf32, #tpu.memory_space<vmem>>, vector<1x8xf32>
    %102 = vector.shape_cast %101 : vector<1x8xf32> to vector<8xf32>
    %103 = vector.shape_cast %102 : vector<8xf32> to vector<1x1x8xf32>
    %104 = vector.broadcast %103 : vector<1x1x8xf32> to vector<16x16x8xf32>
    %105 = arith.mulf %100, %104 : vector<16x16x8xf32>
    %106 = arith.addf %99, %105 : vector<16x16x8xf32>
    %c0_77 = arith.constant 0 : index
    %c9_78 = arith.constant 9 : index
    %c0_79 = arith.constant 0 : index
    %107 = vector.load %arg12[%c0_77, %c9_78, %c0_79] : memref<18x26x8xf32, #tpu.memory_space<vmem>>, vector<16x16x8xf32>
    %c2_80 = arith.constant 2 : index
    %c0_81 = arith.constant 0 : index
    %108 = vector.load %arg7[%c2_80, %c0_81] : memref<9x8xf32, #tpu.memory_space<vmem>>, vector<1x8xf32>
    %109 = vector.shape_cast %108 : vector<1x8xf32> to vector<8xf32>
    %110 = vector.shape_cast %109 : vector<8xf32> to vector<1x1x8xf32>
    %111 = vector.broadcast %110 : vector<1x1x8xf32> to vector<16x16x8xf32>
    %112 = arith.mulf %107, %111 : vector<16x16x8xf32>
    %113 = arith.addf %106, %112 : vector<16x16x8xf32>
    %c1_82 = arith.constant 1 : index
    %c7_83 = arith.constant 7 : index
    %c0_84 = arith.constant 0 : index
    %114 = vector.load %arg12[%c1_82, %c7_83, %c0_84] : memref<18x26x8xf32, #tpu.memory_space<vmem>>, vector<16x16x8xf32>
    %c3_85 = arith.constant 3 : index
    %c0_86 = arith.constant 0 : index
    %115 = vector.load %arg7[%c3_85, %c0_86] : memref<9x8xf32, #tpu.memory_space<vmem>>, vector<1x8xf32>
    %116 = vector.shape_cast %115 : vector<1x8xf32> to vector<8xf32>
    %117 = vector.shape_cast %116 : vector<8xf32> to vector<1x1x8xf32>
    %118 = vector.broadcast %117 : vector<1x1x8xf32> to vector<16x16x8xf32>
    %119 = arith.mulf %114, %118 : vector<16x16x8xf32>
    %120 = arith.addf %113, %119 : vector<16x16x8xf32>
    %c1_87 = arith.constant 1 : index
    %c8_88 = arith.constant 8 : index
    %c0_89 = arith.constant 0 : index
    %121 = vector.load %arg12[%c1_87, %c8_88, %c0_89] : memref<18x26x8xf32, #tpu.memory_space<vmem>>, vector<16x16x8xf32>
    %c4_90 = arith.constant 4 : index
    %c0_91 = arith.constant 0 : index
    %122 = vector.load %arg7[%c4_90, %c0_91] : memref<9x8xf32, #tpu.memory_space<vmem>>, vector<1x8xf32>
    %123 = vector.shape_cast %122 : vector<1x8xf32> to vector<8xf32>
    %124 = vector.shape_cast %123 : vector<8xf32> to vector<1x1x8xf32>
    %125 = vector.broadcast %124 : vector<1x1x8xf32> to vector<16x16x8xf32>
    %126 = arith.mulf %121, %125 : vector<16x16x8xf32>
    %127 = arith.addf %120, %126 : vector<16x16x8xf32>
    %c1_92 = arith.constant 1 : index
    %c9_93 = arith.constant 9 : index
    %c0_94 = arith.constant 0 : index
    %128 = vector.load %arg12[%c1_92, %c9_93, %c0_94] : memref<18x26x8xf32, #tpu.memory_space<vmem>>, vector<16x16x8xf32>
    %c5_95 = arith.constant 5 : index
    %c0_96 = arith.constant 0 : index
    %129 = vector.load %arg7[%c5_95, %c0_96] : memref<9x8xf32, #tpu.memory_space<vmem>>, vector<1x8xf32>
    %130 = vector.shape_cast %129 : vector<1x8xf32> to vector<8xf32>
    %131 = vector.shape_cast %130 : vector<8xf32> to vector<1x1x8xf32>
    %132 = vector.broadcast %131 : vector<1x1x8xf32> to vector<16x16x8xf32>
    %133 = arith.mulf %128, %132 : vector<16x16x8xf32>
    %134 = arith.addf %127, %133 : vector<16x16x8xf32>
    %c2_97 = arith.constant 2 : index
    %c7_98 = arith.constant 7 : index
    %c0_99 = arith.constant 0 : index
    %135 = vector.load %arg12[%c2_97, %c7_98, %c0_99] : memref<18x26x8xf32, #tpu.memory_space<vmem>>, vector<16x16x8xf32>
    %c6_100 = arith.constant 6 : index
    %c0_101 = arith.constant 0 : index
    %136 = vector.load %arg7[%c6_100, %c0_101] : memref<9x8xf32, #tpu.memory_space<vmem>>, vector<1x8xf32>
    %137 = vector.shape_cast %136 : vector<1x8xf32> to vector<8xf32>
    %138 = vector.shape_cast %137 : vector<8xf32> to vector<1x1x8xf32>
    %139 = vector.broadcast %138 : vector<1x1x8xf32> to vector<16x16x8xf32>
    %140 = arith.mulf %135, %139 : vector<16x16x8xf32>
    %141 = arith.addf %134, %140 : vector<16x16x8xf32>
    %c2_102 = arith.constant 2 : index
    %c8_103 = arith.constant 8 : index
    %c0_104 = arith.constant 0 : index
    %142 = vector.load %arg12[%c2_102, %c8_103, %c0_104] : memref<18x26x8xf32, #tpu.memory_space<vmem>>, vector<16x16x8xf32>
    %c7_105 = arith.constant 7 : index
    %c0_106 = arith.constant 0 : index
    %143 = vector.load %arg7[%c7_105, %c0_106] : memref<9x8xf32, #tpu.memory_space<vmem>>, vector<1x8xf32>
    %144 = vector.shape_cast %143 : vector<1x8xf32> to vector<8xf32>
    %145 = vector.shape_cast %144 : vector<8xf32> to vector<1x1x8xf32>
    %146 = vector.broadcast %145 : vector<1x1x8xf32> to vector<16x16x8xf32>
    %147 = arith.mulf %142, %146 : vector<16x16x8xf32>
    %148 = arith.addf %141, %147 : vector<16x16x8xf32>
    %c2_107 = arith.constant 2 : index
    %c9_108 = arith.constant 9 : index
    %c0_109 = arith.constant 0 : index
    %149 = vector.load %arg12[%c2_107, %c9_108, %c0_109] : memref<18x26x8xf32, #tpu.memory_space<vmem>>, vector<16x16x8xf32>
    %c8_110 = arith.constant 8 : index
    %c0_111 = arith.constant 0 : index
    %150 = vector.load %arg7[%c8_110, %c0_111] : memref<9x8xf32, #tpu.memory_space<vmem>>, vector<1x8xf32>
    %151 = vector.shape_cast %150 : vector<1x8xf32> to vector<8xf32>
    %152 = vector.shape_cast %151 : vector<8xf32> to vector<1x1x8xf32>
    %153 = vector.broadcast %152 : vector<1x1x8xf32> to vector<16x16x8xf32>
    %154 = arith.mulf %149, %153 : vector<16x16x8xf32>
    %155 = arith.addf %148, %154 : vector<16x16x8xf32>
    %156 = vector.shape_cast %155 : vector<16x16x8xf32> to vector<256x8xf32>
    %157 = arith.truncf %156 : vector<256x8xf32> to vector<256x8xbf16>
    %c0_112 = arith.constant 0 : index
    %c0_113 = arith.constant 0 : index
    %158 = vector.load %arg8[%c0_112, %c0_113] : memref<8x8xbf16, #tpu.memory_space<vmem>>, vector<8x8xbf16>
    %cst_114 = arith.constant dense<0.000000e+00> : vector<256x8xf32>
    %159 = tpu.matmul %157, %158, %cst_114 {dimension_numbers = #tpu.dot_dimension_numbers<[1], [0], [0], [1], [0, 0, 1, 1], [], []>} : vector<256x8xbf16>, vector<8x8xbf16>, vector<256x8xf32> -> vector<256x8xf32>
    %c0_115 = arith.constant 0 : index
    %c0_116 = arith.constant 0 : index
    %160 = vector.load %arg9[%c0_115, %c0_116] : memref<1x8xf32, #tpu.memory_space<vmem>>, vector<1x8xf32>
    %161 = vector.shape_cast %160 : vector<1x8xf32> to vector<8xf32>
    %162 = vector.shape_cast %161 : vector<8xf32> to vector<1x8xf32>
    %163 = vector.broadcast %162 : vector<1x8xf32> to vector<256x8xf32>
    %164 = arith.addf %159, %163 : vector<256x8xf32>
    %165 = vector.shape_cast %164 : vector<256x8xf32> to vector<16x16x8xf32>
    %cst_117 = arith.constant 0xFF800000 : f32
    %166 = vector.broadcast %cst_117 : f32 to vector<18x26x8xf32>
    %c0_118 = arith.constant 0 : index
    %c0_119 = arith.constant 0 : index
    %c0_120 = arith.constant 0 : index
    %167 = vector.load %arg12[%c0_118, %c0_119, %c0_120] : memref<18x26x8xf32, #tpu.memory_space<vmem>>, vector<18x26x8xf32>
    tpu.vector_store %arg12[%c0_118, %c0_119, %c0_120], %166 {strides = array<i32>} : memref<18x26x8xf32, #tpu.memory_space<vmem>>, vector<18x26x8xf32>,
    %c1_121 = arith.constant 1 : index
    %c8_122 = arith.constant 8 : index
    %c0_123 = arith.constant 0 : index
    %168 = vector.load %arg12[%c1_121, %c8_122, %c0_123] : memref<18x26x8xf32, #tpu.memory_space<vmem>>, vector<16x16x8xf32>
    tpu.vector_store %arg12[%c1_121, %c8_122, %c0_123], %165 {strides = array<i32>} : memref<18x26x8xf32, #tpu.memory_space<vmem>>, vector<16x16x8xf32>,
    %c0_124 = arith.constant 0 : index
    %c7_125 = arith.constant 7 : index
    %c0_126 = arith.constant 0 : index
    %169 = tpu.strided_load %arg12[%c0_124, %c7_125, %c0_126] {strides = array<i32: 2, 2, 1>} : memref<18x26x8xf32, #tpu.memory_space<vmem>>, vector<8x8x8xf32>
    %c0_127 = arith.constant 0 : index
    %c8_128 = arith.constant 8 : index
    %c0_129 = arith.constant 0 : index
    %170 = tpu.strided_load %arg12[%c0_127, %c8_128, %c0_129] {strides = array<i32: 2, 2, 1>} : memref<18x26x8xf32, #tpu.memory_space<vmem>>, vector<8x8x8xf32>
    %171 = arith.maximumf %169, %170 : vector<8x8x8xf32>
    %c0_130 = arith.constant 0 : index
    %c9_131 = arith.constant 9 : index
    %c0_132 = arith.constant 0 : index
    %172 = tpu.strided_load %arg12[%c0_130, %c9_131, %c0_132] {strides = array<i32: 2, 2, 1>} : memref<18x26x8xf32, #tpu.memory_space<vmem>>, vector<8x8x8xf32>
    %173 = arith.maximumf %171, %172 : vector<8x8x8xf32>
    %c1_133 = arith.constant 1 : index
    %c7_134 = arith.constant 7 : index
    %c0_135 = arith.constant 0 : index
    %174 = tpu.strided_load %arg12[%c1_133, %c7_134, %c0_135] {strides = array<i32: 2, 2, 1>} : memref<18x26x8xf32, #tpu.memory_space<vmem>>, vector<8x8x8xf32>
    %175 = arith.maximumf %173, %174 : vector<8x8x8xf32>
    %c1_136 = arith.constant 1 : index
    %c8_137 = arith.constant 8 : index
    %c0_138 = arith.constant 0 : index
    %176 = tpu.strided_load %arg12[%c1_136, %c8_137, %c0_138] {strides = array<i32: 2, 2, 1>} : memref<18x26x8xf32, #tpu.memory_space<vmem>>, vector<8x8x8xf32>
    %177 = arith.maximumf %175, %176 : vector<8x8x8xf32>
    %c1_139 = arith.constant 1 : index
    %c9_140 = arith.constant 9 : index
    %c0_141 = arith.constant 0 : index
    %178 = tpu.strided_load %arg12[%c1_139, %c9_140, %c0_141] {strides = array<i32: 2, 2, 1>} : memref<18x26x8xf32, #tpu.memory_space<vmem>>, vector<8x8x8xf32>
    %179 = arith.maximumf %177, %178 : vector<8x8x8xf32>
    %c2_142 = arith.constant 2 : index
    %c7_143 = arith.constant 7 : index
    %c0_144 = arith.constant 0 : index
    %180 = tpu.strided_load %arg12[%c2_142, %c7_143, %c0_144] {strides = array<i32: 2, 2, 1>} : memref<18x26x8xf32, #tpu.memory_space<vmem>>, vector<8x8x8xf32>
    %181 = arith.maximumf %179, %180 : vector<8x8x8xf32>
    %c2_145 = arith.constant 2 : index
    %c8_146 = arith.constant 8 : index
    %c0_147 = arith.constant 0 : index
    %182 = tpu.strided_load %arg12[%c2_145, %c8_146, %c0_147] {strides = array<i32: 2, 2, 1>} : memref<18x26x8xf32, #tpu.memory_space<vmem>>, vector<8x8x8xf32>
    %183 = arith.maximumf %181, %182 : vector<8x8x8xf32>
    %c2_148 = arith.constant 2 : index
    %c9_149 = arith.constant 9 : index
    %c0_150 = arith.constant 0 : index
    %184 = tpu.strided_load %arg12[%c2_148, %c9_149, %c0_150] {strides = array<i32: 2, 2, 1>} : memref<18x26x8xf32, #tpu.memory_space<vmem>>, vector<8x8x8xf32>
    %185 = arith.maximumf %183, %184 : vector<8x8x8xf32>
    %186 = arith.addf %11, %185 : vector<8x8x8xf32>
    %c0_151 = arith.constant 0 : index
    %c0_152 = arith.constant 0 : index
    %c0_153 = arith.constant 0 : index
    %c0_154 = arith.constant 0 : index
    %187 = vector.load %arg10[%c0_151, %c0_152, %c0_153, %c0_154] : memref<1x8x8x8xf32, #tpu.memory_space<vmem>>, vector<1x8x8x8xf32>
    %188 = vector.shape_cast %187 : vector<1x8x8x8xf32> to vector<8x8x8xf32>
    %189 = vector.shape_cast %186 : vector<8x8x8xf32> to vector<1x8x8x8xf32>
    tpu.vector_store %arg10[%c0_151, %c0_152, %c0_153, %c0_154], %189 {strides = array<i32>} : memref<1x8x8x8xf32, #tpu.memory_space<vmem>>, vector<1x8x8x8xf32>,
    return
  }
  func.func @transform_0(%arg0: i32) -> (i32, i32, i32, i32) {
    %c0_i32 = arith.constant 0 : i32
    %c0_i32_0 = arith.constant 0 : i32
    %c0_i32_1 = arith.constant 0 : i32
    %c0_i32_2 = arith.constant 0 : i32
    return %arg0, %c0_i32, %c0_i32_0, %c0_i32_1 : i32, i32, i32, i32
  }
  func.func @transform_1(%arg0: i32) -> (i32, i32) {
    %c0_i32 = arith.constant 0 : i32
    %c0_i32_0 = arith.constant 0 : i32
    %c0_i32_1 = arith.constant 0 : i32
    return %c0_i32, %c0_i32_0 : i32, i32
  }
  func.func @transform_2(%arg0: i32) -> (i32, i32) {
    %c0_i32 = arith.constant 0 : i32
    %c0_i32_0 = arith.constant 0 : i32
    %c0_i32_1 = arith.constant 0 : i32
    return %c0_i32, %c0_i32_0 : i32, i32
  }
  func.func @transform_3(%arg0: i32) -> (i32, i32) {
    %c0_i32 = arith.constant 0 : i32
    %c0_i32_0 = arith.constant 0 : i32
    %c0_i32_1 = arith.constant 0 : i32
    return %c0_i32, %c0_i32_0 : i32, i32
  }
  func.func @transform_4(%arg0: i32) -> (i32, i32) {
    %c0_i32 = arith.constant 0 : i32
    %c0_i32_0 = arith.constant 0 : i32
    %c0_i32_1 = arith.constant 0 : i32
    return %c0_i32, %c0_i32_0 : i32, i32
  }
  func.func @transform_5(%arg0: i32) -> (i32, i32) {
    %c0_i32 = arith.constant 0 : i32
    %c0_i32_0 = arith.constant 0 : i32
    %c0_i32_1 = arith.constant 0 : i32
    return %c0_i32, %c0_i32_0 : i32, i32
  }
  func.func @transform_6(%arg0: i32) -> (i32, i32) {
    %c0_i32 = arith.constant 0 : i32
    %c0_i32_0 = arith.constant 0 : i32
    %c0_i32_1 = arith.constant 0 : i32
    return %c0_i32, %c0_i32_0 : i32, i32
  }
  func.func @transform_7(%arg0: i32) -> (i32, i32) {
    %c0_i32 = arith.constant 0 : i32
    %c0_i32_0 = arith.constant 0 : i32
    %c0_i32_1 = arith.constant 0 : i32
    return %c0_i32, %c0_i32_0 : i32, i32
  }
  func.func @transform_8(%arg0: i32) -> (i32, i32) {
    %c0_i32 = arith.constant 0 : i32
    %c0_i32_0 = arith.constant 0 : i32
    %c0_i32_1 = arith.constant 0 : i32
    return %c0_i32, %c0_i32_0 : i32, i32
  }
  func.func @transform_9(%arg0: i32) -> (i32, i32, i32, i32) {
    %c0_i32 = arith.constant 0 : i32
    %c0_i32_0 = arith.constant 0 : i32
    %c0_i32_1 = arith.constant 0 : i32
    %c0_i32_2 = arith.constant 0 : i32
    return %arg0, %c0_i32, %c0_i32_0, %c0_i32_1 : i32, i32, i32, i32
  }
}

</mosaic_0001>

<llo_original>
// kernel: tpu_custom_call.1
$region0: #{tpu_custom_call.1}
  #allocation0 [shape = 'u32[]', space=smem, size = 0x4, offset = 0x4, fixed_abs, tag = 'smem constant byte address 0x4 - core index']
  #allocation1 [shape = 'u32[144,128]{1,0:T(1,128)}', space=vmem, size = 0x12000, scoped, tag = 'internal scratch']
  #allocation2 [shape = 'f32[18,26,4]{2,1,0:T(8,128)}', space=vmem, size = 0x48000, scoped, tag = 'scratch operand']
  #allocation3 [shape = 'f32[18,26,8]{2,1,0:T(8,128)}', space=vmem, size = 0x48000, scoped, tag = 'scratch operand']
  %s0 = inlined_call_operand.vmem [shape: f32[2,16,16,4], index: 0, kind: input, shape index: {}]
  %s1 = inlined_call_operand.vmem [shape: bf16[4,8], index: 1, kind: input, shape index: {}]
  %s2 = inlined_call_operand.vmem [shape: f32[1,8], index: 2, kind: input, shape index: {}]
  %s3 = inlined_call_operand.vmem [shape: f32[9,4], index: 3, kind: input, shape index: {}]
  %s4 = inlined_call_operand.vmem [shape: bf16[4,8], index: 4, kind: input, shape index: {}]
  %s5 = inlined_call_operand.vmem [shape: f32[1,8], index: 5, kind: input, shape index: {}]
  %s6 = inlined_call_operand.vmem [shape: f32[9,8], index: 6, kind: input, shape index: {}]
  %s7 = inlined_call_operand.vmem [shape: bf16[8,8], index: 7, kind: input, shape index: {}]
  %s8 = inlined_call_operand.vmem [shape: f32[1,8], index: 8, kind: input, shape index: {}]
  %s9 = inlined_call_operand.hbm [shape: f32[2,8,8,8], index: 9, kind: output, shape index: {}]
  %s10 = sld [smem:[#allocation0]]
  $region69: #{tpu_custom_call.1} parent=0
    _
  %s12 = ssub.s32 1, %s10
  %s13 = scalar_select 0, %s12, %s10
  $region1: #{tpu_custom_call.1} parent=0
    #allocation4 [shape = 'u8[65536]{0}', space=vmem, size = 0x10000, scoped, tag = 'output window, operand 0']
    #allocation5 [shape = 's32[2]{0}', space=sflag, size = 0x8, scoped, tag = 'scoped memory for tpu_custom_call.1']
    %14 = vsyncpa [#allocation5], 0
    %s15 = scalar_lea.sflag [#allocation5], 1
    %16 = vsyncpa %s15, 0
    loop: start=0, step=1, limit=4
    $region2: #{tpu_custom_call.1} parent=1 // loop_pre_header
      _
    $region3: #{tpu_custom_call.1} parent=1 // loop_header
      %s18 = sphi 0, %s22
      %p19 = scmp.ge.s32.totalorder %s18, 4
      %s28 = sphi 0, %s30
      %s31 = sphi 0, %s28
      %s32 = sphi 0, %s31
      %s48 = sphi 0, %s32
      %s52 = sphi 0, %s52
      %s54 = sphi 0, %s52
      %s55 = sphi 0, %s54
      %s69 = sphi 0, %s55
      %s73 = sphi 0, %s73
      %s75 = sphi 0, %s73
      %s76 = sphi 0, %s75
      %s90 = sphi 0, %s76
      %s94 = sphi 0, %s94
      %s96 = sphi 0, %s94
      %s97 = sphi 0, %s96
      %s111 = sphi 0, %s97
      %s115 = sphi 0, %s115
      %s117 = sphi 0, %s115
      %s118 = sphi 0, %s117
      %s132 = sphi 0, %s118
      %s136 = sphi 0, %s136
      %s138 = sphi 0, %s136
      %s139 = sphi 0, %s138
      %s153 = sphi 0, %s139
      %s157 = sphi 0, %s157
      %s159 = sphi 0, %s157
      %s160 = sphi 0, %s159
      %s174 = sphi 0, %s160
      %s178 = sphi 0, %s178
      %s180 = sphi 0, %s178
      %s181 = sphi 0, %s180
      %s195 = sphi 0, %s181
      %s199 = sphi 0, %s199
      %s201 = sphi 0, %s199
      %s202 = sphi 0, %s201
      %s216 = sphi 0, %s202
      %s222 = sphi 0, %s224
      %s225 = sphi 0, %s222
      %s226 = sphi 0, %s225
      %s242 = sphi 0, %s226
    $region4: #{tpu_custom_call.1} parent=1 // loop_header_branch
      %21 = sbr.rel (%p19) target = $region8
    $region5: #{tpu_custom_call.1} parent=1 // loop_body
      %s23 = ssub.s32 %s18, 1
      %s24 = ssub.s32 %s18, 2
      %s25 = sadd.s32 %s18, 1
      %s26 = ssub.s32 %s18, %s25
      %p27 = scmp.eq.s32.totalorder %s26, 0
      %s29 = sadd.s32 %s28, 1
      %s30 = scalar_select %p27, %s28, %s29
      %p33 = pneg %p27
      %p34 = scmp.eq.s32.totalorder %s18, 1
      %p35 = por %p33, %p34
      %p36 = scmp.ne.s32.totalorder %s28, %s31
      %p37 = scmp.eq.s32.totalorder %s18, 0
      %p38 = por %p36, %p37
      %p39 = scmp.ne.s32.totalorder %s28, %s31
      %p40 = scmp.eq.s32.totalorder %s23, 1
      %p41 = por %p39, %p40
      %p42 = scmp.ne.s32.totalorder %s31, %s32
      %p43 = scmp.eq.s32.totalorder %s23, 0
      %p44 = por %p42, %p43
      %p45 = scmp.ne.s32.totalorder %s31, %s32
      %p46 = scmp.eq.s32.totalorder %s24, 1
      %p47 = por %p45, %p46
      %p49 = scmp.ne.s32.totalorder %s32, %s48
      %p50 = scmp.eq.s32.totalorder %s24, 0
      %p51 = por %p49, %p50
      %s53 = sadd.s32 %s52, 1
      %p56 = scmp.eq.s32.totalorder %s18, 1
      %p57 = scmp.ne.s32.totalorder %s52, %s54
      %p58 = scmp.eq.s32.totalorder %s18, 0
      %p59 = por %p57, %p58
      %p60 = scmp.ne.s32.totalorder %s52, %s54
      %p61 = scmp.eq.s32.totalorder %s23, 1
      %p62 = por %p60, %p61
      %p63 = scmp.ne.s32.totalorder %s54, %s55
      %p64 = scmp.eq.s32.totalorder %s23, 0
      %p65 = por %p63, %p64
      %p66 = scmp.ne.s32.totalorder %s54, %s55
      %p67 = scmp.eq.s32.totalorder %s24, 1
      %p68 = por %p66, %p67
      %p70 = scmp.ne.s32.totalorder %s55, %s69
      %p71 = scmp.eq.s32.totalorder %s24, 0
      %p72 = por %p70, %p71
      %s74 = sadd.s32 %s73, 1
      %p77 = scmp.eq.s32.totalorder %s18, 1
      %p78 = scmp.ne.s32.totalorder %s73, %s75
      %p79 = scmp.eq.s32.totalorder %s18, 0
      %p80 = por %p78, %p79
      %p81 = scmp.ne.s32.totalorder %s73, %s75
      %p82 = scmp.eq.s32.totalorder %s23, 1
      %p83 = por %p81, %p82
      %p84 = scmp.ne.s32.totalorder %s75, %s76
      %p85 = scmp.eq.s32.totalorder %s23, 0
      %p86 = por %p84, %p85
      %p87 = scmp.ne.s32.totalorder %s75, %s76
      %p88 = scmp.eq.s32.totalorder %s24, 1
      %p89 = por %p87, %p88
      %p91 = scmp.ne.s32.totalorder %s76, %s90
      %p92 = scmp.eq.s32.totalorder %s24, 0
      %p93 = por %p91, %p92
      %s95 = sadd.s32 %s94, 1
      %p98 = scmp.eq.s32.totalorder %s18, 1
      %p99 = scmp.ne.s32.totalorder %s94, %s96
      %p100 = scmp.eq.s32.totalorder %s18, 0
      %p101 = por %p99, %p100
      %p102 = scmp.ne.s32.totalorder %s94, %s96
      %p103 = scmp.eq.s32.totalorder %s23, 1
      %p104 = por %p102, %p103
      %p105 = scmp.ne.s32.totalorder %s96, %s97
      %p106 = scmp.eq.s32.totalorder %s23, 0
      %p107 = por %p105, %p106
      %p108 = scmp.ne.s32.totalorder %s96, %s97
      %p109 = scmp.eq.s32.totalorder %s24, 1
      %p110 = por %p108, %p109
      %p112 = scmp.ne.s32.totalorder %s97, %s111
      %p113 = scmp.eq.s32.totalorder %s24, 0
      %p114 = por %p112, %p113
      %s116 = sadd.s32 %s115, 1
      %p119 = scmp.eq.s32.totalorder %s18, 1
      %p120 = scmp.ne.s32.totalorder %s115, %s117
      %p121 = scmp.eq.s32.totalorder %s18, 0
      %p122 = por %p120, %p121
      %p123 = scmp.ne.s32.totalorder %s115, %s117
      %p124 = scmp.eq.s32.totalorder %s23, 1
      %p125 = por %p123, %p124
      %p126 = scmp.ne.s32.totalorder %s117, %s118
      %p127 = scmp.eq.s32.totalorder %s23, 0
      %p128 = por %p126, %p127
      %p129 = scmp.ne.s32.totalorder %s117, %s118
      %p130 = scmp.eq.s32.totalorder %s24, 1
      %p131 = por %p129, %p130
      %p133 = scmp.ne.s32.totalorder %s118, %s132
      %p134 = scmp.eq.s32.totalorder %s24, 0
      %p135 = por %p133, %p134
      %s137 = sadd.s32 %s136, 1
      %p140 = scmp.eq.s32.totalorder %s18, 1
      %p141 = scmp.ne.s32.totalorder %s136, %s138
      %p142 = scmp.eq.s32.totalorder %s18, 0
      %p143 = por %p141, %p142
      %p144 = scmp.ne.s32.totalorder %s136, %s138
      %p145 = scmp.eq.s32.totalorder %s23, 1
      %p146 = por %p144, %p145
      %p147 = scmp.ne.s32.totalorder %s138, %s139
      %p148 = scmp.eq.s32.totalorder %s23, 0
      %p149 = por %p147, %p148
      %p150 = scmp.ne.s32.totalorder %s138, %s139
      %p151 = scmp.eq.s32.totalorder %s24, 1
      %p152 = por %p150, %p151
      %p154 = scmp.ne.s32.totalorder %s139, %s153
      %p155 = scmp.eq.s32.totalorder %s24, 0
      %p156 = por %p154, %p155
      %s158 = sadd.s32 %s157, 1
      %p161 = scmp.eq.s32.totalorder %s18, 1
      %p162 = scmp.ne.s32.totalorder %s157, %s159
      %p163 = scmp.eq.s32.totalorder %s18, 0
      %p164 = por %p162, %p163
      %p165 = scmp.ne.s32.totalorder %s157, %s159
      %p166 = scmp.eq.s32.totalorder %s23, 1
      %p167 = por %p165, %p166
      %p168 = scmp.ne.s32.totalorder %s159, %s160
      %p169 = scmp.eq.s32.totalorder %s23, 0
      %p170 = por %p168, %p169
      %p171 = scmp.ne.s32.totalorder %s159, %s160
      %p172 = scmp.eq.s32.totalorder %s24, 1
      %p173 = por %p171, %p172
      %p175 = scmp.ne.s32.totalorder %s160, %s174
      %p176 = scmp.eq.s32.totalorder %s24, 0
      %p177 = por %p175, %p176
      %s179 = sadd.s32 %s178, 1
      %p182 = scmp.eq.s32.totalorder %s18, 1
      %p183 = scmp.ne.s32.totalorder %s178, %s180
      %p184 = scmp.eq.s32.totalorder %s18, 0
      %p185 = por %p183, %p184
      %p186 = scmp.ne.s32.totalorder %s178, %s180
      %p187 = scmp.eq.s32.totalorder %s23, 1
      %p188 = por %p186, %p187
      %p189 = scmp.ne.s32.totalorder %s180, %s181
      %p190 = scmp.eq.s32.totalorder %s23, 0
      %p191 = por %p189, %p190
      %p192 = scmp.ne.s32.totalorder %s180, %s181
      %p193 = scmp.eq.s32.totalorder %s24, 1
      %p194 = por %p192, %p193
      %p196 = scmp.ne.s32.totalorder %s181, %s195
      %p197 = scmp.eq.s32.totalorder %s24, 0
      %p198 = por %p196, %p197
      %s200 = sadd.s32 %s199, 1
      %p203 = scmp.eq.s32.totalorder %s18, 1
      %p204 = scmp.ne.s32.totalorder %s199, %s201
      %p205 = scmp.eq.s32.totalorder %s18, 0
      %p206 = por %p204, %p205
      %p207 = scmp.ne.s32.totalorder %s199, %s201
      %p208 = scmp.eq.s32.totalorder %s23, 1
      %p209 = por %p207, %p208
      %p210 = scmp.ne.s32.totalorder %s201, %s202
      %p211 = scmp.eq.s32.totalorder %s23, 0
      %p212 = por %p210, %p211
      %p213 = scmp.ne.s32.totalorder %s201, %s202
      %p214 = scmp.eq.s32.totalorder %s24, 1
      %p215 = por %p213, %p214
      %p217 = scmp.ne.s32.totalorder %s202, %s216
      %p218 = scmp.eq.s32.totalorder %s24, 0
      %p219 = por %p217, %p218
      %s220 = ssub.s32 %s18, %s25
      %p221 = scmp.eq.s32.totalorder %s220, 0
      %s223 = sadd.s32 %s222, 1
      %s224 = scalar_select %p221, %s222, %s223
      %p227 = pneg %p221
      %p228 = scmp.eq.s32.totalorder %s18, 1
      %p229 = por %p227, %p228
      %p230 = scmp.ne.s32.totalorder %s222, %s225
      %p231 = scmp.eq.s32.totalorder %s18, 0
      %p232 = por %p230, %p231
      %p233 = scmp.ne.s32.totalorder %s222, %s225
      %p234 = scmp.eq.s32.totalorder %s23, 1
      %p235 = por %p233, %p234
      %p236 = scmp.ne.s32.totalorder %s225, %s226
      %p237 = scmp.eq.s32.totalorder %s23, 0
      %p238 = por %p236, %p237
      %p239 = scmp.ne.s32.totalorder %s225, %s226
      %p240 = scmp.eq.s32.totalorder %s24, 1
      %p241 = por %p239, %p240
      %p243 = scmp.ne.s32.totalorder %s226, %s242
      %p244 = scmp.eq.s32.totalorder %s24, 0
      %p245 = por %p243, %p244
      %p246 = scmp.le.s32.totalorder 1, %s18
      %p247 = scmp.lt.s32.totalorder %s18, 3
      %p248 = pnand %p246, %p247
      %p249 = pneg %p248
      // Predicated region
      $region9: #{tpu_custom_call.1} parent=5 // pred_check
        _
      $region10: #{tpu_custom_call.1} parent=5 // pred_check_branch
        %251 = sbr.rel (%p248) target = $region12
      $region11: #{tpu_custom_call.1} parent=5 // pred_region
        %s252 = ssub.s32 %s18, 1
        // Predicated region
        $region13: #{tpu_custom_call.1} parent=11 // pred_check
          %p253 = pneg %p65
        $region14: #{tpu_custom_call.1} parent=11 // pred_check_branch
          %255 = sbr.rel (%p253) target = $region16
        $region15: #{tpu_custom_call.1} parent=11 // pred_region
          _
        $region16: #{tpu_custom_call.1} parent=11 // pred_fallthru
          _
        // Predicated region
        $region17: #{tpu_custom_call.1} parent=11 // pred_check
          %p256 = pneg %p86
        $region18: #{tpu_custom_call.1} parent=11 // pred_check_branch
          %258 = sbr.rel (%p256) target = $region20
        $region19: #{tpu_custom_call.1} parent=11 // pred_region
          _
        $region20: #{tpu_custom_call.1} parent=11 // pred_fallthru
          _
        // Predicated region
        $region21: #{tpu_custom_call.1} parent=11 // pred_check
          %p259 = pneg %p107
        $region22: #{tpu_custom_call.1} parent=11 // pred_check_branch
          %261 = sbr.rel (%p259) target = $region24
        $region23: #{tpu_custom_call.1} parent=11 // pred_region
          _
        $region24: #{tpu_custom_call.1} parent=11 // pred_fallthru
          _
        // Predicated region
        $region25: #{tpu_custom_call.1} parent=11 // pred_check
          %p262 = pneg %p128
        $region26: #{tpu_custom_call.1} parent=11 // pred_check_branch
          %264 = sbr.rel (%p262) target = $region28
        $region27: #{tpu_custom_call.1} parent=11 // pred_region
          _
        $region28: #{tpu_custom_call.1} parent=11 // pred_fallthru
          _
        // Predicated region
        $region29: #{tpu_custom_call.1} parent=11 // pred_check
          %p265 = pneg %p149
        $region30: #{tpu_custom_call.1} parent=11 // pred_check_branch
          %267 = sbr.rel (%p265) target = $region32
        $region31: #{tpu_custom_call.1} parent=11 // pred_region
          _
        $region32: #{tpu_custom_call.1} parent=11 // pred_fallthru
          _
        // Predicated region
        $region33: #{tpu_custom_call.1} parent=11 // pred_check
          %p268 = pneg %p170
        $region34: #{tpu_custom_call.1} parent=11 // pred_check_branch
          %270 = sbr.rel (%p268) target = $region36
        $region35: #{tpu_custom_call.1} parent=11 // pred_region
          _
        $region36: #{tpu_custom_call.1} parent=11 // pred_fallthru
          _
        // Predicated region
        $region37: #{tpu_custom_call.1} parent=11 // pred_check
          %p271 = pneg %p191
        $region38: #{tpu_custom_call.1} parent=11 // pred_check_branch
          %273 = sbr.rel (%p271) target = $region40
        $region39: #{tpu_custom_call.1} parent=11 // pred_region
          _
        $region40: #{tpu_custom_call.1} parent=11 // pred_fallthru
          _
        // Predicated region
        $region41: #{tpu_custom_call.1} parent=11 // pred_check
          %p274 = pneg %p212
        $region42: #{tpu_custom_call.1} parent=11 // pred_check_branch
          %276 = sbr.rel (%p274) target = $region44
        $region43: #{tpu_custom_call.1} parent=11 // pred_region
          _
        $region44: #{tpu_custom_call.1} parent=11 // pred_fallthru
          _
      $region12: #{tpu_custom_call.1} parent=5 // pred_fallthru
        _
      %p277 = scmp.lt.s32.totalorder %s18, 2
      // Predicated region
      $region45: #{tpu_custom_call.1} parent=5 // pred_check
        %p278 = pneg %p277
      $region46: #{tpu_custom_call.1} parent=5 // pred_check_branch
        %280 = sbr.rel (%p278) target = $region48
      $region47: #{tpu_custom_call.1} parent=5 // pred_region
        // Predicated region
        $region49: #{tpu_custom_call.1} parent=47 // pred_check
          %p281 = pneg %p38
        $region50: #{tpu_custom_call.1} parent=47 // pred_check_branch
          %283 = sbr.rel (%p281) target = $region52
        $region51: #{tpu_custom_call.1} parent=47 // pred_region
          %p284 = scmp.lt.s32.totalorder %s18, 1
          %s285 = scalar_select %p284, %s18, 1
          %s286 = smul.addr %s285, 32
          %s287 = smul.addr %s286, 8
          %s288 = scalar_lea.vmem %s0, %s287
        $region52: #{tpu_custom_call.1} parent=47 // pred_fallthru
          _
      $region48: #{tpu_custom_call.1} parent=5 // pred_fallthru
        _
      %p289 = scmp.le.s32.totalorder 1, %s18
      %p290 = scmp.lt.s32.totalorder %s18, 3
      %p291 = pnand %p289, %p290
      %p292 = pneg %p291
      // Predicated region
      $region53: #{tpu_custom_call.1} parent=5 // pred_check
        _
      $region54: #{tpu_custom_call.1} parent=5 // pred_check_branch
        %294 = sbr.rel (%p291) target = $region56
      $region55: #{tpu_custom_call.1} parent=5 // pred_region
        %s295 = ssub.s32 %s18, 1
        %p296 = scmp.lt.s32.totalorder %s23, 1
        %s297 = scalar_select %p296, %s23, 1
        %s298 = smul.addr %s297, 32
        %s299 = smul.addr %s298, 8
        %s300 = scalar_lea.vmem %s0, %s299
        %p301 = pneg %p44
        %p302 = pneg %p41
        %p303 = pneg %p65
        %p304 = pneg %p62
        %p305 = pneg %p86
        %p306 = pneg %p83
        %p307 = pneg %p107
        %p308 = pneg %p104
        %p309 = pneg %p128
        %p310 = pneg %p125
        %p311 = pneg %p149
        %p312 = pneg %p146
        %p313 = pneg %p170
        %p314 = pneg %p167
        %p315 = pneg %p191
        %p316 = pneg %p188
        %p317 = pneg %p212
        %p318 = pneg %p209
        %p319 = pneg %p238
        %p320 = pneg %p235
        %s321 = sand.u32 %s225, 1
        %s322 = scalar_lea.sflag [#allocation5], %s321
        %s323 = sand.u32 %s225, 1
        %s324 = smul.addr %s323, 64
        %s325 = scalar_lea.vmem [#allocation4], %s324
        %p326 = scmp.lt.s32.totalorder %s23, 1
        %s327 = scalar_select %p326, %s23, 1
        %s328 = smul.addr %s327, 32
        %s329 = smul.addr %s328, 8
        %s330 = scalar_lea.vmem %s0, %s329
        %v332 = vld [vmem:[%s330] ss:$2 sm:$0xff]
        %s333 = scalar_lea.vmem %s330, 32
        %v334 = vld [vmem:[%s333] ss:$2 sm:$0xff]
        %s335 = scalar_lea.vmem %s330, 64
        %v336 = vld [vmem:[%s335] ss:$2 sm:$0xff]
        %s337 = scalar_lea.vmem %s330, 96
        %v338 = vld [vmem:[%s337] ss:$2 sm:$0xff]
        %s339 = scalar_lea.vmem %s330, 128
        %v340 = vld [vmem:[%s339] ss:$2 sm:$0xff]
        %s341 = scalar_lea.vmem %s330, 160
        %v342 = vld [vmem:[%s341] ss:$2 sm:$0xff]
        %s343 = scalar_lea.vmem %s330, 192
        %v344 = vld [vmem:[%s343] ss:$2 sm:$0xff]
        %s345 = scalar_lea.vmem %s330, 224
        %v346 = vld [vmem:[%s345] ss:$2 sm:$0xff]
        %v347 = vpack.c.bf16 %v334, %v332
        %v348 = vpack.c.bf16 %v338, %v336
        %v349 = vpack.c.bf16 %v342, %v340
        %v350 = vpack.c.bf16 %v346, %v344
        %v351 = vld [vmem:[%s1] sm:$0x3]
        %v352 = vld [vmem:[%s2] sm:$0x1]
        %v354 = vlaneseq
        %v355 = vshrl.u32 %v354, 7
        %v356 = vsub.s32 0, %v355
        %v357 = vrot.slane %v352, %v356
        %vm359 = vcmask 31744
        %v361 = vsel %vm359, %v347, 0
        %v364 = vsel %vm359, %v348, 0
        %v367 = vsel %vm359, %v349, 0
        %v370 = vsel %vm359, %v350, 0
        %vm372 = vcmask 1041408
        %v374 = vsel %vm372, %v351, 0
        %376 = vmatprep.subr.bf16.mxu0 0
        %377 = vmatpush1.bf16.msra.mxu0 %v374
        %378 = vmatprep.subr.bf16.mxu0 0
        %379 = vmatpush1.bf16.msra.mxu0 0
        %380 = vmatprep.subr.bf16.mxu0 0
        %381 = vmatpush1.bf16.msra.mxu0 0
        %382 = vmatprep.subr.bf16.mxu0 0
        %383 = vmatpush1.bf16.msra.mxu0 0
        %384 = vmatprep.subr.bf16.mxu0 0
        %385 = vmatpush1.bf16.msra.mxu0 0
        %386 = vmatprep.subr.bf16.mxu0 0
        %387 = vmatpush1.bf16.msra.mxu0 0
        %388 = vmatprep.subr.bf16.mxu0 0
        %389 = vmatpush1.bf16.msra.mxu0 0
        %390 = vmatprep.subr.bf16.mxu0 0
        %391 = vmatpush1.bf16.msra.mxu0 0
        %392 = vmatprep.subr.bf16.mxu0 0
        %393 = vmatpush1.bf16.msra.mxu0 0
        %394 = vmatprep.subr.bf16.mxu0 0
        %395 = vmatpush1.bf16.msra.mxu0 0
        %396 = vmatprep.subr.bf16.mxu0 0
        %397 = vmatpush1.bf16.msra.mxu0 0
        %398 = vmatprep.subr.bf16.mxu0 0
        %399 = vmatpush1.bf16.msra.mxu0 0
        %400 = vmatprep.subr.bf16.mxu0 0
        %401 = vmatpush1.bf16.msra.mxu0 0
        %402 = vmatprep.subr.bf16.mxu0 0
        %403 = vmatpush1.bf16.msra.mxu0 0
        %404 = vmatprep.subr.bf16.mxu0 0
        %405 = vmatpush1.bf16.msra.mxu0 0
        %406 = vmatprep.subr.bf16.mxu0 0
        %407 = vmatpush1.bf16.msra.mxu0 0
        %408 = vmatprep.mubr.bf16.mxu0 0
        %409 = vmatmul.mubr.bf16.gmra.mrb[0].mxu0 %v361
        %v410 = vpop.f32.mrb[0].mxu0
        %v411 = vadd.f32 %v357, %v410
        %v412 = vpop.f32.mrb[0].mxu0
        %v413 = vpop.f32.mrb[0].mxu0
        %v414 = vadd.f32 %v357, %v413
        %v415 = vpop.f32.mrb[0].mxu0
        %416 = vmatprep.mubr.bf16.mxu0 0
        %417 = vmatmul.mubr.bf16.gmra.mrb[0].mxu0 %v364
        %v418 = vpop.f32.mrb[0].mxu0
        %v419 = vadd.f32 %v357, %v418
        %v420 = vpop.f32.mrb[0].mxu0
        %v421 = vpop.f32.mrb[0].mxu0
        %v422 = vadd.f32 %v357, %v421
        %v423 = vpop.f32.mrb[0].mxu0
        %424 = vmatprep.mubr.bf16.mxu0 0
        %425 = vmatmul.mubr.bf16.gmra.mrb[0].mxu0 %v367
        %v426 = vpop.f32.mrb[0].mxu0
        %v427 = vadd.f32 %v357, %v426
        %v428 = vpop.f32.mrb[0].mxu0
        %v429 = vpop.f32.mrb[0].mxu0
        %v430 = vadd.f32 %v357, %v429
        %v431 = vpop.f32.mrb[0].mxu0
        %432 = vmatprep.mubr.bf16.mxu0 0
        %433 = vmatmul.mubr.bf16.gmra.mrb[0].mxu0 %v370
        %v434 = vpop.f32.mrb[0].mxu0
        %v435 = vadd.f32 %v357, %v434
        %v436 = vpop.f32.mrb[0].mxu0
        %v437 = vpop.f32.mrb[0].mxu0
        %v438 = vadd.f32 %v357, %v437
        %v439 = vpop.f32.mrb[0].mxu0
        %440 = vdwg.mxu0
        %v441 = vld [vmem:[%s330] sm:$0xff]
        %v442 = vld [vmem:[%s330 + $0x8] sm:$0xff]
        %v443 = vld [vmem:[%s330 + $0x10] sm:$0xff]
        %v444 = vld [vmem:[%s330 + $0x18] sm:$0xff]
        %v445 = vld [vmem:[%s330 + $0x20] sm:$0xff]
        %v446 = vld [vmem:[%s330 + $0x28] sm:$0xff]
        %v447 = vld [vmem:[%s330 + $0x30] sm:$0xff]
        %v448 = vld [vmem:[%s330 + $0x38] sm:$0xff]
        %v449 = vld [vmem:[%s330 + $0x40] sm:$0xff]
        %v450 = vld [vmem:[%s330 + $0x48] sm:$0xff]
        %v451 = vld [vmem:[%s330 + $0x50] sm:$0xff]
        %v452 = vld [vmem:[%s330 + $0x58] sm:$0xff]
        %v453 = vld [vmem:[%s330 + $0x60] sm:$0xff]
        %v454 = vld [vmem:[%s330 + $0x68] sm:$0xff]
        %v455 = vld [vmem:[%s330 + $0x70] sm:$0xff]
        %v456 = vld [vmem:[%s330 + $0x78] sm:$0xff]
        %v457 = vld [vmem:[%s330 + $0x80] sm:$0xff]
        %v458 = vld [vmem:[%s330 + $0x88] sm:$0xff]
        %v459 = vld [vmem:[%s330 + $0x90] sm:$0xff]
        %v460 = vld [vmem:[%s330 + $0x98] sm:$0xff]
        %v461 = vld [vmem:[%s330 + $0xa0] sm:$0xff]
        %v462 = vld [vmem:[%s330 + $0xa8] sm:$0xff]
        %v463 = vld [vmem:[%s330 + $0xb0] sm:$0xff]
        %v464 = vld [vmem:[%s330 + $0xb8] sm:$0xff]
        %v465 = vld [vmem:[%s330 + $0xc0] sm:$0xff]
        %v466 = vld [vmem:[%s330 + $0xc8] sm:$0xff]
        %v467 = vld [vmem:[%s330 + $0xd0] sm:$0xff]
        %v468 = vld [vmem:[%s330 + $0xd8] sm:$0xff]
        %v469 = vld [vmem:[%s330 + $0xe0] sm:$0xff]
        %v470 = vld [vmem:[%s330 + $0xe8] sm:$0xff]
        %v471 = vld [vmem:[%s330 + $0xf0] sm:$0xff]
        %v472 = vld [vmem:[%s330 + $0xf8] sm:$0xff]
        %473 = vst.msk [vmem:[#allocation2] sm:$0xff] %vm359, 0.0
        %474 = vst.msk [vmem:[#allocation2 + $0x8] sm:$0xff] %vm359, 0.0
        %475 = vst.msk [vmem:[#allocation2 + $0x10] sm:$0xff] %vm359, 0.0
        %vm476 = vcmask 25600
        %477 = vst.msk [vmem:[#allocation2 + $0x18] sm:$0x3] %vm476, 0.0
        %478 = vst.msk [vmem:[#allocation2 + $0x20] sm:$0xff] %vm359, 0.0
        %479 = vst.msk [vmem:[#allocation2 + $0x28] sm:$0xff] %vm359, 0.0
        %480 = vst.msk [vmem:[#allocation2 + $0x30] sm:$0xff] %vm359, 0.0
        %481 = vst.msk [vmem:[#allocation2 + $0x38] sm:$0x3] %vm476, 0.0
        %482 = vst.msk [vmem:[#allocation2 + $0x40] sm:$0xff] %vm359, 0.0
        %483 = vst.msk [vmem:[#allocation2 + $0x48] sm:$0xff] %vm359, 0.0
        %484 = vst.msk [vmem:[#allocation2 + $0x50] sm:$0xff] %vm359, 0.0
        %485 = vst.msk [vmem:[#allocation2 + $0x58] sm:$0x3] %vm476, 0.0
        %486 = vst.msk [vmem:[#allocation2 + $0x60] sm:$0xff] %vm359, 0.0
        %487 = vst.msk [vmem:[#allocation2 + $0x68] sm:$0xff] %vm359, 0.0
        %488 = vst.msk [vmem:[#allocation2 + $0x70] sm:$0xff] %vm359, 0.0
        %489 = vst.msk [vmem:[#allocation2 + $0x78] sm:$0x3] %vm476, 0.0
        %490 = vst.msk [vmem:[#allocation2 + $0x80] sm:$0xff] %vm359, 0.0
        %491 = vst.msk [vmem:[#allocation2 + $0x88] sm:$0xff] %vm359, 0.0
        %492 = vst.msk [vmem:[#allocation2 + $0x90] sm:$0xff] %vm359, 0.0
        %493 = vst.msk [vmem:[#allocation2 + $0x98] sm:$0x3] %vm476, 0.0
        %494 = vst.msk [vmem:[#allocation2 + $0xa0] sm:$0xff] %vm359, 0.0
        %495 = vst.msk [vmem:[#allocation2 + $0xa8] sm:$0xff] %vm359, 0.0
        %496 = vst.msk [vmem:[#allocation2 + $0xb0] sm:$0xff] %vm359, 0.0
        %497 = vst.msk [vmem:[#allocation2 + $0xb8] sm:$0x3] %vm476, 0.0
        %498 = vst.msk [vmem:[#allocation2 + $0xc0] sm:$0xff] %vm359, 0.0
        %499 = vst.msk [vmem:[#allocation2 + $0xc8] sm:$0xff] %vm359, 0.0
        %500 = vst.msk [vmem:[#allocation2 + $0xd0] sm:$0xff] %vm359, 0.0
        %501 = vst.msk [vmem:[#allocation2 + $0xd8] sm:$0x3] %vm476, 0.0
        %502 = vst.msk [vmem:[#allocation2 + $0xe0] sm:$0xff] %vm359, 0.0
        %503 = vst.msk [vmem:[#allocation2 + $0xe8] sm:$0xff] %vm359, 0.0
        %504 = vst.msk [vmem:[#allocation2 + $0xf0] sm:$0xff] %vm359, 0.0
        %505 = vst.msk [vmem:[#allocation2 + $0xf8] sm:$0x3] %vm476, 0.0
        %506 = vst.msk [vmem:[#allocation2 + $0x100] sm:$0xff] %vm359, 0.0
        %507 = vst.msk [vmem:[#allocation2 + $0x108] sm:$0xff] %vm359, 0.0
        %508 = vst.msk [vmem:[#allocation2 + $0x110] sm:$0xff] %vm359, 0.0
        %509 = vst.msk [vmem:[#allocation2 + $0x118] sm:$0x3] %vm476, 0.0
        %510 = vst.msk [vmem:[#allocation2 + $0x120] sm:$0xff] %vm359, 0.0
        %511 = vst.msk [vmem:[#allocation2 + $0x128] sm:$0xff] %vm359, 0.0
        %512 = vst.msk [vmem:[#allocation2 + $0x130] sm:$0xff] %vm359, 0.0
        %513 = vst.msk [vmem:[#allocation2 + $0x138] sm:$0x3] %vm476, 0.0
        %514 = vst.msk [vmem:[#allocation2 + $0x140] sm:$0xff] %vm359, 0.0
        %515 = vst.msk [vmem:[#allocation2 + $0x148] sm:$0xff] %vm359, 0.0
        %516 = vst.msk [vmem:[#allocation2 + $0x150] sm:$0xff] %vm359, 0.0
        %517 = vst.msk [vmem:[#allocation2 + $0x158] sm:$0x3] %vm476, 0.0
        %518 = vst.msk [vmem:[#allocation2 + $0x160] sm:$0xff] %vm359, 0.0
        %519 = vst.msk [vmem:[#allocation2 + $0x168] sm:$0xff] %vm359, 0.0
        %520 = vst.msk [vmem:[#allocation2 + $0x170] sm:$0xff] %vm359, 0.0
        %521 = vst.msk [vmem:[#allocation2 + $0x178] sm:$0x3] %vm476, 0.0
        %522 = vst.msk [vmem:[#allocation2 + $0x180] sm:$0xff] %vm359, 0.0
        %523 = vst.msk [vmem:[#allocation2 + $0x188] sm:$0xff] %vm359, 0.0
        %524 = vst.msk [vmem:[#allocation2 + $0x190] sm:$0xff] %vm359, 0.0
        %525 = vst.msk [vmem:[#allocation2 + $0x198] sm:$0x3] %vm476, 0.0
        %526 = vst.msk [vmem:[#allocation2 + $0x1a0] sm:$0xff] %vm359, 0.0
        %527 = vst.msk [vmem:[#allocation2 + $0x1a8] sm:$0xff] %vm359, 0.0
        %528 = vst.msk [vmem:[#allocation2 + $0x1b0] sm:$0xff] %vm359, 0.0
        %529 = vst.msk [vmem:[#allocation2 + $0x1b8] sm:$0x3] %vm476, 0.0
        %530 = vst.msk [vmem:[#allocation2 + $0x1c0] sm:$0xff] %vm359, 0.0
        %531 = vst.msk [vmem:[#allocation2 + $0x1c8] sm:$0xff] %vm359, 0.0
        %532 = vst.msk [vmem:[#allocation2 + $0x1d0] sm:$0xff] %vm359, 0.0
        %533 = vst.msk [vmem:[#allocation2 + $0x1d8] sm:$0x3] %vm476, 0.0
        %534 = vst.msk [vmem:[#allocation2 + $0x1e0] sm:$0xff] %vm359, 0.0
        %535 = vst.msk [vmem:[#allocation2 + $0x1e8] sm:$0xff] %vm359, 0.0
        %536 = vst.msk [vmem:[#allocation2 + $0x1f0] sm:$0xff] %vm359, 0.0
        %537 = vst.msk [vmem:[#allocation2 + $0x1f8] sm:$0x3] %vm476, 0.0
        %538 = vst.msk [vmem:[#allocation2 + $0x200] sm:$0xff] %vm359, 0.0
        %539 = vst.msk [vmem:[#allocation2 + $0x208] sm:$0xff] %vm359, 0.0
        %540 = vst.msk [vmem:[#allocation2 + $0x210] sm:$0xff] %vm359, 0.0
        %541 = vst.msk [vmem:[#allocation2 + $0x218] sm:$0x3] %vm476, 0.0
        %542 = vst.msk [vmem:[#allocation2 + $0x220] sm:$0xff] %vm359, 0.0
        %543 = vst.msk [vmem:[#allocation2 + $0x228] sm:$0xff] %vm359, 0.0
        %544 = vst.msk [vmem:[#allocation2 + $0x230] sm:$0xff] %vm359, 0.0
        %545 = vst.msk [vmem:[#allocation2 + $0x238] sm:$0x3] %vm476, 0.0
        %s546 = scalar_lea.vmem [#allocation2], 32
        %547 = vst.msk [vmem:[%s546 + $0x8] sm:$0xff] %vm359, %v441
        %548 = vst.msk [vmem:[%s546 + $0x10] sm:$0xff] %vm359, %v442
        %549 = vst.msk [vmem:[%s546 + $0x28] sm:$0xff] %vm359, %v443
        %550 = vst.msk [vmem:[%s546 + $0x30] sm:$0xff] %vm359, %v444
        %551 = vst.msk [vmem:[%s546 + $0x48] sm:$0xff] %vm359, %v445
        %552 = vst.msk [vmem:[%s546 + $0x50] sm:$0xff] %vm359, %v446
        %553 = vst.msk [vmem:[%s546 + $0x68] sm:$0xff] %vm359, %v447
        %554 = vst.msk [vmem:[%s546 + $0x70] sm:$0xff] %vm359, %v448
        %555 = vst.msk [vmem:[%s546 + $0x88] sm:$0xff] %vm359, %v449
        %556 = vst.msk [vmem:[%s546 + $0x90] sm:$0xff] %vm359, %v450
        %557 = vst.msk [vmem:[%s546 + $0xa8] sm:$0xff] %vm359, %v451
        %558 = vst.msk [vmem:[%s546 + $0xb0] sm:$0xff] %vm359, %v452
        %559 = vst.msk [vmem:[%s546 + $0xc8] sm:$0xff] %vm359, %v453
        %560 = vst.msk [vmem:[%s546 + $0xd0] sm:$0xff] %vm359, %v454
        %561 = vst.msk [vmem:[%s546 + $0xe8] sm:$0xff] %vm359, %v455
        %562 = vst.msk [vmem:[%s546 + $0xf0] sm:$0xff] %vm359, %v456
        %563 = vst.msk [vmem:[%s546 + $0x108] sm:$0xff] %vm359, %v457
        %564 = vst.msk [vmem:[%s546 + $0x110] sm:$0xff] %vm359, %v458
        %565 = vst.msk [vmem:[%s546 + $0x128] sm:$0xff] %vm359, %v459
        %566 = vst.msk [vmem:[%s546 + $0x130] sm:$0xff] %vm359, %v460
        %567 = vst.msk [vmem:[%s546 + $0x148] sm:$0xff] %vm359, %v461
        %568 = vst.msk [vmem:[%s546 + $0x150] sm:$0xff] %vm359, %v462
        %569 = vst.msk [vmem:[%s546 + $0x168] sm:$0xff] %vm359, %v463
        %570 = vst.msk [vmem:[%s546 + $0x170] sm:$0xff] %vm359, %v464
        %571 = vst.msk [vmem:[%s546 + $0x188] sm:$0xff] %vm359, %v465
        %572 = vst.msk [vmem:[%s546 + $0x190] sm:$0xff] %vm359, %v466
        %573 = vst.msk [vmem:[%s546 + $0x1a8] sm:$0xff] %vm359, %v467
        %574 = vst.msk [vmem:[%s546 + $0x1b0] sm:$0xff] %vm359, %v468
        %575 = vst.msk [vmem:[%s546 + $0x1c8] sm:$0xff] %vm359, %v469
        %576 = vst.msk [vmem:[%s546 + $0x1d0] sm:$0xff] %vm359, %v470
        %577 = vst.msk [vmem:[%s546 + $0x1e8] sm:$0xff] %vm359, %v471
        %578 = vst.msk [vmem:[%s546 + $0x1f0] sm:$0xff] %vm359, %v472
        %v579 = vld [vmem:[#allocation2 + $0x7] sm:$0xff]
        %v580 = vld [vmem:[#allocation2 + $0xf] sm:$0xff]
        %v581 = vld [vmem:[#allocation2 + $0x27] sm:$0xff]
        %v582 = vld [vmem:[#allocation2 + $0x2f] sm:$0xff]
        %v583 = vld [vmem:[#allocation2 + $0x47] sm:$0xff]
        %v584 = vld [vmem:[#allocation2 + $0x4f] sm:$0xff]
        %v585 = vld [vmem:[#allocation2 + $0x67] sm:$0xff]
        %v586 = vld [vmem:[#allocation2 + $0x6f] sm:$0xff]
        %v587 = vld [vmem:[#allocation2 + $0x87] sm:$0xff]
        %v588 = vld [vmem:[#allocation2 + $0x8f] sm:$0xff]
        %v589 = vld [vmem:[#allocation2 + $0xa7] sm:$0xff]
        %v590 = vld [vmem:[#allocation2 + $0xaf] sm:$0xff]
        %v591 = vld [vmem:[#allocation2 + $0xc7] sm:$0xff]
        %v592 = vld [vmem:[#allocation2 + $0xcf] sm:$0xff]
        %v593 = vld [vmem:[#allocation2 + $0xe7] sm:$0xff]
        %v594 = vld [vmem:[#allocation2 + $0xef] sm:$0xff]
        %v595 = vld [vmem:[#allocation2 + $0x107] sm:$0xff]
        %v596 = vld [vmem:[#allocation2 + $0x10f] sm:$0xff]
        %v597 = vld [vmem:[#allocation2 + $0x127] sm:$0xff]
        %v598 = vld [vmem:[#allocation2 + $0x12f] sm:$0xff]
        %v599 = vld [vmem:[#allocation2 + $0x147] sm:$0xff]
        %v600 = vld [vmem:[#allocation2 + $0x14f] sm:$0xff]
        %v601 = vld [vmem:[#allocation2 + $0x167] sm:$0xff]
        %v602 = vld [vmem:[#allocation2 + $0x16f] sm:$0xff]
        %v603 = vld [vmem:[#allocation2 + $0x187] sm:$0xff]
        %v604 = vld [vmem:[#allocation2 + $0x18f] sm:$0xff]
        %v605 = vld [vmem:[#allocation2 + $0x1a7] sm:$0xff]
        %v606 = vld [vmem:[#allocation2 + $0x1af] sm:$0xff]
        %v607 = vld [vmem:[#allocation2 + $0x1c7] sm:$0xff]
        %v608 = vld [vmem:[#allocation2 + $0x1cf] sm:$0xff]
        %v609 = vld [vmem:[#allocation2 + $0x1e7] sm:$0xff]
        %v610 = vld [vmem:[#allocation2 + $0x1ef] sm:$0xff]
        %v611 = vld [vmem:[%s3] sm:$0x1]
        %v612 = vlaneseq
        %v613 = vshrl.u32 %v612, 7
        %v614 = vsub.s32 0, %v613
        %v615 = vrot.slane %v611, %v614
        %v616 = vmul.f32 %v579, %v615
        %v617 = vmul.f32 %v580, %v615
        %v618 = vmul.f32 %v581, %v615
        %v619 = vmul.f32 %v582, %v615
        %v620 = vmul.f32 %v583, %v615
        %v621 = vmul.f32 %v584, %v615
        %v622 = vmul.f32 %v585, %v615
        %v623 = vmul.f32 %v586, %v615
        %v624 = vmul.f32 %v587, %v615
        %v625 = vmul.f32 %v588, %v615
        %v626 = vmul.f32 %v589, %v615
        %v627 = vmul.f32 %v590, %v615
        %v628 = vmul.f32 %v591, %v615
        %v629 = vmul.f32 %v592, %v615
        %v630 = vmul.f32 %v593, %v615
        %v631 = vmul.f32 %v594, %v615
        %v632 = vmul.f32 %v595, %v615
        %v633 = vmul.f32 %v596, %v615
        %v634 = vmul.f32 %v597, %v615
        %v635 = vmul.f32 %v598, %v615
        %v636 = vmul.f32 %v599, %v615
        %v637 = vmul.f32 %v600, %v615
        %v638 = vmul.f32 %v601, %v615
        %v639 = vmul.f32 %v602, %v615
        %v640 = vmul.f32 %v603, %v615
        %v641 = vmul.f32 %v604, %v615
        %v642 = vmul.f32 %v605, %v615
        %v643 = vmul.f32 %v606, %v615
        %v644 = vmul.f32 %v607, %v615
        %v645 = vmul.f32 %v608, %v615
        %v646 = vmul.f32 %v609, %v615
        %v647 = vmul.f32 %v610, %v615
        %v648 = vld [vmem:[#allocation2 + $0x8] sm:$0xff]
        %v649 = vld [vmem:[#allocation2 + $0x10] sm:$0xff]
        %v650 = vld [vmem:[#allocation2 + $0x28] sm:$0xff]
        %v651 = vld [vmem:[#allocation2 + $0x30] sm:$0xff]
        %v652 = vld [vmem:[#allocation2 + $0x48] sm:$0xff]
        %v653 = vld [vmem:[#allocation2 + $0x50] sm:$0xff]
        %v654 = vld [vmem:[#allocation2 + $0x68] sm:$0xff]
        %v655 = vld [vmem:[#allocation2 + $0x70] sm:$0xff]
        %v656 = vld [vmem:[#allocation2 + $0x88] sm:$0xff]
        %v657 = vld [vmem:[#allocation2 + $0x90] sm:$0xff]
        %v658 = vld [vmem:[#allocation2 + $0xa8] sm:$0xff]
        %v659 = vld [vmem:[#allocation2 + $0xb0] sm:$0xff]
        %v660 = vld [vmem:[#allocation2 + $0xc8] sm:$0xff]
        %v661 = vld [vmem:[#allocation2 + $0xd0] sm:$0xff]
        %v662 = vld [vmem:[#allocation2 + $0xe8] sm:$0xff]
        %v663 = vld [vmem:[#allocation2 + $0xf0] sm:$0xff]
        %v664 = vld [vmem:[#allocation2 + $0x108] sm:$0xff]
        %v665 = vld [vmem:[#allocation2 + $0x110] sm:$0xff]
        %v666 = vld [vmem:[#allocation2 + $0x128] sm:$0xff]
        %v667 = vld [vmem:[#allocation2 + $0x130] sm:$0xff]
        %v668 = vld [vmem:[#allocation2 + $0x148] sm:$0xff]
        %v669 = vld [vmem:[#allocation2 + $0x150] sm:$0xff]
        %v670 = vld [vmem:[#allocation2 + $0x168] sm:$0xff]
        %v671 = vld [vmem:[#allocation2 + $0x170] sm:$0xff]
        %v672 = vld [vmem:[#allocation2 + $0x188] sm:$0xff]
        %v673 = vld [vmem:[#allocation2 + $0x190] sm:$0xff]
        %v674 = vld [vmem:[#allocation2 + $0x1a8] sm:$0xff]
        %v675 = vld [vmem:[#allocation2 + $0x1b0] sm:$0xff]
        %v676 = vld [vmem:[#allocation2 + $0x1c8] sm:$0xff]
        %v677 = vld [vmem:[#allocation2 + $0x1d0] sm:$0xff]
        %v678 = vld [vmem:[#allocation2 + $0x1e8] sm:$0xff]
        %v679 = vld [vmem:[#allocation2 + $0x1f0] sm:$0xff]
        %v680 = vld [vmem:[%s3 + $0x1] sm:$0x1]
        %v681 = vlaneseq
        %v682 = vshrl.u32 %v681, 7
        %v683 = vsub.s32 0, %v682
        %v684 = vrot.slane %v680, %v683
        %v685 = vmul.f32 %v648, %v684
        %v686 = vmul.f32 %v649, %v684
        %v687 = vmul.f32 %v650, %v684
        %v688 = vmul.f32 %v651, %v684
        %v689 = vmul.f32 %v652, %v684
        %v690 = vmul.f32 %v653, %v684
        %v691 = vmul.f32 %v654, %v684
        %v692 = vmul.f32 %v655, %v684
        %v693 = vmul.f32 %v656, %v684
        %v694 = vmul.f32 %v657, %v684
        %v695 = vmul.f32 %v658, %v684
        %v696 = vmul.f32 %v659, %v684
        %v697 = vmul.f32 %v660, %v684
        %v698 = vmul.f32 %v661, %v684
        %v699 = vmul.f32 %v662, %v684
        %v700 = vmul.f32 %v663, %v684
        %v701 = vmul.f32 %v664, %v684
        %v702 = vmul.f32 %v665, %v684
        %v703 = vmul.f32 %v666, %v684
        %v704 = vmul.f32 %v667, %v684
        %v705 = vmul.f32 %v668, %v684
        %v706 = vmul.f32 %v669, %v684
        %v707 = vmul.f32 %v670, %v684
        %v708 = vmul.f32 %v671, %v684
        %v709 = vmul.f32 %v672, %v684
        %v710 = vmul.f32 %v673, %v684
        %v711 = vmul.f32 %v674, %v684
        %v712 = vmul.f32 %v675, %v684
        %v713 = vmul.f32 %v676, %v684
        %v714 = vmul.f32 %v677, %v684
        %v715 = vmul.f32 %v678, %v684
        %v716 = vmul.f32 %v679, %v684
        %v717 = vadd.f32 %v616, %v685
        %v718 = vadd.f32 %v617, %v686
        %v719 = vadd.f32 %v618, %v687
        %v720 = vadd.f32 %v619, %v688
        %v721 = vadd.f32 %v620, %v689
        %v722 = vadd.f32 %v621, %v690
        %v723 = vadd.f32 %v622, %v691
        %v724 = vadd.f32 %v623, %v692
        %v725 = vadd.f32 %v624, %v693
        %v726 = vadd.f32 %v625, %v694
        %v727 = vadd.f32 %v626, %v695
        %v728 = vadd.f32 %v627, %v696
        %v729 = vadd.f32 %v628, %v697
        %v730 = vadd.f32 %v629, %v698
        %v731 = vadd.f32 %v630, %v699
        %v732 = vadd.f32 %v631, %v700
        %v733 = vadd.f32 %v632, %v701
        %v734 = vadd.f32 %v633, %v702
        %v735 = vadd.f32 %v634, %v703
        %v736 = vadd.f32 %v635, %v704
        %v737 = vadd.f32 %v636, %v705
        %v738 = vadd.f32 %v637, %v706
        %v739 = vadd.f32 %v638, %v707
        %v740 = vadd.f32 %v639, %v708
        %v741 = vadd.f32 %v640, %v709
        %v742 = vadd.f32 %v641, %v710
        %v743 = vadd.f32 %v642, %v711
        %v744 = vadd.f32 %v643, %v712
        %v745 = vadd.f32 %v644, %v713
        %v746 = vadd.f32 %v645, %v714
        %v747 = vadd.f32 %v646, %v715
        %v748 = vadd.f32 %v647, %v716
        %v749 = vld [vmem:[#allocation2 + $0x9] sm:$0xff]
        %v750 = vld [vmem:[#allocation2 + $0x11] sm:$0xff]
        %v751 = vld [vmem:[#allocation2 + $0x29] sm:$0xff]
        %v752 = vld [vmem:[#allocation2 + $0x31] sm:$0xff]
        %v753 = vld [vmem:[#allocation2 + $0x49] sm:$0xff]
        %v754 = vld [vmem:[#allocation2 + $0x51] sm:$0xff]
        %v755 = vld [vmem:[#allocation2 + $0x69] sm:$0xff]
        %v756 = vld [vmem:[#allocation2 + $0x71] sm:$0xff]
        %v757 = vld [vmem:[#allocation2 + $0x89] sm:$0xff]
        %v758 = vld [vmem:[#allocation2 + $0x91] sm:$0xff]
        %v759 = vld [vmem:[#allocation2 + $0xa9] sm:$0xff]
        %v760 = vld [vmem:[#allocation2 + $0xb1] sm:$0xff]
        %v761 = vld [vmem:[#allocation2 + $0xc9] sm:$0xff]
        %v762 = vld [vmem:[#allocation2 + $0xd1] sm:$0xff]
        %v763 = vld [vmem:[#allocation2 + $0xe9] sm:$0xff]
        %v764 = vld [vmem:[#allocation2 + $0xf1] sm:$0xff]
        %v765 = vld [vmem:[#allocation2 + $0x109] sm:$0xff]
        %v766 = vld [vmem:[#allocation2 + $0x111] sm:$0xff]
        %v767 = vld [vmem:[#allocation2 + $0x129] sm:$0xff]
        %v768 = vld [vmem:[#allocation2 + $0x131] sm:$0xff]
        %v769 = vld [vmem:[#allocation2 + $0x149] sm:$0xff]
        %v770 = vld [vmem:[#allocation2 + $0x151] sm:$0xff]
        %v771 = vld [vmem:[#allocation2 + $0x169] sm:$0xff]
        %v772 = vld [vmem:[#allocation2 + $0x171] sm:$0xff]
        %v773 = vld [vmem:[#allocation2 + $0x189] sm:$0xff]
        %v774 = vld [vmem:[#allocation2 + $0x191] sm:$0xff]
        %v775 = vld [vmem:[#allocation2 + $0x1a9] sm:$0xff]
        %v776 = vld [vmem:[#allocation2 + $0x1b1] sm:$0xff]
        %v777 = vld [vmem:[#allocation2 + $0x1c9] sm:$0xff]
        %v778 = vld [vmem:[#allocation2 + $0x1d1] sm:$0xff]
        %v779 = vld [vmem:[#allocation2 + $0x1e9] sm:$0xff]
        %v780 = vld [vmem:[#allocation2 + $0x1f1] sm:$0xff]
        %v781 = vld [vmem:[%s3 + $0x2] sm:$0x1]
        %v782 = vlaneseq
        %v783 = vshrl.u32 %v782, 7
        %v784 = vsub.s32 0, %v783
        %v785 = vrot.slane %v781, %v784
        %v786 = vmul.f32 %v749, %v785
        %v787 = vmul.f32 %v750, %v785
        %v788 = vmul.f32 %v751, %v785
        %v789 = vmul.f32 %v752, %v785
        %v790 = vmul.f32 %v753, %v785
        %v791 = vmul.f32 %v754, %v785
        %v792 = vmul.f32 %v755, %v785
        %v793 = vmul.f32 %v756, %v785
        %v794 = vmul.f32 %v757, %v785
        %v795 = vmul.f32 %v758, %v785
        %v796 = vmul.f32 %v759, %v785
        %v797 = vmul.f32 %v760, %v785
        %v798 = vmul.f32 %v761, %v785
        %v799 = vmul.f32 %v762, %v785
        %v800 = vmul.f32 %v763, %v785
        %v801 = vmul.f32 %v764, %v785
        %v802 = vmul.f32 %v765, %v785
        %v803 = vmul.f32 %v766, %v785
        %v804 = vmul.f32 %v767, %v785
        %v805 = vmul.f32 %v768, %v785
        %v806 = vmul.f32 %v769, %v785
        %v807 = vmul.f32 %v770, %v785
        %v808 = vmul.f32 %v771, %v785
        %v809 = vmul.f32 %v772, %v785
        %v810 = vmul.f32 %v773, %v785
        %v811 = vmul.f32 %v774, %v785
        %v812 = vmul.f32 %v775, %v785
        %v813 = vmul.f32 %v776, %v785
        %v814 = vmul.f32 %v777, %v785
        %v815 = vmul.f32 %v778, %v785
        %v816 = vmul.f32 %v779, %v785
        %v817 = vmul.f32 %v780, %v785
        %v818 = vadd.f32 %v717, %v786
        %v819 = vadd.f32 %v718, %v787
        %v820 = vadd.f32 %v719, %v788
        %v821 = vadd.f32 %v720, %v789
        %v822 = vadd.f32 %v721, %v790
        %v823 = vadd.f32 %v722, %v791
        %v824 = vadd.f32 %v723, %v792
        %v825 = vadd.f32 %v724, %v793
        %v826 = vadd.f32 %v725, %v794
        %v827 = vadd.f32 %v726, %v795
        %v828 = vadd.f32 %v727, %v796
        %v829 = vadd.f32 %v728, %v797
        %v830 = vadd.f32 %v729, %v798
        %v831 = vadd.f32 %v730, %v799
        %v832 = vadd.f32 %v731, %v800
        %v833 = vadd.f32 %v732, %v801
        %v834 = vadd.f32 %v733, %v802
        %v835 = vadd.f32 %v734, %v803
        %v836 = vadd.f32 %v735, %v804
        %v837 = vadd.f32 %v736, %v805
        %v838 = vadd.f32 %v737, %v806
        %v839 = vadd.f32 %v738, %v807
        %v840 = vadd.f32 %v739, %v808
        %v841 = vadd.f32 %v740, %v809
        %v842 = vadd.f32 %v741, %v810
        %v843 = vadd.f32 %v742, %v811
        %v844 = vadd.f32 %v743, %v812
        %v845 = vadd.f32 %v744, %v813
        %v846 = vadd.f32 %v745, %v814
        %v847 = vadd.f32 %v746, %v815
        %v848 = vadd.f32 %v747, %v816
        %v849 = vadd.f32 %v748, %v817
        %v850 = vld [vmem:[%s546 + $0x7] sm:$0xff]
        %v851 = vld [vmem:[%s546 + $0xf] sm:$0xff]
        %v852 = vld [vmem:[%s546 + $0x27] sm:$0xff]
        %v853 = vld [vmem:[%s546 + $0x2f] sm:$0xff]
        %v854 = vld [vmem:[%s546 + $0x47] sm:$0xff]
        %v855 = vld [vmem:[%s546 + $0x4f] sm:$0xff]
        %v856 = vld [vmem:[%s546 + $0x67] sm:$0xff]
        %v857 = vld [vmem:[%s546 + $0x6f] sm:$0xff]
        %v858 = vld [vmem:[%s546 + $0x87] sm:$0xff]
        %v859 = vld [vmem:[%s546 + $0x8f] sm:$0xff]
        %v860 = vld [vmem:[%s546 + $0xa7] sm:$0xff]
        %v861 = vld [vmem:[%s546 + $0xaf] sm:$0xff]
        %v862 = vld [vmem:[%s546 + $0xc7] sm:$0xff]
        %v863 = vld [vmem:[%s546 + $0xcf] sm:$0xff]
        %v864 = vld [vmem:[%s546 + $0xe7] sm:$0xff]
        %v865 = vld [vmem:[%s546 + $0xef] sm:$0xff]
        %v866 = vld [vmem:[%s546 + $0x107] sm:$0xff]
        %v867 = vld [vmem:[%s546 + $0x10f] sm:$0xff]
        %v868 = vld [vmem:[%s546 + $0x127] sm:$0xff]
        %v869 = vld [vmem:[%s546 + $0x12f] sm:$0xff]
        %v870 = vld [vmem:[%s546 + $0x147] sm:$0xff]
        %v871 = vld [vmem:[%s546 + $0x14f] sm:$0xff]
        %v872 = vld [vmem:[%s546 + $0x167] sm:$0xff]
        %v873 = vld [vmem:[%s546 + $0x16f] sm:$0xff]
        %v874 = vld [vmem:[%s546 + $0x187] sm:$0xff]
        %v875 = vld [vmem:[%s546 + $0x18f] sm:$0xff]
        %v876 = vld [vmem:[%s546 + $0x1a7] sm:$0xff]
        %v877 = vld [vmem:[%s546 + $0x1af] sm:$0xff]
        %v878 = vld [vmem:[%s546 + $0x1c7] sm:$0xff]
        %v879 = vld [vmem:[%s546 + $0x1cf] sm:$0xff]
        %v880 = vld [vmem:[%s546 + $0x1e7] sm:$0xff]
        %v881 = vld [vmem:[%s546 + $0x1ef] sm:$0xff]
        %v882 = vld [vmem:[%s3 + $0x3] sm:$0x1]
        %v883 = vlaneseq
        %v884 = vshrl.u32 %v883, 7
        %v885 = vsub.s32 0, %v884
        %v886 = vrot.slane %v882, %v885
        %v887 = vmul.f32 %v850, %v886
        %v888 = vmul.f32 %v851, %v886
        %v889 = vmul.f32 %v852, %v886
        %v890 = vmul.f32 %v853, %v886
        %v891 = vmul.f32 %v854, %v886
        %v892 = vmul.f32 %v855, %v886
        %v893 = vmul.f32 %v856, %v886
        %v894 = vmul.f32 %v857, %v886
        %v895 = vmul.f32 %v858, %v886
        %v896 = vmul.f32 %v859, %v886
        %v897 = vmul.f32 %v860, %v886
        %v898 = vmul.f32 %v861, %v886
        %v899 = vmul.f32 %v862, %v886
        %v900 = vmul.f32 %v863, %v886
        %v901 = vmul.f32 %v864, %v886
        %v902 = vmul.f32 %v865, %v886
        %v903 = vmul.f32 %v866, %v886
        %v904 = vmul.f32 %v867, %v886
        %v905 = vmul.f32 %v868, %v886
        %v906 = vmul.f32 %v869, %v886
        %v907 = vmul.f32 %v870, %v886
        %v908 = vmul.f32 %v871, %v886
        %v909 = vmul.f32 %v872, %v886
        %v910 = vmul.f32 %v873, %v886
        %v911 = vmul.f32 %v874, %v886
        %v912 = vmul.f32 %v875, %v886
        %v913 = vmul.f32 %v876, %v886
        %v914 = vmul.f32 %v877, %v886
        %v915 = vmul.f32 %v878, %v886
        %v916 = vmul.f32 %v879, %v886
        %v917 = vmul.f32 %v880, %v886
        %v918 = vmul.f32 %v881, %v886
        %v919 = vadd.f32 %v818, %v887
        %v920 = vadd.f32 %v819, %v888
        %v921 = vadd.f32 %v820, %v889
        %v922 = vadd.f32 %v821, %v890
        %v923 = vadd.f32 %v822, %v891
        %v924 = vadd.f32 %v823, %v892
        %v925 = vadd.f32 %v824, %v893
        %v926 = vadd.f32 %v825, %v894
        %v927 = vadd.f32 %v826, %v895
        %v928 = vadd.f32 %v827, %v896
        %v929 = vadd.f32 %v828, %v897
        %v930 = vadd.f32 %v829, %v898
        %v931 = vadd.f32 %v830, %v899
        %v932 = vadd.f32 %v831, %v900
        %v933 = vadd.f32 %v832, %v901
        %v934 = vadd.f32 %v833, %v902
        %v935 = vadd.f32 %v834, %v903
        %v936 = vadd.f32 %v835, %v904
        %v937 = vadd.f32 %v836, %v905
        %v938 = vadd.f32 %v837, %v906
        %v939 = vadd.f32 %v838, %v907
        %v940 = vadd.f32 %v839, %v908
        %v941 = vadd.f32 %v840, %v909
        %v942 = vadd.f32 %v841, %v910
        %v943 = vadd.f32 %v842, %v911
        %v944 = vadd.f32 %v843, %v912
        %v945 = vadd.f32 %v844, %v913
        %v946 = vadd.f32 %v845, %v914
        %v947 = vadd.f32 %v846, %v915
        %v948 = vadd.f32 %v847, %v916
        %v949 = vadd.f32 %v848, %v917
        %v950 = vadd.f32 %v849, %v918
        %v951 = vld [vmem:[%s546 + $0x8] sm:$0xff]
        %v952 = vld [vmem:[%s546 + $0x10] sm:$0xff]
        %v953 = vld [vmem:[%s546 + $0x28] sm:$0xff]
        %v954 = vld [vmem:[%s546 + $0x30] sm:$0xff]
        %v955 = vld [vmem:[%s546 + $0x48] sm:$0xff]
        %v956 = vld [vmem:[%s546 + $0x50] sm:$0xff]
        %v957 = vld [vmem:[%s546 + $0x68] sm:$0xff]
        %v958 = vld [vmem:[%s546 + $0x70] sm:$0xff]
        %v959 = vld [vmem:[%s546 + $0x88] sm:$0xff]
        %v960 = vld [vmem:[%s546 + $0x90] sm:$0xff]
        %v961 = vld [vmem:[%s546 + $0xa8] sm:$0xff]
        %v962 = vld [vmem:[%s546 + $0xb0] sm:$0xff]
        %v963 = vld [vmem:[%s546 + $0xc8] sm:$0xff]
        %v964 = vld [vmem:[%s546 + $0xd0] sm:$0xff]
        %v965 = vld [vmem:[%s546 + $0xe8] sm:$0xff]
        %v966 = vld [vmem:[%s546 + $0xf0] sm:$0xff]
        %v967 = vld [vmem:[%s546 + $0x108] sm:$0xff]
        %v968 = vld [vmem:[%s546 + $0x110] sm:$0xff]
        %v969 = vld [vmem:[%s546 + $0x128] sm:$0xff]
        %v970 = vld [vmem:[%s546 + $0x130] sm:$0xff]
        %v971 = vld [vmem:[%s546 + $0x148] sm:$0xff]
        %v972 = vld [vmem:[%s546 + $0x150] sm:$0xff]
        %v973 = vld [vmem:[%s546 + $0x168] sm:$0xff]
        %v974 = vld [vmem:[%s546 + $0x170] sm:$0xff]
        %v975 = vld [vmem:[%s546 + $0x188] sm:$0xff]
        %v976 = vld [vmem:[%s546 + $0x190] sm:$0xff]
        %v977 = vld [vmem:[%s546 + $0x1a8] sm:$0xff]
        %v978 = vld [vmem:[%s546 + $0x1b0] sm:$0xff]
        %v979 = vld [vmem:[%s546 + $0x1c8] sm:$0xff]
        %v980 = vld [vmem:[%s546 + $0x1d0] sm:$0xff]
        %v981 = vld [vmem:[%s546 + $0x1e8] sm:$0xff]
        %v982 = vld [vmem:[%s546 + $0x1f0] sm:$0xff]
        %v983 = vld [vmem:[%s3 + $0x4] sm:$0x1]
        %v984 = vlaneseq
        %v985 = vshrl.u32 %v984, 7
        %v986 = vsub.s32 0, %v985
        %v987 = vrot.slane %v983, %v986
        %v988 = vmul.f32 %v951, %v987
        %v989 = vmul.f32 %v952, %v987
        %v990 = vmul.f32 %v953, %v987
        %v991 = vmul.f32 %v954, %v987
        %v992 = vmul.f32 %v955, %v987
        %v993 = vmul.f32 %v956, %v987
        %v994 = vmul.f32 %v957, %v987
        %v995 = vmul.f32 %v958, %v987
        %v996 = vmul.f32 %v959, %v987
        %v997 = vmul.f32 %v960, %v987
        %v998 = vmul.f32 %v961, %v987
        %v999 = vmul.f32 %v962, %v987
        %v1000 = vmul.f32 %v963, %v987
        %v1001 = vmul.f32 %v964, %v987
        %v1002 = vmul.f32 %v965, %v987
        %v1003 = vmul.f32 %v966, %v987
        %v1004 = vmul.f32 %v967, %v987
        %v1005 = vmul.f32 %v968, %v987
        %v1006 = vmul.f32 %v969, %v987
        %v1007 = vmul.f32 %v970, %v987
        %v1008 = vmul.f32 %v971, %v987
        %v1009 = vmul.f32 %v972, %v987
        %v1010 = vmul.f32 %v973, %v987
        %v1011 = vmul.f32 %v974, %v987
        %v1012 = vmul.f32 %v975, %v987
        %v1013 = vmul.f32 %v976, %v987
        %v1014 = vmul.f32 %v977, %v987
        %v1015 = vmul.f32 %v978, %v987
        %v1016 = vmul.f32 %v979, %v987
        %v1017 = vmul.f32 %v980, %v987
        %v1018 = vmul.f32 %v981, %v987
        %v1019 = vmul.f32 %v982, %v987
        %v1020 = vadd.f32 %v919, %v988
        %v1021 = vadd.f32 %v920, %v989
        %v1022 = vadd.f32 %v921, %v990
        %v1023 = vadd.f32 %v922, %v991
        %v1024 = vadd.f32 %v923, %v992
        %v1025 = vadd.f32 %v924, %v993
        %v1026 = vadd.f32 %v925, %v994
        %v1027 = vadd.f32 %v926, %v995
        %v1028 = vadd.f32 %v927, %v996
        %v1029 = vadd.f32 %v928, %v997
        %v1030 = vadd.f32 %v929, %v998
        %v1031 = vadd.f32 %v930, %v999
        %v1032 = vadd.f32 %v931, %v1000
        %v1033 = vadd.f32 %v932, %v1001
        %v1034 = vadd.f32 %v933, %v1002
        %v1035 = vadd.f32 %v934, %v1003
        %v1036 = vadd.f32 %v935, %v1004
        %v1037 = vadd.f32 %v936, %v1005
        %v1038 = vadd.f32 %v937, %v1006
        %v1039 = vadd.f32 %v938, %v1007
        %v1040 = vadd.f32 %v939, %v1008
        %v1041 = vadd.f32 %v940, %v1009
        %v1042 = vadd.f32 %v941, %v1010
        %v1043 = vadd.f32 %v942, %v1011
        %v1044 = vadd.f32 %v943, %v1012
        %v1045 = vadd.f32 %v944, %v1013
        %v1046 = vadd.f32 %v945, %v1014
        %v1047 = vadd.f32 %v946, %v1015
        %v1048 = vadd.f32 %v947, %v1016
        %v1049 = vadd.f32 %v948, %v1017
        %v1050 = vadd.f32 %v949, %v1018
        %v1051 = vadd.f32 %v950, %v1019
        %v1052 = vld [vmem:[%s546 + $0x9] sm:$0xff]
        %v1053 = vld [vmem:[%s546 + $0x11] sm:$0xff]
        %v1054 = vld [vmem:[%s546 + $0x29] sm:$0xff]
        %v1055 = vld [vmem:[%s546 + $0x31] sm:$0xff]
        %v1056 = vld [vmem:[%s546 + $0x49] sm:$0xff]
        %v1057 = vld [vmem:[%s546 + $0x51] sm:$0xff]
        %v1058 = vld [vmem:[%s546 + $0x69] sm:$0xff]
        %v1059 = vld [vmem:[%s546 + $0x71] sm:$0xff]
        %v1060 = vld [vmem:[%s546 + $0x89] sm:$0xff]
        %v1061 = vld [vmem:[%s546 + $0x91] sm:$0xff]
        %v1062 = vld [vmem:[%s546 + $0xa9] sm:$0xff]
        %v1063 = vld [vmem:[%s546 + $0xb1] sm:$0xff]
        %v1064 = vld [vmem:[%s546 + $0xc9] sm:$0xff]
        %v1065 = vld [vmem:[%s546 + $0xd1] sm:$0xff]
        %v1066 = vld [vmem:[%s546 + $0xe9] sm:$0xff]
        %v1067 = vld [vmem:[%s546 + $0xf1] sm:$0xff]
        %v1068 = vld [vmem:[%s546 + $0x109] sm:$0xff]
        %v1069 = vld [vmem:[%s546 + $0x111] sm:$0xff]
        %v1070 = vld [vmem:[%s546 + $0x129] sm:$0xff]
        %v1071 = vld [vmem:[%s546 + $0x131] sm:$0xff]
        %v1072 = vld [vmem:[%s546 + $0x149] sm:$0xff]
        %v1073 = vld [vmem:[%s546 + $0x151] sm:$0xff]
        %v1074 = vld [vmem:[%s546 + $0x169] sm:$0xff]
        %v1075 = vld [vmem:[%s546 + $0x171] sm:$0xff]
        %v1076 = vld [vmem:[%s546 + $0x189] sm:$0xff]
        %v1077 = vld [vmem:[%s546 + $0x191] sm:$0xff]
        %v1078 = vld [vmem:[%s546 + $0x1a9] sm:$0xff]
        %v1079 = vld [vmem:[%s546 + $0x1b1] sm:$0xff]
        %v1080 = vld [vmem:[%s546 + $0x1c9] sm:$0xff]
        %v1081 = vld [vmem:[%s546 + $0x1d1] sm:$0xff]
        %v1082 = vld [vmem:[%s546 + $0x1e9] sm:$0xff]
        %v1083 = vld [vmem:[%s546 + $0x1f1] sm:$0xff]
        %v1084 = vld [vmem:[%s3 + $0x5] sm:$0x1]
        %v1085 = vlaneseq
        %v1086 = vshrl.u32 %v1085, 7
        %v1087 = vsub.s32 0, %v1086
        %v1088 = vrot.slane %v1084, %v1087
        %v1089 = vmul.f32 %v1052, %v1088
        %v1090 = vmul.f32 %v1053, %v1088
        %v1091 = vmul.f32 %v1054, %v1088
        %v1092 = vmul.f32 %v1055, %v1088
        %v1093 = vmul.f32 %v1056, %v1088
        %v1094 = vmul.f32 %v1057, %v1088
        %v1095 = vmul.f32 %v1058, %v1088
        %v1096 = vmul.f32 %v1059, %v1088
        %v1097 = vmul.f32 %v1060, %v1088
        %v1098 = vmul.f32 %v1061, %v1088
        %v1099 = vmul.f32 %v1062, %v1088
        %v1100 = vmul.f32 %v1063, %v1088
        %v1101 = vmul.f32 %v1064, %v1088
        %v1102 = vmul.f32 %v1065, %v1088
        %v1103 = vmul.f32 %v1066, %v1088
        %v1104 = vmul.f32 %v1067, %v1088
        %v1105 = vmul.f32 %v1068, %v1088
        %v1106 = vmul.f32 %v1069, %v1088
        %v1107 = vmul.f32 %v1070, %v1088
        %v1108 = vmul.f32 %v1071, %v1088
        %v1109 = vmul.f32 %v1072, %v1088
        %v1110 = vmul.f32 %v1073, %v1088
        %v1111 = vmul.f32 %v1074, %v1088
        %v1112 = vmul.f32 %v1075, %v1088
        %v1113 = vmul.f32 %v1076, %v1088
        %v1114 = vmul.f32 %v1077, %v1088
        %v1115 = vmul.f32 %v1078, %v1088
        %v1116 = vmul.f32 %v1079, %v1088
        %v1117 = vmul.f32 %v1080, %v1088
        %v1118 = vmul.f32 %v1081, %v1088
        %v1119 = vmul.f32 %v1082, %v1088
        %v1120 = vmul.f32 %v1083, %v1088
        %v1121 = vadd.f32 %v1020, %v1089
        %v1122 = vadd.f32 %v1021, %v1090
        %v1123 = vadd.f32 %v1022, %v1091
        %v1124 = vadd.f32 %v1023, %v1092
        %v1125 = vadd.f32 %v1024, %v1093
        %v1126 = vadd.f32 %v1025, %v1094
        %v1127 = vadd.f32 %v1026, %v1095
        %v1128 = vadd.f32 %v1027, %v1096
        %v1129 = vadd.f32 %v1028, %v1097
        %v1130 = vadd.f32 %v1029, %v1098
        %v1131 = vadd.f32 %v1030, %v1099
        %v1132 = vadd.f32 %v1031, %v1100
        %v1133 = vadd.f32 %v1032, %v1101
        %v1134 = vadd.f32 %v1033, %v1102
        %v1135 = vadd.f32 %v1034, %v1103
        %v1136 = vadd.f32 %v1035, %v1104
        %v1137 = vadd.f32 %v1036, %v1105
        %v1138 = vadd.f32 %v1037, %v1106
        %v1139 = vadd.f32 %v1038, %v1107
        %v1140 = vadd.f32 %v1039, %v1108
        %v1141 = vadd.f32 %v1040, %v1109
        %v1142 = vadd.f32 %v1041, %v1110
        %v1143 = vadd.f32 %v1042, %v1111
        %v1144 = vadd.f32 %v1043, %v1112
        %v1145 = vadd.f32 %v1044, %v1113
        %v1146 = vadd.f32 %v1045, %v1114
        %v1147 = vadd.f32 %v1046, %v1115
        %v1148 = vadd.f32 %v1047, %v1116
        %v1149 = vadd.f32 %v1048, %v1117
        %v1150 = vadd.f32 %v1049, %v1118
        %v1151 = vadd.f32 %v1050, %v1119
        %v1152 = vadd.f32 %v1051, %v1120
        %s1153 = scalar_lea.vmem [#allocation2], 64
        %v1154 = vld [vmem:[%s1153 + $0x7] sm:$0xff]
        %v1155 = vld [vmem:[%s1153 + $0xf] sm:$0xff]
        %v1156 = vld [vmem:[%s1153 + $0x27] sm:$0xff]
        %v1157 = vld [vmem:[%s1153 + $0x2f] sm:$0xff]
        %v1158 = vld [vmem:[%s1153 + $0x47] sm:$0xff]
        %v1159 = vld [vmem:[%s1153 + $0x4f] sm:$0xff]
        %v1160 = vld [vmem:[%s1153 + $0x67] sm:$0xff]
        %v1161 = vld [vmem:[%s1153 + $0x6f] sm:$0xff]
        %v1162 = vld [vmem:[%s1153 + $0x87] sm:$0xff]
        %v1163 = vld [vmem:[%s1153 + $0x8f] sm:$0xff]
        %v1164 = vld [vmem:[%s1153 + $0xa7] sm:$0xff]
        %v1165 = vld [vmem:[%s1153 + $0xaf] sm:$0xff]
        %v1166 = vld [vmem:[%s1153 + $0xc7] sm:$0xff]
        %v1167 = vld [vmem:[%s1153 + $0xcf] sm:$0xff]
        %v1168 = vld [vmem:[%s1153 + $0xe7] sm:$0xff]
        %v1169 = vld [vmem:[%s1153 + $0xef] sm:$0xff]
        %v1170 = vld [vmem:[%s1153 + $0x107] sm:$0xff]
        %v1171 = vld [vmem:[%s1153 + $0x10f] sm:$0xff]
        %v1172 = vld [vmem:[%s1153 + $0x127] sm:$0xff]
        %v1173 = vld [vmem:[%s1153 + $0x12f] sm:$0xff]
        %v1174 = vld [vmem:[%s1153 + $0x147] sm:$0xff]
        %v1175 = vld [vmem:[%s1153 + $0x14f] sm:$0xff]
        %v1176 = vld [vmem:[%s1153 + $0x167] sm:$0xff]
        %v1177 = vld [vmem:[%s1153 + $0x16f] sm:$0xff]
        %v1178 = vld [vmem:[%s1153 + $0x187] sm:$0xff]
        %v1179 = vld [vmem:[%s1153 + $0x18f] sm:$0xff]
        %v1180 = vld [vmem:[%s1153 + $0x1a7] sm:$0xff]
        %v1181 = vld [vmem:[%s1153 + $0x1af] sm:$0xff]
        %v1182 = vld [vmem:[%s1153 + $0x1c7] sm:$0xff]
        %v1183 = vld [vmem:[%s1153 + $0x1cf] sm:$0xff]
        %v1184 = vld [vmem:[%s1153 + $0x1e7] sm:$0xff]
        %v1185 = vld [vmem:[%s1153 + $0x1ef] sm:$0xff]
        %v1186 = vld [vmem:[%s3 + $0x6] sm:$0x1]
        %v1187 = vlaneseq
        %v1188 = vshrl.u32 %v1187, 7
        %v1189 = vsub.s32 0, %v1188
        %v1190 = vrot.slane %v1186, %v1189
        %v1191 = vmul.f32 %v1154, %v1190
        %v1192 = vmul.f32 %v1155, %v1190
        %v1193 = vmul.f32 %v1156, %v1190
        %v1194 = vmul.f32 %v1157, %v1190
        %v1195 = vmul.f32 %v1158, %v1190
        %v1196 = vmul.f32 %v1159, %v1190
        %v1197 = vmul.f32 %v1160, %v1190
        %v1198 = vmul.f32 %v1161, %v1190
        %v1199 = vmul.f32 %v1162, %v1190
        %v1200 = vmul.f32 %v1163, %v1190
        %v1201 = vmul.f32 %v1164, %v1190
        %v1202 = vmul.f32 %v1165, %v1190
        %v1203 = vmul.f32 %v1166, %v1190
        %v1204 = vmul.f32 %v1167, %v1190
        %v1205 = vmul.f32 %v1168, %v1190
        %v1206 = vmul.f32 %v1169, %v1190
        %v1207 = vmul.f32 %v1170, %v1190
        %v1208 = vmul.f32 %v1171, %v1190
        %v1209 = vmul.f32 %v1172, %v1190
        %v1210 = vmul.f32 %v1173, %v1190
        %v1211 = vmul.f32 %v1174, %v1190
        %v1212 = vmul.f32 %v1175, %v1190
        %v1213 = vmul.f32 %v1176, %v1190
        %v1214 = vmul.f32 %v1177, %v1190
        %v1215 = vmul.f32 %v1178, %v1190
        %v1216 = vmul.f32 %v1179, %v1190
        %v1217 = vmul.f32 %v1180, %v1190
        %v1218 = vmul.f32 %v1181, %v1190
        %v1219 = vmul.f32 %v1182, %v1190
        %v1220 = vmul.f32 %v1183, %v1190
        %v1221 = vmul.f32 %v1184, %v1190
        %v1222 = vmul.f32 %v1185, %v1190
        %v1223 = vadd.f32 %v1121, %v1191
        %v1224 = vadd.f32 %v1122, %v1192
        %v1225 = vadd.f32 %v1123, %v1193
        %v1226 = vadd.f32 %v1124, %v1194
        %v1227 = vadd.f32 %v1125, %v1195
        %v1228 = vadd.f32 %v1126, %v1196
        %v1229 = vadd.f32 %v1127, %v1197
        %v1230 = vadd.f32 %v1128, %v1198
        %v1231 = vadd.f32 %v1129, %v1199
        %v1232 = vadd.f32 %v1130, %v1200
        %v1233 = vadd.f32 %v1131, %v1201
        %v1234 = vadd.f32 %v1132, %v1202
        %v1235 = vadd.f32 %v1133, %v1203
        %v1236 = vadd.f32 %v1134, %v1204
        %v1237 = vadd.f32 %v1135, %v1205
        %v1238 = vadd.f32 %v1136, %v1206
        %v1239 = vadd.f32 %v1137, %v1207
        %v1240 = vadd.f32 %v1138, %v1208
        %v1241 = vadd.f32 %v1139, %v1209
        %v1242 = vadd.f32 %v1140, %v1210
        %v1243 = vadd.f32 %v1141, %v1211
        %v1244 = vadd.f32 %v1142, %v1212
        %v1245 = vadd.f32 %v1143, %v1213
        %v1246 = vadd.f32 %v1144, %v1214
        %v1247 = vadd.f32 %v1145, %v1215
        %v1248 = vadd.f32 %v1146, %v1216
        %v1249 = vadd.f32 %v1147, %v1217
        %v1250 = vadd.f32 %v1148, %v1218
        %v1251 = vadd.f32 %v1149, %v1219
        %v1252 = vadd.f32 %v1150, %v1220
        %v1253 = vadd.f32 %v1151, %v1221
        %v1254 = vadd.f32 %v1152, %v1222
        %v1255 = vld [vmem:[%s1153 + $0x8] sm:$0xff]
        %v1256 = vld [vmem:[%s1153 + $0x10] sm:$0xff]
        %v1257 = vld [vmem:[%s1153 + $0x28] sm:$0xff]
        %v1258 = vld [vmem:[%s1153 + $0x30] sm:$0xff]
        %v1259 = vld [vmem:[%s1153 + $0x48] sm:$0xff]
        %v1260 = vld [vmem:[%s1153 + $0x50] sm:$0xff]
        %v1261 = vld [vmem:[%s1153 + $0x68] sm:$0xff]
        %v1262 = vld [vmem:[%s1153 + $0x70] sm:$0xff]
        %v1263 = vld [vmem:[%s1153 + $0x88] sm:$0xff]
        %v1264 = vld [vmem:[%s1153 + $0x90] sm:$0xff]
        %v1265 = vld [vmem:[%s1153 + $0xa8] sm:$0xff]
        %v1266 = vld [vmem:[%s1153 + $0xb0] sm:$0xff]
        %v1267 = vld [vmem:[%s1153 + $0xc8] sm:$0xff]
        %v1268 = vld [vmem:[%s1153 + $0xd0] sm:$0xff]
        %v1269 = vld [vmem:[%s1153 + $0xe8] sm:$0xff]
        %v1270 = vld [vmem:[%s1153 + $0xf0] sm:$0xff]
        %v1271 = vld [vmem:[%s1153 + $0x108] sm:$0xff]
        %v1272 = vld [vmem:[%s1153 + $0x110] sm:$0xff]
        %v1273 = vld [vmem:[%s1153 + $0x128] sm:$0xff]
        %v1274 = vld [vmem:[%s1153 + $0x130] sm:$0xff]
        %v1275 = vld [vmem:[%s1153 + $0x148] sm:$0xff]
        %v1276 = vld [vmem:[%s1153 + $0x150] sm:$0xff]
        %v1277 = vld [vmem:[%s1153 + $0x168] sm:$0xff]
        %v1278 = vld [vmem:[%s1153 + $0x170] sm:$0xff]
        %v1279 = vld [vmem:[%s1153 + $0x188] sm:$0xff]
        %v1280 = vld [vmem:[%s1153 + $0x190] sm:$0xff]
        %v1281 = vld [vmem:[%s1153 + $0x1a8] sm:$0xff]
        %v1282 = vld [vmem:[%s1153 + $0x1b0] sm:$0xff]
        %v1283 = vld [vmem:[%s1153 + $0x1c8] sm:$0xff]
        %v1284 = vld [vmem:[%s1153 + $0x1d0] sm:$0xff]
        %v1285 = vld [vmem:[%s1153 + $0x1e8] sm:$0xff]
        %v1286 = vld [vmem:[%s1153 + $0x1f0] sm:$0xff]
        %v1287 = vld [vmem:[%s3 + $0x7] sm:$0x1]
        %v1288 = vlaneseq
        %v1289 = vshrl.u32 %v1288, 7
        %v1290 = vsub.s32 0, %v1289
        %v1291 = vrot.slane %v1287, %v1290
        %v1292 = vmul.f32 %v1255, %v1291
        %v1293 = vmul.f32 %v1256, %v1291
        %v1294 = vmul.f32 %v1257, %v1291
        %v1295 = vmul.f32 %v1258, %v1291
        %v1296 = vmul.f32 %v1259, %v1291
        %v1297 = vmul.f32 %v1260, %v1291
        %v1298 = vmul.f32 %v1261, %v1291
        %v1299 = vmul.f32 %v1262, %v1291
        %v1300 = vmul.f32 %v1263, %v1291
        %v1301 = vmul.f32 %v1264, %v1291
        %v1302 = vmul.f32 %v1265, %v1291
        %v1303 = vmul.f32 %v1266, %v1291
        %v1304 = vmul.f32 %v1267, %v1291
        %v1305 = vmul.f32 %v1268, %v1291
        %v1306 = vmul.f32 %v1269, %v1291
        %v1307 = vmul.f32 %v1270, %v1291
        %v1308 = vmul.f32 %v1271, %v1291
        %v1309 = vmul.f32 %v1272, %v1291
        %v1310 = vmul.f32 %v1273, %v1291
        %v1311 = vmul.f32 %v1274, %v1291
        %v1312 = vmul.f32 %v1275, %v1291
        %v1313 = vmul.f32 %v1276, %v1291
        %v1314 = vmul.f32 %v1277, %v1291
        %v1315 = vmul.f32 %v1278, %v1291
        %v1316 = vmul.f32 %v1279, %v1291
        %v1317 = vmul.f32 %v1280, %v1291
        %v1318 = vmul.f32 %v1281, %v1291
        %v1319 = vmul.f32 %v1282, %v1291
        %v1320 = vmul.f32 %v1283, %v1291
        %v1321 = vmul.f32 %v1284, %v1291
        %v1322 = vmul.f32 %v1285, %v1291
        %v1323 = vmul.f32 %v1286, %v1291
        %v1324 = vadd.f32 %v1223, %v1292
        %v1325 = vadd.f32 %v1224, %v1293
        %v1326 = vadd.f32 %v1225, %v1294
        %v1327 = vadd.f32 %v1226, %v1295
        %v1328 = vadd.f32 %v1227, %v1296
        %v1329 = vadd.f32 %v1228, %v1297
        %v1330 = vadd.f32 %v1229, %v1298
        %v1331 = vadd.f32 %v1230, %v1299
        %v1332 = vadd.f32 %v1231, %v1300
        %v1333 = vadd.f32 %v1232, %v1301
        %v1334 = vadd.f32 %v1233, %v1302
        %v1335 = vadd.f32 %v1234, %v1303
        %v1336 = vadd.f32 %v1235, %v1304
        %v1337 = vadd.f32 %v1236, %v1305
        %v1338 = vadd.f32 %v1237, %v1306
        %v1339 = vadd.f32 %v1238, %v1307
        %v1340 = vadd.f32 %v1239, %v1308
        %v1341 = vadd.f32 %v1240, %v1309
        %v1342 = vadd.f32 %v1241, %v1310
        %v1343 = vadd.f32 %v1242, %v1311
        %v1344 = vadd.f32 %v1243, %v1312
        %v1345 = vadd.f32 %v1244, %v1313
        %v1346 = vadd.f32 %v1245, %v1314
        %v1347 = vadd.f32 %v1246, %v1315
        %v1348 = vadd.f32 %v1247, %v1316
        %v1349 = vadd.f32 %v1248, %v1317
        %v1350 = vadd.f32 %v1249, %v1318
        %v1351 = vadd.f32 %v1250, %v1319
        %v1352 = vadd.f32 %v1251, %v1320
        %v1353 = vadd.f32 %v1252, %v1321
        %v1354 = vadd.f32 %v1253, %v1322
        %v1355 = vadd.f32 %v1254, %v1323
        %v1356 = vld [vmem:[%s1153 + $0x9] sm:$0xff]
        %v1357 = vld [vmem:[%s1153 + $0x11] sm:$0xff]
        %v1358 = vld [vmem:[%s1153 + $0x29] sm:$0xff]
        %v1359 = vld [vmem:[%s1153 + $0x31] sm:$0xff]
        %v1360 = vld [vmem:[%s1153 + $0x49] sm:$0xff]
        %v1361 = vld [vmem:[%s1153 + $0x51] sm:$0xff]
        %v1362 = vld [vmem:[%s1153 + $0x69] sm:$0xff]
        %v1363 = vld [vmem:[%s1153 + $0x71] sm:$0xff]
        %v1364 = vld [vmem:[%s1153 + $0x89] sm:$0xff]
        %v1365 = vld [vmem:[%s1153 + $0x91] sm:$0xff]
        %v1366 = vld [vmem:[%s1153 + $0xa9] sm:$0xff]
        %v1367 = vld [vmem:[%s1153 + $0xb1] sm:$0xff]
        %v1368 = vld [vmem:[%s1153 + $0xc9] sm:$0xff]
        %v1369 = vld [vmem:[%s1153 + $0xd1] sm:$0xff]
        %v1370 = vld [vmem:[%s1153 + $0xe9] sm:$0xff]
        %v1371 = vld [vmem:[%s1153 + $0xf1] sm:$0xff]
        %v1372 = vld [vmem:[%s1153 + $0x109] sm:$0xff]
        %v1373 = vld [vmem:[%s1153 + $0x111] sm:$0xff]
        %v1374 = vld [vmem:[%s1153 + $0x129] sm:$0xff]
        %v1375 = vld [vmem:[%s1153 + $0x131] sm:$0xff]
        %v1376 = vld [vmem:[%s1153 + $0x149] sm:$0xff]
        %v1377 = vld [vmem:[%s1153 + $0x151] sm:$0xff]
        %v1378 = vld [vmem:[%s1153 + $0x169] sm:$0xff]
        %v1379 = vld [vmem:[%s1153 + $0x171] sm:$0xff]
        %v1380 = vld [vmem:[%s1153 + $0x189] sm:$0xff]
        %v1381 = vld [vmem:[%s1153 + $0x191] sm:$0xff]
        %v1382 = vld [vmem:[%s1153 + $0x1a9] sm:$0xff]
        %v1383 = vld [vmem:[%s1153 + $0x1b1] sm:$0xff]
        %v1384 = vld [vmem:[%s1153 + $0x1c9] sm:$0xff]
        %v1385 = vld [vmem:[%s1153 + $0x1d1] sm:$0xff]
        %v1386 = vld [vmem:[%s1153 + $0x1e9] sm:$0xff]
        %v1387 = vld [vmem:[%s1153 + $0x1f1] sm:$0xff]
        %v1388 = vld [vmem:[%s3 + $0x8] sm:$0x1]
        %v1389 = vlaneseq
        %v1390 = vshrl.u32 %v1389, 7
        %v1391 = vsub.s32 0, %v1390
        %v1392 = vrot.slane %v1388, %v1391
        %v1393 = vmul.f32 %v1356, %v1392
        %v1394 = vmul.f32 %v1357, %v1392
        %v1395 = vmul.f32 %v1358, %v1392
        %v1396 = vmul.f32 %v1359, %v1392
        %v1397 = vmul.f32 %v1360, %v1392
        %v1398 = vmul.f32 %v1361, %v1392
        %v1399 = vmul.f32 %v1362, %v1392
        %v1400 = vmul.f32 %v1363, %v1392
        %v1401 = vmul.f32 %v1364, %v1392
        %v1402 = vmul.f32 %v1365, %v1392
        %v1403 = vmul.f32 %v1366, %v1392
        %v1404 = vmul.f32 %v1367, %v1392
        %v1405 = vmul.f32 %v1368, %v1392
        %v1406 = vmul.f32 %v1369, %v1392
        %v1407 = vmul.f32 %v1370, %v1392
        %v1408 = vmul.f32 %v1371, %v1392
        %v1409 = vmul.f32 %v1372, %v1392
        %v1410 = vmul.f32 %v1373, %v1392
        %v1411 = vmul.f32 %v1374, %v1392
        %v1412 = vmul.f32 %v1375, %v1392
        %v1413 = vmul.f32 %v1376, %v1392
        %v1414 = vmul.f32 %v1377, %v1392
        %v1415 = vmul.f32 %v1378, %v1392
        %v1416 = vmul.f32 %v1379, %v1392
        %v1417 = vmul.f32 %v1380, %v1392
        %v1418 = vmul.f32 %v1381, %v1392
        %v1419 = vmul.f32 %v1382, %v1392
        %v1420 = vmul.f32 %v1383, %v1392
        %v1421 = vmul.f32 %v1384, %v1392
        %v1422 = vmul.f32 %v1385, %v1392
        %v1423 = vmul.f32 %v1386, %v1392
        %v1424 = vmul.f32 %v1387, %v1392
        %v1425 = vadd.f32 %v1324, %v1393
        %v1426 = vadd.f32 %v1325, %v1394
        %v1427 = vadd.f32 %v1326, %v1395
        %v1428 = vadd.f32 %v1327, %v1396
        %v1429 = vadd.f32 %v1328, %v1397
        %v1430 = vadd.f32 %v1329, %v1398
        %v1431 = vadd.f32 %v1330, %v1399
        %v1432 = vadd.f32 %v1331, %v1400
        %v1433 = vadd.f32 %v1332, %v1401
        %v1434 = vadd.f32 %v1333, %v1402
        %v1435 = vadd.f32 %v1334, %v1403
        %v1436 = vadd.f32 %v1335, %v1404
        %v1437 = vadd.f32 %v1336, %v1405
        %v1438 = vadd.f32 %v1337, %v1406
        %v1439 = vadd.f32 %v1338, %v1407
        %v1440 = vadd.f32 %v1339, %v1408
        %v1441 = vadd.f32 %v1340, %v1409
        %v1442 = vadd.f32 %v1341, %v1410
        %v1443 = vadd.f32 %v1342, %v1411
        %v1444 = vadd.f32 %v1343, %v1412
        %v1445 = vadd.f32 %v1344, %v1413
        %v1446 = vadd.f32 %v1345, %v1414
        %v1447 = vadd.f32 %v1346, %v1415
        %v1448 = vadd.f32 %v1347, %v1416
        %v1449 = vadd.f32 %v1348, %v1417
        %v1450 = vadd.f32 %v1349, %v1418
        %v1451 = vadd.f32 %v1350, %v1419
        %v1452 = vadd.f32 %v1351, %v1420
        %v1453 = vadd.f32 %v1352, %v1421
        %v1454 = vadd.f32 %v1353, %v1422
        %v1455 = vadd.f32 %v1354, %v1423
        %v1456 = vadd.f32 %v1355, %v1424
        %v1457 = vpack.c.bf16 %v1426, %v1425
        %v1458 = vpack.c.bf16 %v1428, %v1427
        %v1459 = vpack.c.bf16 %v1430, %v1429
        %v1460 = vpack.c.bf16 %v1432, %v1431
        %v1461 = vpack.c.bf16 %v1434, %v1433
        %v1462 = vpack.c.bf16 %v1436, %v1435
        %v1463 = vpack.c.bf16 %v1438, %v1437
        %v1464 = vpack.c.bf16 %v1440, %v1439
        %v1465 = vpack.c.bf16 %v1442, %v1441
        %v1466 = vpack.c.bf16 %v1444, %v1443
        %v1467 = vpack.c.bf16 %v1446, %v1445
        %v1468 = vpack.c.bf16 %v1448, %v1447
        %v1469 = vpack.c.bf16 %v1450, %v1449
        %v1470 = vpack.c.bf16 %v1452, %v1451
        %v1471 = vpack.c.bf16 %v1454, %v1453
        %v1472 = vpack.c.bf16 %v1456, %v1455
        %v1473 = vld [vmem:[%s4] sm:$0x3]
        %v1474 = vld [vmem:[%s5] sm:$0x1]
        %v1476 = vlaneseq
        %v1477 = vshrl.u32 %v1476, 7
        %v1478 = vsub.s32 0, %v1477
        %v1479 = vrot.slane %v1474, %v1478
        %v1482 = vsel %vm359, %v1457, 0
        %v1485 = vsel %vm359, %v1458, 0
        %v1488 = vsel %vm359, %v1459, 0
        %v1491 = vsel %vm359, %v1460, 0
        %v1494 = vsel %vm359, %v1461, 0
        %v1497 = vsel %vm359, %v1462, 0
        %v1500 = vsel %vm359, %v1463, 0
        %v1503 = vsel %vm359, %v1464, 0
        %v1506 = vsel %vm359, %v1465, 0
        %v1509 = vsel %vm359, %v1466, 0
        %v1512 = vsel %vm359, %v1467, 0
        %v1515 = vsel %vm359, %v1468, 0
        %v1518 = vsel %vm359, %v1469, 0
        %v1521 = vsel %vm359, %v1470, 0
        %v1524 = vsel %vm359, %v1471, 0
        %v1527 = vsel %vm359, %v1472, 0
        %v1530 = vsel %vm372, %v1473, 0
        %1532 = vmatprep.subr.bf16.mxu0 0
        %1533 = vmatpush1.bf16.msra.mxu0 %v1530
        %1534 = vmatprep.subr.bf16.mxu0 0
        %1535 = vmatpush1.bf16.msra.mxu0 0
        %1536 = vmatprep.subr.bf16.mxu0 0
        %1537 = vmatpush1.bf16.msra.mxu0 0
        %1538 = vmatprep.subr.bf16.mxu0 0
        %1539 = vmatpush1.bf16.msra.mxu0 0
        %1540 = vmatprep.subr.bf16.mxu0 0
        %1541 = vmatpush1.bf16.msra.mxu0 0
        %1542 = vmatprep.subr.bf16.mxu0 0
        %1543 = vmatpush1.bf16.msra.mxu0 0
        %1544 = vmatprep.subr.bf16.mxu0 0
        %1545 = vmatpush1.bf16.msra.mxu0 0
        %1546 = vmatprep.subr.bf16.mxu0 0
        %1547 = vmatpush1.bf16.msra.mxu0 0
        %1548 = vmatprep.subr.bf16.mxu0 0
        %1549 = vmatpush1.bf16.msra.mxu0 0
        %1550 = vmatprep.subr.bf16.mxu0 0
        %1551 = vmatpush1.bf16.msra.mxu0 0
        %1552 = vmatprep.subr.bf16.mxu0 0
        %1553 = vmatpush1.bf16.msra.mxu0 0
        %1554 = vmatprep.subr.bf16.mxu0 0
        %1555 = vmatpush1.bf16.msra.mxu0 0
        %1556 = vmatprep.subr.bf16.mxu0 0
        %1557 = vmatpush1.bf16.msra.mxu0 0
        %1558 = vmatprep.subr.bf16.mxu0 0
        %1559 = vmatpush1.bf16.msra.mxu0 0
        %1560 = vmatprep.subr.bf16.mxu0 0
        %1561 = vmatpush1.bf16.msra.mxu0 0
        %1562 = vmatprep.subr.bf16.mxu0 0
        %1563 = vmatpush1.bf16.msra.mxu0 0
        %1564 = vmatprep.mubr.bf16.mxu0 0
        %1565 = vmatmul.mubr.bf16.gmra.mrb[0].mxu0 %v1482
        %v1566 = vpop.f32.mrb[0].mxu0
        %v1567 = vadd.f32 %v1479, %v1566
        %v1568 = vpop.f32.mrb[0].mxu0
        %v1569 = vpop.f32.mrb[0].mxu0
        %v1570 = vadd.f32 %v1479, %v1569
        %v1571 = vpop.f32.mrb[0].mxu0
        %1572 = vmatprep.mubr.bf16.mxu0 0
        %1573 = vmatmul.mubr.bf16.gmra.mrb[0].mxu0 %v1485
        %v1574 = vpop.f32.mrb[0].mxu0
        %v1575 = vadd.f32 %v1479, %v1574
        %v1576 = vpop.f32.mrb[0].mxu0
        %v1577 = vpop.f32.mrb[0].mxu0
        %v1578 = vadd.f32 %v1479, %v1577
        %v1579 = vpop.f32.mrb[0].mxu0
        %1580 = vmatprep.mubr.bf16.mxu0 0
        %1581 = vmatmul.mubr.bf16.gmra.mrb[0].mxu0 %v1488
        %v1582 = vpop.f32.mrb[0].mxu0
        %v1583 = vadd.f32 %v1479, %v1582
        %v1584 = vpop.f32.mrb[0].mxu0
        %v1585 = vpop.f32.mrb[0].mxu0
        %v1586 = vadd.f32 %v1479, %v1585
        %v1587 = vpop.f32.mrb[0].mxu0
        %1588 = vmatprep.mubr.bf16.mxu0 0
        %1589 = vmatmul.mubr.bf16.gmra.mrb[0].mxu0 %v1491
        %v1590 = vpop.f32.mrb[0].mxu0
        %v1591 = vadd.f32 %v1479, %v1590
        %v1592 = vpop.f32.mrb[0].mxu0
        %v1593 = vpop.f32.mrb[0].mxu0
        %v1594 = vadd.f32 %v1479, %v1593
        %v1595 = vpop.f32.mrb[0].mxu0
        %1596 = vmatprep.mubr.bf16.mxu0 0
        %1597 = vmatmul.mubr.bf16.gmra.mrb[0].mxu0 %v1494
        %v1598 = vpop.f32.mrb[0].mxu0
        %v1599 = vadd.f32 %v1479, %v1598
        %v1600 = vpop.f32.mrb[0].mxu0
        %v1601 = vpop.f32.mrb[0].mxu0
        %v1602 = vadd.f32 %v1479, %v1601
        %v1603 = vpop.f32.mrb[0].mxu0
        %1604 = vmatprep.mubr.bf16.mxu0 0
        %1605 = vmatmul.mubr.bf16.gmra.mrb[0].mxu0 %v1497
        %v1606 = vpop.f32.mrb[0].mxu0
        %v1607 = vadd.f32 %v1479, %v1606
        %v1608 = vpop.f32.mrb[0].mxu0
        %v1609 = vpop.f32.mrb[0].mxu0
        %v1610 = vadd.f32 %v1479, %v1609
        %v1611 = vpop.f32.mrb[0].mxu0
        %1612 = vmatprep.mubr.bf16.mxu0 0
        %1613 = vmatmul.mubr.bf16.gmra.mrb[0].mxu0 %v1500
        %v1614 = vpop.f32.mrb[0].mxu0
        %v1615 = vadd.f32 %v1479, %v1614
        %v1616 = vpop.f32.mrb[0].mxu0
        %v1617 = vpop.f32.mrb[0].mxu0
        %v1618 = vadd.f32 %v1479, %v1617
        %v1619 = vpop.f32.mrb[0].mxu0
        %1620 = vmatprep.mubr.bf16.mxu0 0
        %1621 = vmatmul.mubr.bf16.gmra.mrb[0].mxu0 %v1503
        %v1622 = vpop.f32.mrb[0].mxu0
        %v1623 = vadd.f32 %v1479, %v1622
        %v1624 = vpop.f32.mrb[0].mxu0
        %v1625 = vpop.f32.mrb[0].mxu0
        %v1626 = vadd.f32 %v1479, %v1625
        %v1627 = vpop.f32.mrb[0].mxu0
        %1628 = vmatprep.mubr.bf16.mxu0 0
        %1629 = vmatmul.mubr.bf16.gmra.mrb[0].mxu0 %v1506
        %v1630 = vpop.f32.mrb[0].mxu0
        %v1631 = vadd.f32 %v1479, %v1630
        %v1632 = vpop.f32.mrb[0].mxu0
        %v1633 = vpop.f32.mrb[0].mxu0
        %v1634 = vadd.f32 %v1479, %v1633
        %v1635 = vpop.f32.mrb[0].mxu0
        %1636 = vmatprep.mubr.bf16.mxu0 0
        %1637 = vmatmul.mubr.bf16.gmra.mrb[0].mxu0 %v1509
        %v1638 = vpop.f32.mrb[0].mxu0
        %v1639 = vadd.f32 %v1479, %v1638
        %v1640 = vpop.f32.mrb[0].mxu0
        %v1641 = vpop.f32.mrb[0].mxu0
        %v1642 = vadd.f32 %v1479, %v1641
        %v1643 = vpop.f32.mrb[0].mxu0
        %1644 = vmatprep.mubr.bf16.mxu0 0
        %1645 = vmatmul.mubr.bf16.gmra.mrb[0].mxu0 %v1512
        %v1646 = vpop.f32.mrb[0].mxu0
        %v1647 = vadd.f32 %v1479, %v1646
        %v1648 = vpop.f32.mrb[0].mxu0
        %v1649 = vpop.f32.mrb[0].mxu0
        %v1650 = vadd.f32 %v1479, %v1649
        %v1651 = vpop.f32.mrb[0].mxu0
        %1652 = vmatprep.mubr.bf16.mxu0 0
        %1653 = vmatmul.mubr.bf16.gmra.mrb[0].mxu0 %v1515
        %v1654 = vpop.f32.mrb[0].mxu0
        %v1655 = vadd.f32 %v1479, %v1654
        %v1656 = vpop.f32.mrb[0].mxu0
        %v1657 = vpop.f32.mrb[0].mxu0
        %v1658 = vadd.f32 %v1479, %v1657
        %v1659 = vpop.f32.mrb[0].mxu0
        %1660 = vmatprep.mubr.bf16.mxu0 0
        %1661 = vmatmul.mubr.bf16.gmra.mrb[0].mxu0 %v1518
        %v1662 = vpop.f32.mrb[0].mxu0
        %v1663 = vadd.f32 %v1479, %v1662
        %v1664 = vpop.f32.mrb[0].mxu0
        %v1665 = vpop.f32.mrb[0].mxu0
        %v1666 = vadd.f32 %v1479, %v1665
        %v1667 = vpop.f32.mrb[0].mxu0
        %1668 = vmatprep.mubr.bf16.mxu0 0
        %1669 = vmatmul.mubr.bf16.gmra.mrb[0].mxu0 %v1521
        %v1670 = vpop.f32.mrb[0].mxu0
        %v1671 = vadd.f32 %v1479, %v1670
        %v1672 = vpop.f32.mrb[0].mxu0
        %v1673 = vpop.f32.mrb[0].mxu0
        %v1674 = vadd.f32 %v1479, %v1673
        %v1675 = vpop.f32.mrb[0].mxu0
        %1676 = vmatprep.mubr.bf16.mxu0 0
        %1677 = vmatmul.mubr.bf16.gmra.mrb[0].mxu0 %v1524
        %v1678 = vpop.f32.mrb[0].mxu0
        %v1679 = vadd.f32 %v1479, %v1678
        %v1680 = vpop.f32.mrb[0].mxu0
        %v1681 = vpop.f32.mrb[0].mxu0
        %v1682 = vadd.f32 %v1479, %v1681
        %v1683 = vpop.f32.mrb[0].mxu0
        %1684 = vmatprep.mubr.bf16.mxu0 0
        %1685 = vmatmul.mubr.bf16.gmra.mrb[0].mxu0 %v1527
        %v1686 = vpop.f32.mrb[0].mxu0
        %v1687 = vadd.f32 %v1479, %v1686
        %v1688 = vpop.f32.mrb[0].mxu0
        %v1689 = vpop.f32.mrb[0].mxu0
        %v1690 = vadd.f32 %v1479, %v1689
        %v1691 = vpop.f32.mrb[0].mxu0
        %1692 = vdwg.mxu0
        %v1693 = vmax.f32 %v1567, 0.0
        %v1694 = vmax.f32 %v1570, 0.0
        %v1695 = vmax.f32 %v1575, 0.0
        %v1696 = vmax.f32 %v1578, 0.0
        %v1697 = vmax.f32 %v1583, 0.0
        %v1698 = vmax.f32 %v1586, 0.0
        %v1699 = vmax.f32 %v1591, 0.0
        %v1700 = vmax.f32 %v1594, 0.0
        %v1701 = vmax.f32 %v1599, 0.0
        %v1702 = vmax.f32 %v1602, 0.0
        %v1703 = vmax.f32 %v1607, 0.0
        %v1704 = vmax.f32 %v1610, 0.0
        %v1705 = vmax.f32 %v1615, 0.0
        %v1706 = vmax.f32 %v1618, 0.0
        %v1707 = vmax.f32 %v1623, 0.0
        %v1708 = vmax.f32 %v1626, 0.0
        %v1709 = vmax.f32 %v1631, 0.0
        %v1710 = vmax.f32 %v1634, 0.0
        %v1711 = vmax.f32 %v1639, 0.0
        %v1712 = vmax.f32 %v1642, 0.0
        %v1713 = vmax.f32 %v1647, 0.0
        %v1714 = vmax.f32 %v1650, 0.0
        %v1715 = vmax.f32 %v1655, 0.0
        %v1716 = vmax.f32 %v1658, 0.0
        %v1717 = vmax.f32 %v1663, 0.0
        %v1718 = vmax.f32 %v1666, 0.0
        %v1719 = vmax.f32 %v1671, 0.0
        %v1720 = vmax.f32 %v1674, 0.0
        %v1721 = vmax.f32 %v1679, 0.0
        %v1722 = vmax.f32 %v1682, 0.0
        %v1723 = vmax.f32 %v1687, 0.0
        %v1724 = vmax.f32 %v1690, 0.0
        %vm1725 = vcmask 64512
        %1726 = vst.msk [vmem:[#allocation3] sm:$0xff] %vm1725, 0.0
        %1727 = vst.msk [vmem:[#allocation3 + $0x8] sm:$0xff] %vm1725, 0.0
        %1728 = vst.msk [vmem:[#allocation3 + $0x10] sm:$0xff] %vm1725, 0.0
        %vm1729 = vcmask 58368
        %1730 = vst.msk [vmem:[#allocation3 + $0x18] sm:$0x3] %vm1729, 0.0
        %1731 = vst.msk [vmem:[#allocation3 + $0x20] sm:$0xff] %vm1725, 0.0
        %1732 = vst.msk [vmem:[#allocation3 + $0x28] sm:$0xff] %vm1725, 0.0
        %1733 = vst.msk [vmem:[#allocation3 + $0x30] sm:$0xff] %vm1725, 0.0
        %1734 = vst.msk [vmem:[#allocation3 + $0x38] sm:$0x3] %vm1729, 0.0
        %1735 = vst.msk [vmem:[#allocation3 + $0x40] sm:$0xff] %vm1725, 0.0
        %1736 = vst.msk [vmem:[#allocation3 + $0x48] sm:$0xff] %vm1725, 0.0
        %1737 = vst.msk [vmem:[#allocation3 + $0x50] sm:$0xff] %vm1725, 0.0
        %1738 = vst.msk [vmem:[#allocation3 + $0x58] sm:$0x3] %vm1729, 0.0
        %1739 = vst.msk [vmem:[#allocation3 + $0x60] sm:$0xff] %vm1725, 0.0
        %1740 = vst.msk [vmem:[#allocation3 + $0x68] sm:$0xff] %vm1725, 0.0
        %1741 = vst.msk [vmem:[#allocation3 + $0x70] sm:$0xff] %vm1725, 0.0
        %1742 = vst.msk [vmem:[#allocation3 + $0x78] sm:$0x3] %vm1729, 0.0
        %1743 = vst.msk [vmem:[#allocation3 + $0x80] sm:$0xff] %vm1725, 0.0
        %1744 = vst.msk [vmem:[#allocation3 + $0x88] sm:$0xff] %vm1725, 0.0
        %1745 = vst.msk [vmem:[#allocation3 + $0x90] sm:$0xff] %vm1725, 0.0
        %1746 = vst.msk [vmem:[#allocation3 + $0x98] sm:$0x3] %vm1729, 0.0
        %1747 = vst.msk [vmem:[#allocation3 + $0xa0] sm:$0xff] %vm1725, 0.0
        %1748 = vst.msk [vmem:[#allocation3 + $0xa8] sm:$0xff] %vm1725, 0.0
        %1749 = vst.msk [vmem:[#allocation3 + $0xb0] sm:$0xff] %vm1725, 0.0
        %1750 = vst.msk [vmem:[#allocation3 + $0xb8] sm:$0x3] %vm1729, 0.0
        %1751 = vst.msk [vmem:[#allocation3 + $0xc0] sm:$0xff] %vm1725, 0.0
        %1752 = vst.msk [vmem:[#allocation3 + $0xc8] sm:$0xff] %vm1725, 0.0
        %1753 = vst.msk [vmem:[#allocation3 + $0xd0] sm:$0xff] %vm1725, 0.0
        %1754 = vst.msk [vmem:[#allocation3 + $0xd8] sm:$0x3] %vm1729, 0.0
        %1755 = vst.msk [vmem:[#allocation3 + $0xe0] sm:$0xff] %vm1725, 0.0
        %1756 = vst.msk [vmem:[#allocation3 + $0xe8] sm:$0xff] %vm1725, 0.0
        %1757 = vst.msk [vmem:[#allocation3 + $0xf0] sm:$0xff] %vm1725, 0.0
        %1758 = vst.msk [vmem:[#allocation3 + $0xf8] sm:$0x3] %vm1729, 0.0
        %1759 = vst.msk [vmem:[#allocation3 + $0x100] sm:$0xff] %vm1725, 0.0
        %1760 = vst.msk [vmem:[#allocation3 + $0x108] sm:$0xff] %vm1725, 0.0
        %1761 = vst.msk [vmem:[#allocation3 + $0x110] sm:$0xff] %vm1725, 0.0
        %1762 = vst.msk [vmem:[#allocation3 + $0x118] sm:$0x3] %vm1729, 0.0
        %1763 = vst.msk [vmem:[#allocation3 + $0x120] sm:$0xff] %vm1725, 0.0
        %1764 = vst.msk [vmem:[#allocation3 + $0x128] sm:$0xff] %vm1725, 0.0
        %1765 = vst.msk [vmem:[#allocation3 + $0x130] sm:$0xff] %vm1725, 0.0
        %1766 = vst.msk [vmem:[#allocation3 + $0x138] sm:$0x3] %vm1729, 0.0
        %1767 = vst.msk [vmem:[#allocation3 + $0x140] sm:$0xff] %vm1725, 0.0
        %1768 = vst.msk [vmem:[#allocation3 + $0x148] sm:$0xff] %vm1725, 0.0
        %1769 = vst.msk [vmem:[#allocation3 + $0x150] sm:$0xff] %vm1725, 0.0
        %1770 = vst.msk [vmem:[#allocation3 + $0x158] sm:$0x3] %vm1729, 0.0
        %1771 = vst.msk [vmem:[#allocation3 + $0x160] sm:$0xff] %vm1725, 0.0
        %1772 = vst.msk [vmem:[#allocation3 + $0x168] sm:$0xff] %vm1725, 0.0
        %1773 = vst.msk [vmem:[#allocation3 + $0x170] sm:$0xff] %vm1725, 0.0
        %1774 = vst.msk [vmem:[#allocation3 + $0x178] sm:$0x3] %vm1729, 0.0
        %1775 = vst.msk [vmem:[#allocation3 + $0x180] sm:$0xff] %vm1725, 0.0
        %1776 = vst.msk [vmem:[#allocation3 + $0x188] sm:$0xff] %vm1725, 0.0
        %1777 = vst.msk [vmem:[#allocation3 + $0x190] sm:$0xff] %vm1725, 0.0
        %1778 = vst.msk [vmem:[#allocation3 + $0x198] sm:$0x3] %vm1729, 0.0
        %1779 = vst.msk [vmem:[#allocation3 + $0x1a0] sm:$0xff] %vm1725, 0.0
        %1780 = vst.msk [vmem:[#allocation3 + $0x1a8] sm:$0xff] %vm1725, 0.0
        %1781 = vst.msk [vmem:[#allocation3 + $0x1b0] sm:$0xff] %vm1725, 0.0
        %1782 = vst.msk [vmem:[#allocation3 + $0x1b8] sm:$0x3] %vm1729, 0.0
        %1783 = vst.msk [vmem:[#allocation3 + $0x1c0] sm:$0xff] %vm1725, 0.0
        %1784 = vst.msk [vmem:[#allocation3 + $0x1c8] sm:$0xff] %vm1725, 0.0
        %1785 = vst.msk [vmem:[#allocation3 + $0x1d0] sm:$0xff] %vm1725, 0.0
        %1786 = vst.msk [vmem:[#allocation3 + $0x1d8] sm:$0x3] %vm1729, 0.0
        %1787 = vst.msk [vmem:[#allocation3 + $0x1e0] sm:$0xff] %vm1725, 0.0
        %1788 = vst.msk [vmem:[#allocation3 + $0x1e8] sm:$0xff] %vm1725, 0.0
        %1789 = vst.msk [vmem:[#allocation3 + $0x1f0] sm:$0xff] %vm1725, 0.0
        %1790 = vst.msk [vmem:[#allocation3 + $0x1f8] sm:$0x3] %vm1729, 0.0
        %1791 = vst.msk [vmem:[#allocation3 + $0x200] sm:$0xff] %vm1725, 0.0
        %1792 = vst.msk [vmem:[#allocation3 + $0x208] sm:$0xff] %vm1725, 0.0
        %1793 = vst.msk [vmem:[#allocation3 + $0x210] sm:$0xff] %vm1725, 0.0
        %1794 = vst.msk [vmem:[#allocation3 + $0x218] sm:$0x3] %vm1729, 0.0
        %1795 = vst.msk [vmem:[#allocation3 + $0x220] sm:$0xff] %vm1725, 0.0
        %1796 = vst.msk [vmem:[#allocation3 + $0x228] sm:$0xff] %vm1725, 0.0
        %1797 = vst.msk [vmem:[#allocation3 + $0x230] sm:$0xff] %vm1725, 0.0
        %1798 = vst.msk [vmem:[#allocation3 + $0x238] sm:$0x3] %vm1729, 0.0
        %s1799 = scalar_lea.vmem [#allocation3], 32
        %1800 = vst.msk [vmem:[%s1799 + $0x8] sm:$0xff] %vm1725, %v1693
        %1801 = vst.msk [vmem:[%s1799 + $0x10] sm:$0xff] %vm1725, %v1694
        %1802 = vst.msk [vmem:[%s1799 + $0x28] sm:$0xff] %vm1725, %v1695
        %1803 = vst.msk [vmem:[%s1799 + $0x30] sm:$0xff] %vm1725, %v1696
        %1804 = vst.msk [vmem:[%s1799 + $0x48] sm:$0xff] %vm1725, %v1697
        %1805 = vst.msk [vmem:[%s1799 + $0x50] sm:$0xff] %vm1725, %v1698
        %1806 = vst.msk [vmem:[%s1799 + $0x68] sm:$0xff] %vm1725, %v1699
        %1807 = vst.msk [vmem:[%s1799 + $0x70] sm:$0xff] %vm1725, %v1700
        %1808 = vst.msk [vmem:[%s1799 + $0x88] sm:$0xff] %vm1725, %v1701
        %1809 = vst.msk [vmem:[%s1799 + $0x90] sm:$0xff] %vm1725, %v1702
        %1810 = vst.msk [vmem:[%s1799 + $0xa8] sm:$0xff] %vm1725, %v1703
        %1811 = vst.msk [vmem:[%s1799 + $0xb0] sm:$0xff] %vm1725, %v1704
        %1812 = vst.msk [vmem:[%s1799 + $0xc8] sm:$0xff] %vm1725, %v1705
        %1813 = vst.msk [vmem:[%s1799 + $0xd0] sm:$0xff] %vm1725, %v1706
        %1814 = vst.msk [vmem:[%s1799 + $0xe8] sm:$0xff] %vm1725, %v1707
        %1815 = vst.msk [vmem:[%s1799 + $0xf0] sm:$0xff] %vm1725, %v1708
        %1816 = vst.msk [vmem:[%s1799 + $0x108] sm:$0xff] %vm1725, %v1709
        %1817 = vst.msk [vmem:[%s1799 + $0x110] sm:$0xff] %vm1725, %v1710
        %1818 = vst.msk [vmem:[%s1799 + $0x128] sm:$0xff] %vm1725, %v1711
        %1819 = vst.msk [vmem:[%s1799 + $0x130] sm:$0xff] %vm1725, %v1712
        %1820 = vst.msk [vmem:[%s1799 + $0x148] sm:$0xff] %vm1725, %v1713
        %1821 = vst.msk [vmem:[%s1799 + $0x150] sm:$0xff] %vm1725, %v1714
        %1822 = vst.msk [vmem:[%s1799 + $0x168] sm:$0xff] %vm1725, %v1715
        %1823 = vst.msk [vmem:[%s1799 + $0x170] sm:$0xff] %vm1725, %v1716
        %1824 = vst.msk [vmem:[%s1799 + $0x188] sm:$0xff] %vm1725, %v1717
        %1825 = vst.msk [vmem:[%s1799 + $0x190] sm:$0xff] %vm1725, %v1718
        %1826 = vst.msk [vmem:[%s1799 + $0x1a8] sm:$0xff] %vm1725, %v1719
        %1827 = vst.msk [vmem:[%s1799 + $0x1b0] sm:$0xff] %vm1725, %v1720
        %1828 = vst.msk [vmem:[%s1799 + $0x1c8] sm:$0xff] %vm1725, %v1721
        %1829 = vst.msk [vmem:[%s1799 + $0x1d0] sm:$0xff] %vm1725, %v1722
        %1830 = vst.msk [vmem:[%s1799 + $0x1e8] sm:$0xff] %vm1725, %v1723
        %1831 = vst.msk [vmem:[%s1799 + $0x1f0] sm:$0xff] %vm1725, %v1724
        %v1832 = vld [vmem:[#allocation3 + $0x7] sm:$0xff]
        %v1833 = vld [vmem:[#allocation3 + $0xf] sm:$0xff]
        %v1834 = vld [vmem:[#allocation3 + $0x27] sm:$0xff]
        %v1835 = vld [vmem:[#allocation3 + $0x2f] sm:$0xff]
        %v1836 = vld [vmem:[#allocation3 + $0x47] sm:$0xff]
        %v1837 = vld [vmem:[#allocation3 + $0x4f] sm:$0xff]
        %v1838 = vld [vmem:[#allocation3 + $0x67] sm:$0xff]
        %v1839 = vld [vmem:[#allocation3 + $0x6f] sm:$0xff]
        %v1840 = vld [vmem:[#allocation3 + $0x87] sm:$0xff]
        %v1841 = vld [vmem:[#allocation3 + $0x8f] sm:$0xff]
        %v1842 = vld [vmem:[#allocation3 + $0xa7] sm:$0xff]
        %v1843 = vld [vmem:[#allocation3 + $0xaf] sm:$0xff]
        %v1844 = vld [vmem:[#allocation3 + $0xc7] sm:$0xff]
        %v1845 = vld [vmem:[#allocation3 + $0xcf] sm:$0xff]
        %v1846 = vld [vmem:[#allocation3 + $0xe7] sm:$0xff]
        %v1847 = vld [vmem:[#allocation3 + $0xef] sm:$0xff]
        %v1848 = vld [vmem:[#allocation3 + $0x107] sm:$0xff]
        %v1849 = vld [vmem:[#allocation3 + $0x10f] sm:$0xff]
        %v1850 = vld [vmem:[#allocation3 + $0x127] sm:$0xff]
        %v1851 = vld [vmem:[#allocation3 + $0x12f] sm:$0xff]
        %v1852 = vld [vmem:[#allocation3 + $0x147] sm:$0xff]
        %v1853 = vld [vmem:[#allocation3 + $0x14f] sm:$0xff]
        %v1854 = vld [vmem:[#allocation3 + $0x167] sm:$0xff]
        %v1855 = vld [vmem:[#allocation3 + $0x16f] sm:$0xff]
        %v1856 = vld [vmem:[#allocation3 + $0x187] sm:$0xff]
        %v1857 = vld [vmem:[#allocation3 + $0x18f] sm:$0xff]
        %v1858 = vld [vmem:[#allocation3 + $0x1a7] sm:$0xff]
        %v1859 = vld [vmem:[#allocation3 + $0x1af] sm:$0xff]
        %v1860 = vld [vmem:[#allocation3 + $0x1c7] sm:$0xff]
        %v1861 = vld [vmem:[#allocation3 + $0x1cf] sm:$0xff]
        %v1862 = vld [vmem:[#allocation3 + $0x1e7] sm:$0xff]
        %v1863 = vld [vmem:[#allocation3 + $0x1ef] sm:$0xff]
        %v1864 = vld [vmem:[%s6] sm:$0x1]
        %v1865 = vlaneseq
        %v1866 = vshrl.u32 %v1865, 7
        %v1867 = vsub.s32 0, %v1866
        %v1868 = vrot.slane %v1864, %v1867
        %v1869 = vmul.f32 %v1832, %v1868
        %v1870 = vmul.f32 %v1833, %v1868
        %v1871 = vmul.f32 %v1834, %v1868
        %v1872 = vmul.f32 %v1835, %v1868
        %v1873 = vmul.f32 %v1836, %v1868
        %v1874 = vmul.f32 %v1837, %v1868
        %v1875 = vmul.f32 %v1838, %v1868
        %v1876 = vmul.f32 %v1839, %v1868
        %v1877 = vmul.f32 %v1840, %v1868
        %v1878 = vmul.f32 %v1841, %v1868
        %v1879 = vmul.f32 %v1842, %v1868
        %v1880 = vmul.f32 %v1843, %v1868
        %v1881 = vmul.f32 %v1844, %v1868
        %v1882 = vmul.f32 %v1845, %v1868
        %v1883 = vmul.f32 %v1846, %v1868
        %v1884 = vmul.f32 %v1847, %v1868
        %v1885 = vmul.f32 %v1848, %v1868
        %v1886 = vmul.f32 %v1849, %v1868
        %v1887 = vmul.f32 %v1850, %v1868
        %v1888 = vmul.f32 %v1851, %v1868
        %v1889 = vmul.f32 %v1852, %v1868
        %v1890 = vmul.f32 %v1853, %v1868
        %v1891 = vmul.f32 %v1854, %v1868
        %v1892 = vmul.f32 %v1855, %v1868
        %v1893 = vmul.f32 %v1856, %v1868
        %v1894 = vmul.f32 %v1857, %v1868
        %v1895 = vmul.f32 %v1858, %v1868
        %v1896 = vmul.f32 %v1859, %v1868
        %v1897 = vmul.f32 %v1860, %v1868
        %v1898 = vmul.f32 %v1861, %v1868
        %v1899 = vmul.f32 %v1862, %v1868
        %v1900 = vmul.f32 %v1863, %v1868
        %v1901 = vld [vmem:[#allocation3 + $0x8] sm:$0xff]
        %v1902 = vld [vmem:[#allocation3 + $0x10] sm:$0xff]
        %v1903 = vld [vmem:[#allocation3 + $0x28] sm:$0xff]
        %v1904 = vld [vmem:[#allocation3 + $0x30] sm:$0xff]
        %v1905 = vld [vmem:[#allocation3 + $0x48] sm:$0xff]
        %v1906 = vld [vmem:[#allocation3 + $0x50] sm:$0xff]
        %v1907 = vld [vmem:[#allocation3 + $0x68] sm:$0xff]
        %v1908 = vld [vmem:[#allocation3 + $0x70] sm:$0xff]
        %v1909 = vld [vmem:[#allocation3 + $0x88] sm:$0xff]
        %v1910 = vld [vmem:[#allocation3 + $0x90] sm:$0xff]
        %v1911 = vld [vmem:[#allocation3 + $0xa8] sm:$0xff]
        %v1912 = vld [vmem:[#allocation3 + $0xb0] sm:$0xff]
        %v1913 = vld [vmem:[#allocation3 + $0xc8] sm:$0xff]
        %v1914 = vld [vmem:[#allocation3 + $0xd0] sm:$0xff]
        %v1915 = vld [vmem:[#allocation3 + $0xe8] sm:$0xff]
        %v1916 = vld [vmem:[#allocation3 + $0xf0] sm:$0xff]
        %v1917 = vld [vmem:[#allocation3 + $0x108] sm:$0xff]
        %v1918 = vld [vmem:[#allocation3 + $0x110] sm:$0xff]
        %v1919 = vld [vmem:[#allocation3 + $0x128] sm:$0xff]
        %v1920 = vld [vmem:[#allocation3 + $0x130] sm:$0xff]
        %v1921 = vld [vmem:[#allocation3 + $0x148] sm:$0xff]
        %v1922 = vld [vmem:[#allocation3 + $0x150] sm:$0xff]
        %v1923 = vld [vmem:[#allocation3 + $0x168] sm:$0xff]
        %v1924 = vld [vmem:[#allocation3 + $0x170] sm:$0xff]
        %v1925 = vld [vmem:[#allocation3 + $0x188] sm:$0xff]
        %v1926 = vld [vmem:[#allocation3 + $0x190] sm:$0xff]
        %v1927 = vld [vmem:[#allocation3 + $0x1a8] sm:$0xff]
        %v1928 = vld [vmem:[#allocation3 + $0x1b0] sm:$0xff]
        %v1929 = vld [vmem:[#allocation3 + $0x1c8] sm:$0xff]
        %v1930 = vld [vmem:[#allocation3 + $0x1d0] sm:$0xff]
        %v1931 = vld [vmem:[#allocation3 + $0x1e8] sm:$0xff]
        %v1932 = vld [vmem:[#allocation3 + $0x1f0] sm:$0xff]
        %v1933 = vld [vmem:[%s6 + $0x1] sm:$0x1]
        %v1934 = vlaneseq
        %v1935 = vshrl.u32 %v1934, 7
        %v1936 = vsub.s32 0, %v1935
        %v1937 = vrot.slane %v1933, %v1936
        %v1938 = vmul.f32 %v1901, %v1937
        %v1939 = vmul.f32 %v1902, %v1937
        %v1940 = vmul.f32 %v1903, %v1937
        %v1941 = vmul.f32 %v1904, %v1937
        %v1942 = vmul.f32 %v1905, %v1937
        %v1943 = vmul.f32 %v1906, %v1937
        %v1944 = vmul.f32 %v1907, %v1937
        %v1945 = vmul.f32 %v1908, %v1937
        %v1946 = vmul.f32 %v1909, %v1937
        %v1947 = vmul.f32 %v1910, %v1937
        %v1948 = vmul.f32 %v1911, %v1937
        %v1949 = vmul.f32 %v1912, %v1937
        %v1950 = vmul.f32 %v1913, %v1937
        %v1951 = vmul.f32 %v1914, %v1937
        %v1952 = vmul.f32 %v1915, %v1937
        %v1953 = vmul.f32 %v1916, %v1937
        %v1954 = vmul.f32 %v1917, %v1937
        %v1955 = vmul.f32 %v1918, %v1937
        %v1956 = vmul.f32 %v1919, %v1937
        %v1957 = vmul.f32 %v1920, %v1937
        %v1958 = vmul.f32 %v1921, %v1937
        %v1959 = vmul.f32 %v1922, %v1937
        %v1960 = vmul.f32 %v1923, %v1937
        %v1961 = vmul.f32 %v1924, %v1937
        %v1962 = vmul.f32 %v1925, %v1937
        %v1963 = vmul.f32 %v1926, %v1937
        %v1964 = vmul.f32 %v1927, %v1937
        %v1965 = vmul.f32 %v1928, %v1937
        %v1966 = vmul.f32 %v1929, %v1937
        %v1967 = vmul.f32 %v1930, %v1937
        %v1968 = vmul.f32 %v1931, %v1937
        %v1969 = vmul.f32 %v1932, %v1937
        %v1970 = vadd.f32 %v1869, %v1938
        %v1971 = vadd.f32 %v1870, %v1939
        %v1972 = vadd.f32 %v1871, %v1940
        %v1973 = vadd.f32 %v1872, %v1941
        %v1974 = vadd.f32 %v1873, %v1942
        %v1975 = vadd.f32 %v1874, %v1943
        %v1976 = vadd.f32 %v1875, %v1944
        %v1977 = vadd.f32 %v1876, %v1945
        %v1978 = vadd.f32 %v1877, %v1946
        %v1979 = vadd.f32 %v1878, %v1947
        %v1980 = vadd.f32 %v1879, %v1948
        %v1981 = vadd.f32 %v1880, %v1949
        %v1982 = vadd.f32 %v1881, %v1950
        %v1983 = vadd.f32 %v1882, %v1951
        %v1984 = vadd.f32 %v1883, %v1952
        %v1985 = vadd.f32 %v1884, %v1953
        %v1986 = vadd.f32 %v1885, %v1954
        %v1987 = vadd.f32 %v1886, %v1955
        %v1988 = vadd.f32 %v1887, %v1956
        %v1989 = vadd.f32 %v1888, %v1957
        %v1990 = vadd.f32 %v1889, %v1958
        %v1991 = vadd.f32 %v1890, %v1959
        %v1992 = vadd.f32 %v1891, %v1960
        %v1993 = vadd.f32 %v1892, %v1961
        %v1994 = vadd.f32 %v1893, %v1962
        %v1995 = vadd.f32 %v1894, %v1963
        %v1996 = vadd.f32 %v1895, %v1964
        %v1997 = vadd.f32 %v1896, %v1965
        %v1998 = vadd.f32 %v1897, %v1966
        %v1999 = vadd.f32 %v1898, %v1967
        %v2000 = vadd.f32 %v1899, %v1968
        %v2001 = vadd.f32 %v1900, %v1969
        %v2002 = vld [vmem:[#allocation3 + $0x9] sm:$0xff]
        %v2003 = vld [vmem:[#allocation3 + $0x11] sm:$0xff]
        %v2004 = vld [vmem:[#allocation3 + $0x29] sm:$0xff]
        %v2005 = vld [vmem:[#allocation3 + $0x31] sm:$0xff]
        %v2006 = vld [vmem:[#allocation3 + $0x49] sm:$0xff]
        %v2007 = vld [vmem:[#allocation3 + $0x51] sm:$0xff]
        %v2008 = vld [vmem:[#allocation3 + $0x69] sm:$0xff]
        %v2009 = vld [vmem:[#allocation3 + $0x71] sm:$0xff]
        %v2010 = vld [vmem:[#allocation3 + $0x89] sm:$0xff]
        %v2011 = vld [vmem:[#allocation3 + $0x91] sm:$0xff]
        %v2012 = vld [vmem:[#allocation3 + $0xa9] sm:$0xff]
        %v2013 = vld [vmem:[#allocation3 + $0xb1] sm:$0xff]
        %v2014 = vld [vmem:[#allocation3 + $0xc9] sm:$0xff]
        %v2015 = vld [vmem:[#allocation3 + $0xd1] sm:$0xff]
        %v2016 = vld [vmem:[#allocation3 + $0xe9] sm:$0xff]
        %v2017 = vld [vmem:[#allocation3 + $0xf1] sm:$0xff]
        %v2018 = vld [vmem:[#allocation3 + $0x109] sm:$0xff]
        %v2019 = vld [vmem:[#allocation3 + $0x111] sm:$0xff]
        %v2020 = vld [vmem:[#allocation3 + $0x129] sm:$0xff]
        %v2021 = vld [vmem:[#allocation3 + $0x131] sm:$0xff]
        %v2022 = vld [vmem:[#allocation3 + $0x149] sm:$0xff]
        %v2023 = vld [vmem:[#allocation3 + $0x151] sm:$0xff]
        %v2024 = vld [vmem:[#allocation3 + $0x169] sm:$0xff]
        %v2025 = vld [vmem:[#allocation3 + $0x171] sm:$0xff]
        %v2026 = vld [vmem:[#allocation3 + $0x189] sm:$0xff]
        %v2027 = vld [vmem:[#allocation3 + $0x191] sm:$0xff]
        %v2028 = vld [vmem:[#allocation3 + $0x1a9] sm:$0xff]
        %v2029 = vld [vmem:[#allocation3 + $0x1b1] sm:$0xff]
        %v2030 = vld [vmem:[#allocation3 + $0x1c9] sm:$0xff]
        %v2031 = vld [vmem:[#allocation3 + $0x1d1] sm:$0xff]
        %v2032 = vld [vmem:[#allocation3 + $0x1e9] sm:$0xff]
        %v2033 = vld [vmem:[#allocation3 + $0x1f1] sm:$0xff]
        %v2034 = vld [vmem:[%s6 + $0x2] sm:$0x1]
        %v2035 = vlaneseq
        %v2036 = vshrl.u32 %v2035, 7
        %v2037 = vsub.s32 0, %v2036
        %v2038 = vrot.slane %v2034, %v2037
        %v2039 = vmul.f32 %v2002, %v2038
        %v2040 = vmul.f32 %v2003, %v2038
        %v2041 = vmul.f32 %v2004, %v2038
        %v2042 = vmul.f32 %v2005, %v2038
        %v2043 = vmul.f32 %v2006, %v2038
        %v2044 = vmul.f32 %v2007, %v2038
        %v2045 = vmul.f32 %v2008, %v2038
        %v2046 = vmul.f32 %v2009, %v2038
        %v2047 = vmul.f32 %v2010, %v2038
        %v2048 = vmul.f32 %v2011, %v2038
        %v2049 = vmul.f32 %v2012, %v2038
        %v2050 = vmul.f32 %v2013, %v2038
        %v2051 = vmul.f32 %v2014, %v2038
        %v2052 = vmul.f32 %v2015, %v2038
        %v2053 = vmul.f32 %v2016, %v2038
        %v2054 = vmul.f32 %v2017, %v2038
        %v2055 = vmul.f32 %v2018, %v2038
        %v2056 = vmul.f32 %v2019, %v2038
        %v2057 = vmul.f32 %v2020, %v2038
        %v2058 = vmul.f32 %v2021, %v2038
        %v2059 = vmul.f32 %v2022, %v2038
        %v2060 = vmul.f32 %v2023, %v2038
        %v2061 = vmul.f32 %v2024, %v2038
        %v2062 = vmul.f32 %v2025, %v2038
        %v2063 = vmul.f32 %v2026, %v2038
        %v2064 = vmul.f32 %v2027, %v2038
        %v2065 = vmul.f32 %v2028, %v2038
        %v2066 = vmul.f32 %v2029, %v2038
        %v2067 = vmul.f32 %v2030, %v2038
        %v2068 = vmul.f32 %v2031, %v2038
        %v2069 = vmul.f32 %v2032, %v2038
        %v2070 = vmul.f32 %v2033, %v2038
        %v2071 = vadd.f32 %v1970, %v2039
        %v2072 = vadd.f32 %v1971, %v2040
        %v2073 = vadd.f32 %v1972, %v2041
        %v2074 = vadd.f32 %v1973, %v2042
        %v2075 = vadd.f32 %v1974, %v2043
        %v2076 = vadd.f32 %v1975, %v2044
        %v2077 = vadd.f32 %v1976, %v2045
        %v2078 = vadd.f32 %v1977, %v2046
        %v2079 = vadd.f32 %v1978, %v2047
        %v2080 = vadd.f32 %v1979, %v2048
        %v2081 = vadd.f32 %v1980, %v2049
        %v2082 = vadd.f32 %v1981, %v2050
        %v2083 = vadd.f32 %v1982, %v2051
        %v2084 = vadd.f32 %v1983, %v2052
        %v2085 = vadd.f32 %v1984, %v2053
        %v2086 = vadd.f32 %v1985, %v2054
        %v2087 = vadd.f32 %v1986, %v2055
        %v2088 = vadd.f32 %v1987, %v2056
        %v2089 = vadd.f32 %v1988, %v2057
        %v2090 = vadd.f32 %v1989, %v2058
        %v2091 = vadd.f32 %v1990, %v2059
        %v2092 = vadd.f32 %v1991, %v2060
        %v2093 = vadd.f32 %v1992, %v2061
        %v2094 = vadd.f32 %v1993, %v2062
        %v2095 = vadd.f32 %v1994, %v2063
        %v2096 = vadd.f32 %v1995, %v2064
        %v2097 = vadd.f32 %v1996, %v2065
        %v2098 = vadd.f32 %v1997, %v2066
        %v2099 = vadd.f32 %v1998, %v2067
        %v2100 = vadd.f32 %v1999, %v2068
        %v2101 = vadd.f32 %v2000, %v2069
        %v2102 = vadd.f32 %v2001, %v2070
        %v2103 = vld [vmem:[%s1799 + $0x7] sm:$0xff]
        %v2104 = vld [vmem:[%s1799 + $0xf] sm:$0xff]
        %v2105 = vld [vmem:[%s1799 + $0x27] sm:$0xff]
        %v2106 = vld [vmem:[%s1799 + $0x2f] sm:$0xff]
        %v2107 = vld [vmem:[%s1799 + $0x47] sm:$0xff]
        %v2108 = vld [vmem:[%s1799 + $0x4f] sm:$0xff]
        %v2109 = vld [vmem:[%s1799 + $0x67] sm:$0xff]
        %v2110 = vld [vmem:[%s1799 + $0x6f] sm:$0xff]
        %v2111 = vld [vmem:[%s1799 + $0x87] sm:$0xff]
        %v2112 = vld [vmem:[%s1799 + $0x8f] sm:$0xff]
        %v2113 = vld [vmem:[%s1799 + $0xa7] sm:$0xff]
        %v2114 = vld [vmem:[%s1799 + $0xaf] sm:$0xff]
        %v2115 = vld [vmem:[%s1799 + $0xc7] sm:$0xff]
        %v2116 = vld [vmem:[%s1799 + $0xcf] sm:$0xff]
        %v2117 = vld [vmem:[%s1799 + $0xe7] sm:$0xff]
        %v2118 = vld [vmem:[%s1799 + $0xef] sm:$0xff]
        %v2119 = vld [vmem:[%s1799 + $0x107] sm:$0xff]
        %v2120 = vld [vmem:[%s1799 + $0x10f] sm:$0xff]
        %v2121 = vld [vmem:[%s1799 + $0x127] sm:$0xff]
        %v2122 = vld [vmem:[%s1799 + $0x12f] sm:$0xff]
        %v2123 = vld [vmem:[%s1799 + $0x147] sm:$0xff]
        %v2124 = vld [vmem:[%s1799 + $0x14f] sm:$0xff]
        %v2125 = vld [vmem:[%s1799 + $0x167] sm:$0xff]
        %v2126 = vld [vmem:[%s1799 + $0x16f] sm:$0xff]
        %v2127 = vld [vmem:[%s1799 + $0x187] sm:$0xff]
        %v2128 = vld [vmem:[%s1799 + $0x18f] sm:$0xff]
        %v2129 = vld [vmem:[%s1799 + $0x1a7] sm:$0xff]
        %v2130 = vld [vmem:[%s1799 + $0x1af] sm:$0xff]
        %v2131 = vld [vmem:[%s1799 + $0x1c7] sm:$0xff]
        %v2132 = vld [vmem:[%s1799 + $0x1cf] sm:$0xff]
        %v2133 = vld [vmem:[%s1799 + $0x1e7] sm:$0xff]
        %v2134 = vld [vmem:[%s1799 + $0x1ef] sm:$0xff]
        %v2135 = vld [vmem:[%s6 + $0x3] sm:$0x1]
        %v2136 = vlaneseq
        %v2137 = vshrl.u32 %v2136, 7
        %v2138 = vsub.s32 0, %v2137
        %v2139 = vrot.slane %v2135, %v2138
        %v2140 = vmul.f32 %v2103, %v2139
        %v2141 = vmul.f32 %v2104, %v2139
        %v2142 = vmul.f32 %v2105, %v2139
        %v2143 = vmul.f32 %v2106, %v2139
        %v2144 = vmul.f32 %v2107, %v2139
        %v2145 = vmul.f32 %v2108, %v2139
        %v2146 = vmul.f32 %v2109, %v2139
        %v2147 = vmul.f32 %v2110, %v2139
        %v2148 = vmul.f32 %v2111, %v2139
        %v2149 = vmul.f32 %v2112, %v2139
        %v2150 = vmul.f32 %v2113, %v2139
        %v2151 = vmul.f32 %v2114, %v2139
        %v2152 = vmul.f32 %v2115, %v2139
        %v2153 = vmul.f32 %v2116, %v2139
        %v2154 = vmul.f32 %v2117, %v2139
        %v2155 = vmul.f32 %v2118, %v2139
        %v2156 = vmul.f32 %v2119, %v2139
        %v2157 = vmul.f32 %v2120, %v2139
        %v2158 = vmul.f32 %v2121, %v2139
        %v2159 = vmul.f32 %v2122, %v2139
        %v2160 = vmul.f32 %v2123, %v2139
        %v2161 = vmul.f32 %v2124, %v2139
        %v2162 = vmul.f32 %v2125, %v2139
        %v2163 = vmul.f32 %v2126, %v2139
        %v2164 = vmul.f32 %v2127, %v2139
        %v2165 = vmul.f32 %v2128, %v2139
        %v2166 = vmul.f32 %v2129, %v2139
        %v2167 = vmul.f32 %v2130, %v2139
        %v2168 = vmul.f32 %v2131, %v2139
        %v2169 = vmul.f32 %v2132, %v2139
        %v2170 = vmul.f32 %v2133, %v2139
        %v2171 = vmul.f32 %v2134, %v2139
        %v2172 = vadd.f32 %v2071, %v2140
        %v2173 = vadd.f32 %v2072, %v2141
        %v2174 = vadd.f32 %v2073, %v2142
        %v2175 = vadd.f32 %v2074, %v2143
        %v2176 = vadd.f32 %v2075, %v2144
        %v2177 = vadd.f32 %v2076, %v2145
        %v2178 = vadd.f32 %v2077, %v2146
        %v2179 = vadd.f32 %v2078, %v2147
        %v2180 = vadd.f32 %v2079, %v2148
        %v2181 = vadd.f32 %v2080, %v2149
        %v2182 = vadd.f32 %v2081, %v2150
        %v2183 = vadd.f32 %v2082, %v2151
        %v2184 = vadd.f32 %v2083, %v2152
        %v2185 = vadd.f32 %v2084, %v2153
        %v2186 = vadd.f32 %v2085, %v2154
        %v2187 = vadd.f32 %v2086, %v2155
        %v2188 = vadd.f32 %v2087, %v2156
        %v2189 = vadd.f32 %v2088, %v2157
        %v2190 = vadd.f32 %v2089, %v2158
        %v2191 = vadd.f32 %v2090, %v2159
        %v2192 = vadd.f32 %v2091, %v2160
        %v2193 = vadd.f32 %v2092, %v2161
        %v2194 = vadd.f32 %v2093, %v2162
        %v2195 = vadd.f32 %v2094, %v2163
        %v2196 = vadd.f32 %v2095, %v2164
        %v2197 = vadd.f32 %v2096, %v2165
        %v2198 = vadd.f32 %v2097, %v2166
        %v2199 = vadd.f32 %v2098, %v2167
        %v2200 = vadd.f32 %v2099, %v2168
        %v2201 = vadd.f32 %v2100, %v2169
        %v2202 = vadd.f32 %v2101, %v2170
        %v2203 = vadd.f32 %v2102, %v2171
        %v2204 = vld [vmem:[%s1799 + $0x8] sm:$0xff]
        %v2205 = vld [vmem:[%s1799 + $0x10] sm:$0xff]
        %v2206 = vld [vmem:[%s1799 + $0x28] sm:$0xff]
        %v2207 = vld [vmem:[%s1799 + $0x30] sm:$0xff]
        %v2208 = vld [vmem:[%s1799 + $0x48] sm:$0xff]
        %v2209 = vld [vmem:[%s1799 + $0x50] sm:$0xff]
        %v2210 = vld [vmem:[%s1799 + $0x68] sm:$0xff]
        %v2211 = vld [vmem:[%s1799 + $0x70] sm:$0xff]
        %v2212 = vld [vmem:[%s1799 + $0x88] sm:$0xff]
        %v2213 = vld [vmem:[%s1799 + $0x90] sm:$0xff]
        %v2214 = vld [vmem:[%s1799 + $0xa8] sm:$0xff]
        %v2215 = vld [vmem:[%s1799 + $0xb0] sm:$0xff]
        %v2216 = vld [vmem:[%s1799 + $0xc8] sm:$0xff]
        %v2217 = vld [vmem:[%s1799 + $0xd0] sm:$0xff]
        %v2218 = vld [vmem:[%s1799 + $0xe8] sm:$0xff]
        %v2219 = vld [vmem:[%s1799 + $0xf0] sm:$0xff]
        %v2220 = vld [vmem:[%s1799 + $0x108] sm:$0xff]
        %v2221 = vld [vmem:[%s1799 + $0x110] sm:$0xff]
        %v2222 = vld [vmem:[%s1799 + $0x128] sm:$0xff]
        %v2223 = vld [vmem:[%s1799 + $0x130] sm:$0xff]
        %v2224 = vld [vmem:[%s1799 + $0x148] sm:$0xff]
        %v2225 = vld [vmem:[%s1799 + $0x150] sm:$0xff]
        %v2226 = vld [vmem:[%s1799 + $0x168] sm:$0xff]
        %v2227 = vld [vmem:[%s1799 + $0x170] sm:$0xff]
        %v2228 = vld [vmem:[%s1799 + $0x188] sm:$0xff]
        %v2229 = vld [vmem:[%s1799 + $0x190] sm:$0xff]
        %v2230 = vld [vmem:[%s1799 + $0x1a8] sm:$0xff]
        %v2231 = vld [vmem:[%s1799 + $0x1b0] sm:$0xff]
        %v2232 = vld [vmem:[%s1799 + $0x1c8] sm:$0xff]
        %v2233 = vld [vmem:[%s1799 + $0x1d0] sm:$0xff]
        %v2234 = vld [vmem:[%s1799 + $0x1e8] sm:$0xff]
        %v2235 = vld [vmem:[%s1799 + $0x1f0] sm:$0xff]
        %v2236 = vld [vmem:[%s6 + $0x4] sm:$0x1]
        %v2237 = vlaneseq
        %v2238 = vshrl.u32 %v2237, 7
        %v2239 = vsub.s32 0, %v2238
        %v2240 = vrot.slane %v2236, %v2239
        %v2241 = vmul.f32 %v2204, %v2240
        %v2242 = vmul.f32 %v2205, %v2240
        %v2243 = vmul.f32 %v2206, %v2240
        %v2244 = vmul.f32 %v2207, %v2240
        %v2245 = vmul.f32 %v2208, %v2240
        %v2246 = vmul.f32 %v2209, %v2240
        %v2247 = vmul.f32 %v2210, %v2240
        %v2248 = vmul.f32 %v2211, %v2240
        %v2249 = vmul.f32 %v2212, %v2240
        %v2250 = vmul.f32 %v2213, %v2240
        %v2251 = vmul.f32 %v2214, %v2240
        %v2252 = vmul.f32 %v2215, %v2240
        %v2253 = vmul.f32 %v2216, %v2240
        %v2254 = vmul.f32 %v2217, %v2240
        %v2255 = vmul.f32 %v2218, %v2240
        %v2256 = vmul.f32 %v2219, %v2240
        %v2257 = vmul.f32 %v2220, %v2240
        %v2258 = vmul.f32 %v2221, %v2240
        %v2259 = vmul.f32 %v2222, %v2240
        %v2260 = vmul.f32 %v2223, %v2240
        %v2261 = vmul.f32 %v2224, %v2240
        %v2262 = vmul.f32 %v2225, %v2240
        %v2263 = vmul.f32 %v2226, %v2240
        %v2264 = vmul.f32 %v2227, %v2240
        %v2265 = vmul.f32 %v2228, %v2240
        %v2266 = vmul.f32 %v2229, %v2240
        %v2267 = vmul.f32 %v2230, %v2240
        %v2268 = vmul.f32 %v2231, %v2240
        %v2269 = vmul.f32 %v2232, %v2240
        %v2270 = vmul.f32 %v2233, %v2240
        %v2271 = vmul.f32 %v2234, %v2240
        %v2272 = vmul.f32 %v2235, %v2240
        %v2273 = vadd.f32 %v2172, %v2241
        %v2274 = vadd.f32 %v2173, %v2242
        %v2275 = vadd.f32 %v2174, %v2243
        %v2276 = vadd.f32 %v2175, %v2244
        %v2277 = vadd.f32 %v2176, %v2245
        %v2278 = vadd.f32 %v2177, %v2246
        %v2279 = vadd.f32 %v2178, %v2247
        %v2280 = vadd.f32 %v2179, %v2248
        %v2281 = vadd.f32 %v2180, %v2249
        %v2282 = vadd.f32 %v2181, %v2250
        %v2283 = vadd.f32 %v2182, %v2251
        %v2284 = vadd.f32 %v2183, %v2252
        %v2285 = vadd.f32 %v2184, %v2253
        %v2286 = vadd.f32 %v2185, %v2254
        %v2287 = vadd.f32 %v2186, %v2255
        %v2288 = vadd.f32 %v2187, %v2256
        %v2289 = vadd.f32 %v2188, %v2257
        %v2290 = vadd.f32 %v2189, %v2258
        %v2291 = vadd.f32 %v2190, %v2259
        %v2292 = vadd.f32 %v2191, %v2260
        %v2293 = vadd.f32 %v2192, %v2261
        %v2294 = vadd.f32 %v2193, %v2262
        %v2295 = vadd.f32 %v2194, %v2263
        %v2296 = vadd.f32 %v2195, %v2264
        %v2297 = vadd.f32 %v2196, %v2265
        %v2298 = vadd.f32 %v2197, %v2266
        %v2299 = vadd.f32 %v2198, %v2267
        %v2300 = vadd.f32 %v2199, %v2268
        %v2301 = vadd.f32 %v2200, %v2269
        %v2302 = vadd.f32 %v2201, %v2270
        %v2303 = vadd.f32 %v2202, %v2271
        %v2304 = vadd.f32 %v2203, %v2272
        %v2305 = vld [vmem:[%s1799 + $0x9] sm:$0xff]
        %v2306 = vld [vmem:[%s1799 + $0x11] sm:$0xff]
        %v2307 = vld [vmem:[%s1799 + $0x29] sm:$0xff]
        %v2308 = vld [vmem:[%s1799 + $0x31] sm:$0xff]
        %v2309 = vld [vmem:[%s1799 + $0x49] sm:$0xff]
        %v2310 = vld [vmem:[%s1799 + $0x51] sm:$0xff]
        %v2311 = vld [vmem:[%s1799 + $0x69] sm:$0xff]
        %v2312 = vld [vmem:[%s1799 + $0x71] sm:$0xff]
        %v2313 = vld [vmem:[%s1799 + $0x89] sm:$0xff]
        %v2314 = vld [vmem:[%s1799 + $0x91] sm:$0xff]
        %v2315 = vld [vmem:[%s1799 + $0xa9] sm:$0xff]
        %v2316 = vld [vmem:[%s1799 + $0xb1] sm:$0xff]
        %v2317 = vld [vmem:[%s1799 + $0xc9] sm:$0xff]
        %v2318 = vld [vmem:[%s1799 + $0xd1] sm:$0xff]
        %v2319 = vld [vmem:[%s1799 + $0xe9] sm:$0xff]
        %v2320 = vld [vmem:[%s1799 + $0xf1] sm:$0xff]
        %v2321 = vld [vmem:[%s1799 + $0x109] sm:$0xff]
        %v2322 = vld [vmem:[%s1799 + $0x111] sm:$0xff]
        %v2323 = vld [vmem:[%s1799 + $0x129] sm:$0xff]
        %v2324 = vld [vmem:[%s1799 + $0x131] sm:$0xff]
        %v2325 = vld [vmem:[%s1799 + $0x149] sm:$0xff]
        %v2326 = vld [vmem:[%s1799 + $0x151] sm:$0xff]
        %v2327 = vld [vmem:[%s1799 + $0x169] sm:$0xff]
        %v2328 = vld [vmem:[%s1799 + $0x171] sm:$0xff]
        %v2329 = vld [vmem:[%s1799 + $0x189] sm:$0xff]
        %v2330 = vld [vmem:[%s1799 + $0x191] sm:$0xff]
        %v2331 = vld [vmem:[%s1799 + $0x1a9] sm:$0xff]
        %v2332 = vld [vmem:[%s1799 + $0x1b1] sm:$0xff]
        %v2333 = vld [vmem:[%s1799 + $0x1c9] sm:$0xff]
        %v2334 = vld [vmem:[%s1799 + $0x1d1] sm:$0xff]
        %v2335 = vld [vmem:[%s1799 + $0x1e9] sm:$0xff]
        %v2336 = vld [vmem:[%s1799 + $0x1f1] sm:$0xff]
        %v2337 = vld [vmem:[%s6 + $0x5] sm:$0x1]
        %v2338 = vlaneseq
        %v2339 = vshrl.u32 %v2338, 7
        %v2340 = vsub.s32 0, %v2339
        %v2341 = vrot.slane %v2337, %v2340
        %v2342 = vmul.f32 %v2305, %v2341
        %v2343 = vmul.f32 %v2306, %v2341
        %v2344 = vmul.f32 %v2307, %v2341
        %v2345 = vmul.f32 %v2308, %v2341
        %v2346 = vmul.f32 %v2309, %v2341
        %v2347 = vmul.f32 %v2310, %v2341
        %v2348 = vmul.f32 %v2311, %v2341
        %v2349 = vmul.f32 %v2312, %v2341
        %v2350 = vmul.f32 %v2313, %v2341
        %v2351 = vmul.f32 %v2314, %v2341
        %v2352 = vmul.f32 %v2315, %v2341
        %v2353 = vmul.f32 %v2316, %v2341
        %v2354 = vmul.f32 %v2317, %v2341
        %v2355 = vmul.f32 %v2318, %v2341
        %v2356 = vmul.f32 %v2319, %v2341
        %v2357 = vmul.f32 %v2320, %v2341
        %v2358 = vmul.f32 %v2321, %v2341
        %v2359 = vmul.f32 %v2322, %v2341
        %v2360 = vmul.f32 %v2323, %v2341
        %v2361 = vmul.f32 %v2324, %v2341
        %v2362 = vmul.f32 %v2325, %v2341
        %v2363 = vmul.f32 %v2326, %v2341
        %v2364 = vmul.f32 %v2327, %v2341
        %v2365 = vmul.f32 %v2328, %v2341
        %v2366 = vmul.f32 %v2329, %v2341
        %v2367 = vmul.f32 %v2330, %v2341
        %v2368 = vmul.f32 %v2331, %v2341
        %v2369 = vmul.f32 %v2332, %v2341
        %v2370 = vmul.f32 %v2333, %v2341
        %v2371 = vmul.f32 %v2334, %v2341
        %v2372 = vmul.f32 %v2335, %v2341
        %v2373 = vmul.f32 %v2336, %v2341
        %v2374 = vadd.f32 %v2273, %v2342
        %v2375 = vadd.f32 %v2274, %v2343
        %v2376 = vadd.f32 %v2275, %v2344
        %v2377 = vadd.f32 %v2276, %v2345
        %v2378 = vadd.f32 %v2277, %v2346
        %v2379 = vadd.f32 %v2278, %v2347
        %v2380 = vadd.f32 %v2279, %v2348
        %v2381 = vadd.f32 %v2280, %v2349
        %v2382 = vadd.f32 %v2281, %v2350
        %v2383 = vadd.f32 %v2282, %v2351
        %v2384 = vadd.f32 %v2283, %v2352
        %v2385 = vadd.f32 %v2284, %v2353
        %v2386 = vadd.f32 %v2285, %v2354
        %v2387 = vadd.f32 %v2286, %v2355
        %v2388 = vadd.f32 %v2287, %v2356
        %v2389 = vadd.f32 %v2288, %v2357
        %v2390 = vadd.f32 %v2289, %v2358
        %v2391 = vadd.f32 %v2290, %v2359
        %v2392 = vadd.f32 %v2291, %v2360
        %v2393 = vadd.f32 %v2292, %v2361
        %v2394 = vadd.f32 %v2293, %v2362
        %v2395 = vadd.f32 %v2294, %v2363
        %v2396 = vadd.f32 %v2295, %v2364
        %v2397 = vadd.f32 %v2296, %v2365
        %v2398 = vadd.f32 %v2297, %v2366
        %v2399 = vadd.f32 %v2298, %v2367
        %v2400 = vadd.f32 %v2299, %v2368
        %v2401 = vadd.f32 %v2300, %v2369
        %v2402 = vadd.f32 %v2301, %v2370
        %v2403 = vadd.f32 %v2302, %v2371
        %v2404 = vadd.f32 %v2303, %v2372
        %v2405 = vadd.f32 %v2304, %v2373
        %s2406 = scalar_lea.vmem [#allocation3], 64
        %v2407 = vld [vmem:[%s2406 + $0x7] sm:$0xff]
        %v2408 = vld [vmem:[%s2406 + $0xf] sm:$0xff]
        %v2409 = vld [vmem:[%s2406 + $0x27] sm:$0xff]
        %v2410 = vld [vmem:[%s2406 + $0x2f] sm:$0xff]
        %v2411 = vld [vmem:[%s2406 + $0x47] sm:$0xff]
        %v2412 = vld [vmem:[%s2406 + $0x4f] sm:$0xff]
        %v2413 = vld [vmem:[%s2406 + $0x67] sm:$0xff]
        %v2414 = vld [vmem:[%s2406 + $0x6f] sm:$0xff]
        %v2415 = vld [vmem:[%s2406 + $0x87] sm:$0xff]
        %v2416 = vld [vmem:[%s2406 + $0x8f] sm:$0xff]
        %v2417 = vld [vmem:[%s2406 + $0xa7] sm:$0xff]
        %v2418 = vld [vmem:[%s2406 + $0xaf] sm:$0xff]
        %v2419 = vld [vmem:[%s2406 + $0xc7] sm:$0xff]
        %v2420 = vld [vmem:[%s2406 + $0xcf] sm:$0xff]
        %v2421 = vld [vmem:[%s2406 + $0xe7] sm:$0xff]
        %v2422 = vld [vmem:[%s2406 + $0xef] sm:$0xff]
        %v2423 = vld [vmem:[%s2406 + $0x107] sm:$0xff]
        %v2424 = vld [vmem:[%s2406 + $0x10f] sm:$0xff]
        %v2425 = vld [vmem:[%s2406 + $0x127] sm:$0xff]
        %v2426 = vld [vmem:[%s2406 + $0x12f] sm:$0xff]
        %v2427 = vld [vmem:[%s2406 + $0x147] sm:$0xff]
        %v2428 = vld [vmem:[%s2406 + $0x14f] sm:$0xff]
        %v2429 = vld [vmem:[%s2406 + $0x167] sm:$0xff]
        %v2430 = vld [vmem:[%s2406 + $0x16f] sm:$0xff]
        %v2431 = vld [vmem:[%s2406 + $0x187] sm:$0xff]
        %v2432 = vld [vmem:[%s2406 + $0x18f] sm:$0xff]
        %v2433 = vld [vmem:[%s2406 + $0x1a7] sm:$0xff]
        %v2434 = vld [vmem:[%s2406 + $0x1af] sm:$0xff]
        %v2435 = vld [vmem:[%s2406 + $0x1c7] sm:$0xff]
        %v2436 = vld [vmem:[%s2406 + $0x1cf] sm:$0xff]
        %v2437 = vld [vmem:[%s2406 + $0x1e7] sm:$0xff]
        %v2438 = vld [vmem:[%s2406 + $0x1ef] sm:$0xff]
        %v2439 = vld [vmem:[%s6 + $0x6] sm:$0x1]
        %v2440 = vlaneseq
        %v2441 = vshrl.u32 %v2440, 7
        %v2442 = vsub.s32 0, %v2441
        %v2443 = vrot.slane %v2439, %v2442
        %v2444 = vmul.f32 %v2407, %v2443
        %v2445 = vmul.f32 %v2408, %v2443
        %v2446 = vmul.f32 %v2409, %v2443
        %v2447 = vmul.f32 %v2410, %v2443
        %v2448 = vmul.f32 %v2411, %v2443
        %v2449 = vmul.f32 %v2412, %v2443
        %v2450 = vmul.f32 %v2413, %v2443
        %v2451 = vmul.f32 %v2414, %v2443
        %v2452 = vmul.f32 %v2415, %v2443
        %v2453 = vmul.f32 %v2416, %v2443
        %v2454 = vmul.f32 %v2417, %v2443
        %v2455 = vmul.f32 %v2418, %v2443
        %v2456 = vmul.f32 %v2419, %v2443
        %v2457 = vmul.f32 %v2420, %v2443
        %v2458 = vmul.f32 %v2421, %v2443
        %v2459 = vmul.f32 %v2422, %v2443
        %v2460 = vmul.f32 %v2423, %v2443
        %v2461 = vmul.f32 %v2424, %v2443
        %v2462 = vmul.f32 %v2425, %v2443
        %v2463 = vmul.f32 %v2426, %v2443
        %v2464 = vmul.f32 %v2427, %v2443
        %v2465 = vmul.f32 %v2428, %v2443
        %v2466 = vmul.f32 %v2429, %v2443
        %v2467 = vmul.f32 %v2430, %v2443
        %v2468 = vmul.f32 %v2431, %v2443
        %v2469 = vmul.f32 %v2432, %v2443
        %v2470 = vmul.f32 %v2433, %v2443
        %v2471 = vmul.f32 %v2434, %v2443
        %v2472 = vmul.f32 %v2435, %v2443
        %v2473 = vmul.f32 %v2436, %v2443
        %v2474 = vmul.f32 %v2437, %v2443
        %v2475 = vmul.f32 %v2438, %v2443
        %v2476 = vadd.f32 %v2374, %v2444
        %v2477 = vadd.f32 %v2375, %v2445
        %v2478 = vadd.f32 %v2376, %v2446
        %v2479 = vadd.f32 %v2377, %v2447
        %v2480 = vadd.f32 %v2378, %v2448
        %v2481 = vadd.f32 %v2379, %v2449
        %v2482 = vadd.f32 %v2380, %v2450
        %v2483 = vadd.f32 %v2381, %v2451
        %v2484 = vadd.f32 %v2382, %v2452
        %v2485 = vadd.f32 %v2383, %v2453
        %v2486 = vadd.f32 %v2384, %v2454
        %v2487 = vadd.f32 %v2385, %v2455
        %v2488 = vadd.f32 %v2386, %v2456
        %v2489 = vadd.f32 %v2387, %v2457
        %v2490 = vadd.f32 %v2388, %v2458
        %v2491 = vadd.f32 %v2389, %v2459
        %v2492 = vadd.f32 %v2390, %v2460
        %v2493 = vadd.f32 %v2391, %v2461
        %v2494 = vadd.f32 %v2392, %v2462
        %v2495 = vadd.f32 %v2393, %v2463
        %v2496 = vadd.f32 %v2394, %v2464
        %v2497 = vadd.f32 %v2395, %v2465
        %v2498 = vadd.f32 %v2396, %v2466
        %v2499 = vadd.f32 %v2397, %v2467
        %v2500 = vadd.f32 %v2398, %v2468
        %v2501 = vadd.f32 %v2399, %v2469
        %v2502 = vadd.f32 %v2400, %v2470
        %v2503 = vadd.f32 %v2401, %v2471
        %v2504 = vadd.f32 %v2402, %v2472
        %v2505 = vadd.f32 %v2403, %v2473
        %v2506 = vadd.f32 %v2404, %v2474
        %v2507 = vadd.f32 %v2405, %v2475
        %v2508 = vld [vmem:[%s2406 + $0x8] sm:$0xff]
        %v2509 = vld [vmem:[%s2406 + $0x10] sm:$0xff]
        %v2510 = vld [vmem:[%s2406 + $0x28] sm:$0xff]
        %v2511 = vld [vmem:[%s2406 + $0x30] sm:$0xff]
        %v2512 = vld [vmem:[%s2406 + $0x48] sm:$0xff]
        %v2513 = vld [vmem:[%s2406 + $0x50] sm:$0xff]
        %v2514 = vld [vmem:[%s2406 + $0x68] sm:$0xff]
        %v2515 = vld [vmem:[%s2406 + $0x70] sm:$0xff]
        %v2516 = vld [vmem:[%s2406 + $0x88] sm:$0xff]
        %v2517 = vld [vmem:[%s2406 + $0x90] sm:$0xff]
        %v2518 = vld [vmem:[%s2406 + $0xa8] sm:$0xff]
        %v2519 = vld [vmem:[%s2406 + $0xb0] sm:$0xff]
        %v2520 = vld [vmem:[%s2406 + $0xc8] sm:$0xff]
        %v2521 = vld [vmem:[%s2406 + $0xd0] sm:$0xff]
        %v2522 = vld [vmem:[%s2406 + $0xe8] sm:$0xff]
        %v2523 = vld [vmem:[%s2406 + $0xf0] sm:$0xff]
        %v2524 = vld [vmem:[%s2406 + $0x108] sm:$0xff]
        %v2525 = vld [vmem:[%s2406 + $0x110] sm:$0xff]
        %v2526 = vld [vmem:[%s2406 + $0x128] sm:$0xff]
        %v2527 = vld [vmem:[%s2406 + $0x130] sm:$0xff]
        %v2528 = vld [vmem:[%s2406 + $0x148] sm:$0xff]
        %v2529 = vld [vmem:[%s2406 + $0x150] sm:$0xff]
        %v2530 = vld [vmem:[%s2406 + $0x168] sm:$0xff]
        %v2531 = vld [vmem:[%s2406 + $0x170] sm:$0xff]
        %v2532 = vld [vmem:[%s2406 + $0x188] sm:$0xff]
        %v2533 = vld [vmem:[%s2406 + $0x190] sm:$0xff]
        %v2534 = vld [vmem:[%s2406 + $0x1a8] sm:$0xff]
        %v2535 = vld [vmem:[%s2406 + $0x1b0] sm:$0xff]
        %v2536 = vld [vmem:[%s2406 + $0x1c8] sm:$0xff]
        %v2537 = vld [vmem:[%s2406 + $0x1d0] sm:$0xff]
        %v2538 = vld [vmem:[%s2406 + $0x1e8] sm:$0xff]
        %v2539 = vld [vmem:[%s2406 + $0x1f0] sm:$0xff]
        %v2540 = vld [vmem:[%s6 + $0x7] sm:$0x1]
        %v2541 = vlaneseq
        %v2542 = vshrl.u32 %v2541, 7
        %v2543 = vsub.s32 0, %v2542
        %v2544 = vrot.slane %v2540, %v2543
        %v2545 = vmul.f32 %v2508, %v2544
        %v2546 = vmul.f32 %v2509, %v2544
        %v2547 = vmul.f32 %v2510, %v2544
        %v2548 = vmul.f32 %v2511, %v2544
        %v2549 = vmul.f32 %v2512, %v2544
        %v2550 = vmul.f32 %v2513, %v2544
        %v2551 = vmul.f32 %v2514, %v2544
        %v2552 = vmul.f32 %v2515, %v2544
        %v2553 = vmul.f32 %v2516, %v2544
        %v2554 = vmul.f32 %v2517, %v2544
        %v2555 = vmul.f32 %v2518, %v2544
        %v2556 = vmul.f32 %v2519, %v2544
        %v2557 = vmul.f32 %v2520, %v2544
        %v2558 = vmul.f32 %v2521, %v2544
        %v2559 = vmul.f32 %v2522, %v2544
        %v2560 = vmul.f32 %v2523, %v2544
        %v2561 = vmul.f32 %v2524, %v2544
        %v2562 = vmul.f32 %v2525, %v2544
        %v2563 = vmul.f32 %v2526, %v2544
        %v2564 = vmul.f32 %v2527, %v2544
        %v2565 = vmul.f32 %v2528, %v2544
        %v2566 = vmul.f32 %v2529, %v2544
        %v2567 = vmul.f32 %v2530, %v2544
        %v2568 = vmul.f32 %v2531, %v2544
        %v2569 = vmul.f32 %v2532, %v2544
        %v2570 = vmul.f32 %v2533, %v2544
        %v2571 = vmul.f32 %v2534, %v2544
        %v2572 = vmul.f32 %v2535, %v2544
        %v2573 = vmul.f32 %v2536, %v2544
        %v2574 = vmul.f32 %v2537, %v2544
        %v2575 = vmul.f32 %v2538, %v2544
        %v2576 = vmul.f32 %v2539, %v2544
        %v2577 = vadd.f32 %v2476, %v2545
        %v2578 = vadd.f32 %v2477, %v2546
        %v2579 = vadd.f32 %v2478, %v2547
        %v2580 = vadd.f32 %v2479, %v2548
        %v2581 = vadd.f32 %v2480, %v2549
        %v2582 = vadd.f32 %v2481, %v2550
        %v2583 = vadd.f32 %v2482, %v2551
        %v2584 = vadd.f32 %v2483, %v2552
        %v2585 = vadd.f32 %v2484, %v2553
        %v2586 = vadd.f32 %v2485, %v2554
        %v2587 = vadd.f32 %v2486, %v2555
        %v2588 = vadd.f32 %v2487, %v2556
        %v2589 = vadd.f32 %v2488, %v2557
        %v2590 = vadd.f32 %v2489, %v2558
        %v2591 = vadd.f32 %v2490, %v2559
        %v2592 = vadd.f32 %v2491, %v2560
        %v2593 = vadd.f32 %v2492, %v2561
        %v2594 = vadd.f32 %v2493, %v2562
        %v2595 = vadd.f32 %v2494, %v2563
        %v2596 = vadd.f32 %v2495, %v2564
        %v2597 = vadd.f32 %v2496, %v2565
        %v2598 = vadd.f32 %v2497, %v2566
        %v2599 = vadd.f32 %v2498, %v2567
        %v2600 = vadd.f32 %v2499, %v2568
        %v2601 = vadd.f32 %v2500, %v2569
        %v2602 = vadd.f32 %v2501, %v2570
        %v2603 = vadd.f32 %v2502, %v2571
        %v2604 = vadd.f32 %v2503, %v2572
        %v2605 = vadd.f32 %v2504, %v2573
        %v2606 = vadd.f32 %v2505, %v2574
        %v2607 = vadd.f32 %v2506, %v2575
        %v2608 = vadd.f32 %v2507, %v2576
        %v2609 = vld [vmem:[%s2406 + $0x9] sm:$0xff]
        %v2610 = vld [vmem:[%s2406 + $0x11] sm:$0xff]
        %v2611 = vld [vmem:[%s2406 + $0x29] sm:$0xff]
        %v2612 = vld [vmem:[%s2406 + $0x31] sm:$0xff]
        %v2613 = vld [vmem:[%s2406 + $0x49] sm:$0xff]
        %v2614 = vld [vmem:[%s2406 + $0x51] sm:$0xff]
        %v2615 = vld [vmem:[%s2406 + $0x69] sm:$0xff]
        %v2616 = vld [vmem:[%s2406 + $0x71] sm:$0xff]
        %v2617 = vld [vmem:[%s2406 + $0x89] sm:$0xff]
        %v2618 = vld [vmem:[%s2406 + $0x91] sm:$0xff]
        %v2619 = vld [vmem:[%s2406 + $0xa9] sm:$0xff]
        %v2620 = vld [vmem:[%s2406 + $0xb1] sm:$0xff]
        %v2621 = vld [vmem:[%s2406 + $0xc9] sm:$0xff]
        %v2622 = vld [vmem:[%s2406 + $0xd1] sm:$0xff]
        %v2623 = vld [vmem:[%s2406 + $0xe9] sm:$0xff]
        %v2624 = vld [vmem:[%s2406 + $0xf1] sm:$0xff]
        %v2625 = vld [vmem:[%s2406 + $0x109] sm:$0xff]
        %v2626 = vld [vmem:[%s2406 + $0x111] sm:$0xff]
        %v2627 = vld [vmem:[%s2406 + $0x129] sm:$0xff]
        %v2628 = vld [vmem:[%s2406 + $0x131] sm:$0xff]
        %v2629 = vld [vmem:[%s2406 + $0x149] sm:$0xff]
        %v2630 = vld [vmem:[%s2406 + $0x151] sm:$0xff]
        %v2631 = vld [vmem:[%s2406 + $0x169] sm:$0xff]
        %v2632 = vld [vmem:[%s2406 + $0x171] sm:$0xff]
        %v2633 = vld [vmem:[%s2406 + $0x189] sm:$0xff]
        %v2634 = vld [vmem:[%s2406 + $0x191] sm:$0xff]
        %v2635 = vld [vmem:[%s2406 + $0x1a9] sm:$0xff]
        %v2636 = vld [vmem:[%s2406 + $0x1b1] sm:$0xff]
        %v2637 = vld [vmem:[%s2406 + $0x1c9] sm:$0xff]
        %v2638 = vld [vmem:[%s2406 + $0x1d1] sm:$0xff]
        %v2639 = vld [vmem:[%s2406 + $0x1e9] sm:$0xff]
        %v2640 = vld [vmem:[%s2406 + $0x1f1] sm:$0xff]
        %v2641 = vld [vmem:[%s6 + $0x8] sm:$0x1]
        %v2642 = vlaneseq
        %v2643 = vshrl.u32 %v2642, 7
        %v2644 = vsub.s32 0, %v2643
        %v2645 = vrot.slane %v2641, %v2644
        %v2646 = vmul.f32 %v2609, %v2645
        %v2647 = vmul.f32 %v2610, %v2645
        %v2648 = vmul.f32 %v2611, %v2645
        %v2649 = vmul.f32 %v2612, %v2645
        %v2650 = vmul.f32 %v2613, %v2645
        %v2651 = vmul.f32 %v2614, %v2645
        %v2652 = vmul.f32 %v2615, %v2645
        %v2653 = vmul.f32 %v2616, %v2645
        %v2654 = vmul.f32 %v2617, %v2645
        %v2655 = vmul.f32 %v2618, %v2645
        %v2656 = vmul.f32 %v2619, %v2645
        %v2657 = vmul.f32 %v2620, %v2645
        %v2658 = vmul.f32 %v2621, %v2645
        %v2659 = vmul.f32 %v2622, %v2645
        %v2660 = vmul.f32 %v2623, %v2645
        %v2661 = vmul.f32 %v2624, %v2645
        %v2662 = vmul.f32 %v2625, %v2645
        %v2663 = vmul.f32 %v2626, %v2645
        %v2664 = vmul.f32 %v2627, %v2645
        %v2665 = vmul.f32 %v2628, %v2645
        %v2666 = vmul.f32 %v2629, %v2645
        %v2667 = vmul.f32 %v2630, %v2645
        %v2668 = vmul.f32 %v2631, %v2645
        %v2669 = vmul.f32 %v2632, %v2645
        %v2670 = vmul.f32 %v2633, %v2645
        %v2671 = vmul.f32 %v2634, %v2645
        %v2672 = vmul.f32 %v2635, %v2645
        %v2673 = vmul.f32 %v2636, %v2645
        %v2674 = vmul.f32 %v2637, %v2645
        %v2675 = vmul.f32 %v2638, %v2645
        %v2676 = vmul.f32 %v2639, %v2645
        %v2677 = vmul.f32 %v2640, %v2645
        %v2678 = vadd.f32 %v2577, %v2646
        %v2679 = vadd.f32 %v2578, %v2647
        %v2680 = vadd.f32 %v2579, %v2648
        %v2681 = vadd.f32 %v2580, %v2649
        %v2682 = vadd.f32 %v2581, %v2650
        %v2683 = vadd.f32 %v2582, %v2651
        %v2684 = vadd.f32 %v2583, %v2652
        %v2685 = vadd.f32 %v2584, %v2653
        %v2686 = vadd.f32 %v2585, %v2654
        %v2687 = vadd.f32 %v2586, %v2655
        %v2688 = vadd.f32 %v2587, %v2656
        %v2689 = vadd.f32 %v2588, %v2657
        %v2690 = vadd.f32 %v2589, %v2658
        %v2691 = vadd.f32 %v2590, %v2659
        %v2692 = vadd.f32 %v2591, %v2660
        %v2693 = vadd.f32 %v2592, %v2661
        %v2694 = vadd.f32 %v2593, %v2662
        %v2695 = vadd.f32 %v2594, %v2663
        %v2696 = vadd.f32 %v2595, %v2664
        %v2697 = vadd.f32 %v2596, %v2665
        %v2698 = vadd.f32 %v2597, %v2666
        %v2699 = vadd.f32 %v2598, %v2667
        %v2700 = vadd.f32 %v2599, %v2668
        %v2701 = vadd.f32 %v2600, %v2669
        %v2702 = vadd.f32 %v2601, %v2670
        %v2703 = vadd.f32 %v2602, %v2671
        %v2704 = vadd.f32 %v2603, %v2672
        %v2705 = vadd.f32 %v2604, %v2673
        %v2706 = vadd.f32 %v2605, %v2674
        %v2707 = vadd.f32 %v2606, %v2675
        %v2708 = vadd.f32 %v2607, %v2676
        %v2709 = vadd.f32 %v2608, %v2677
        %v2710 = vpack.c.bf16 %v2679, %v2678
        %v2711 = vpack.c.bf16 %v2681, %v2680
        %v2712 = vpack.c.bf16 %v2683, %v2682
        %v2713 = vpack.c.bf16 %v2685, %v2684
        %v2714 = vpack.c.bf16 %v2687, %v2686
        %v2715 = vpack.c.bf16 %v2689, %v2688
        %v2716 = vpack.c.bf16 %v2691, %v2690
        %v2717 = vpack.c.bf16 %v2693, %v2692
        %v2718 = vpack.c.bf16 %v2695, %v2694
        %v2719 = vpack.c.bf16 %v2697, %v2696
        %v2720 = vpack.c.bf16 %v2699, %v2698
        %v2721 = vpack.c.bf16 %v2701, %v2700
        %v2722 = vpack.c.bf16 %v2703, %v2702
        %v2723 = vpack.c.bf16 %v2705, %v2704
        %v2724 = vpack.c.bf16 %v2707, %v2706
        %v2725 = vpack.c.bf16 %v2709, %v2708
        %v2726 = vld [vmem:[%s7] sm:$0xf]
        %v2727 = vld [vmem:[%s8] sm:$0x1]
        %v2729 = vlaneseq
        %v2730 = vshrl.u32 %v2729, 7
        %v2731 = vsub.s32 0, %v2730
        %v2732 = vrot.slane %v2727, %v2731
        %v2735 = vsel %vm1725, %v2710, 0
        %v2738 = vsel %vm1725, %v2711, 0
        %v2741 = vsel %vm1725, %v2712, 0
        %v2744 = vsel %vm1725, %v2713, 0
        %v2747 = vsel %vm1725, %v2714, 0
        %v2750 = vsel %vm1725, %v2715, 0
        %v2753 = vsel %vm1725, %v2716, 0
        %v2756 = vsel %vm1725, %v2717, 0
        %v2759 = vsel %vm1725, %v2718, 0
        %v2762 = vsel %vm1725, %v2719, 0
        %v2765 = vsel %vm1725, %v2720, 0
        %v2768 = vsel %vm1725, %v2721, 0
        %v2771 = vsel %vm1725, %v2722, 0
        %v2774 = vsel %vm1725, %v2723, 0
        %v2777 = vsel %vm1725, %v2724, 0
        %v2780 = vsel %vm1725, %v2725, 0
        %vm2782 = vcmask 1043456
        %v2784 = vsel %vm2782, %v2726, 0
        %2786 = vmatprep.subr.bf16.mxu0 0
        %2787 = vmatpush1.bf16.msra.mxu0 %v2784
        %2788 = vmatprep.subr.bf16.mxu0 0
        %2789 = vmatpush1.bf16.msra.mxu0 0
        %2790 = vmatprep.subr.bf16.mxu0 0
        %2791 = vmatpush1.bf16.msra.mxu0 0
        %2792 = vmatprep.subr.bf16.mxu0 0
        %2793 = vmatpush1.bf16.msra.mxu0 0
        %2794 = vmatprep.subr.bf16.mxu0 0
        %2795 = vmatpush1.bf16.msra.mxu0 0
        %2796 = vmatprep.subr.bf16.mxu0 0
        %2797 = vmatpush1.bf16.msra.mxu0 0
        %2798 = vmatprep.subr.bf16.mxu0 0
        %2799 = vmatpush1.bf16.msra.mxu0 0
        %2800 = vmatprep.subr.bf16.mxu0 0
        %2801 = vmatpush1.bf16.msra.mxu0 0
        %2802 = vmatprep.subr.bf16.mxu0 0
        %2803 = vmatpush1.bf16.msra.mxu0 0
        %2804 = vmatprep.subr.bf16.mxu0 0
        %2805 = vmatpush1.bf16.msra.mxu0 0
        %2806 = vmatprep.subr.bf16.mxu0 0
        %2807 = vmatpush1.bf16.msra.mxu0 0
        %2808 = vmatprep.subr.bf16.mxu0 0
        %2809 = vmatpush1.bf16.msra.mxu0 0
        %2810 = vmatprep.subr.bf16.mxu0 0
        %2811 = vmatpush1.bf16.msra.mxu0 0
        %2812 = vmatprep.subr.bf16.mxu0 0
        %2813 = vmatpush1.bf16.msra.mxu0 0
        %2814 = vmatprep.subr.bf16.mxu0 0
        %2815 = vmatpush1.bf16.msra.mxu0 0
        %2816 = vmatprep.subr.bf16.mxu0 0
        %2817 = vmatpush1.bf16.msra.mxu0 0
        %2818 = vmatprep.mubr.bf16.mxu0 0
        %2819 = vmatmul.mubr.bf16.gmra.mrb[0].mxu0 %v2735
        %v2820 = vpop.f32.mrb[0].mxu0
        %v2821 = vadd.f32 %v2732, %v2820
        %v2822 = vpop.f32.mrb[0].mxu0
        %v2823 = vpop.f32.mrb[0].mxu0
        %v2824 = vadd.f32 %v2732, %v2823
        %v2825 = vpop.f32.mrb[0].mxu0
        %2826 = vmatprep.mubr.bf16.mxu0 0
        %2827 = vmatmul.mubr.bf16.gmra.mrb[0].mxu0 %v2738
        %v2828 = vpop.f32.mrb[0].mxu0
        %v2829 = vadd.f32 %v2732, %v2828
        %v2830 = vpop.f32.mrb[0].mxu0
        %v2831 = vpop.f32.mrb[0].mxu0
        %v2832 = vadd.f32 %v2732, %v2831
        %v2833 = vpop.f32.mrb[0].mxu0
        %2834 = vmatprep.mubr.bf16.mxu0 0
        %2835 = vmatmul.mubr.bf16.gmra.mrb[0].mxu0 %v2741
        %v2836 = vpop.f32.mrb[0].mxu0
        %v2837 = vadd.f32 %v2732, %v2836
        %v2838 = vpop.f32.mrb[0].mxu0
        %v2839 = vpop.f32.mrb[0].mxu0
        %v2840 = vadd.f32 %v2732, %v2839
        %v2841 = vpop.f32.mrb[0].mxu0
        %2842 = vmatprep.mubr.bf16.mxu0 0
        %2843 = vmatmul.mubr.bf16.gmra.mrb[0].mxu0 %v2744
        %v2844 = vpop.f32.mrb[0].mxu0
        %v2845 = vadd.f32 %v2732, %v2844
        %v2846 = vpop.f32.mrb[0].mxu0
        %v2847 = vpop.f32.mrb[0].mxu0
        %v2848 = vadd.f32 %v2732, %v2847
        %v2849 = vpop.f32.mrb[0].mxu0
        %2850 = vmatprep.mubr.bf16.mxu0 0
        %2851 = vmatmul.mubr.bf16.gmra.mrb[0].mxu0 %v2747
        %v2852 = vpop.f32.mrb[0].mxu0
        %v2853 = vadd.f32 %v2732, %v2852
        %v2854 = vpop.f32.mrb[0].mxu0
        %v2855 = vpop.f32.mrb[0].mxu0
        %v2856 = vadd.f32 %v2732, %v2855
        %v2857 = vpop.f32.mrb[0].mxu0
        %2858 = vmatprep.mubr.bf16.mxu0 0
        %2859 = vmatmul.mubr.bf16.gmra.mrb[0].mxu0 %v2750
        %v2860 = vpop.f32.mrb[0].mxu0
        %v2861 = vadd.f32 %v2732, %v2860
        %v2862 = vpop.f32.mrb[0].mxu0
        %v2863 = vpop.f32.mrb[0].mxu0
        %v2864 = vadd.f32 %v2732, %v2863
        %v2865 = vpop.f32.mrb[0].mxu0
        %2866 = vmatprep.mubr.bf16.mxu0 0
        %2867 = vmatmul.mubr.bf16.gmra.mrb[0].mxu0 %v2753
        %v2868 = vpop.f32.mrb[0].mxu0
        %v2869 = vadd.f32 %v2732, %v2868
        %v2870 = vpop.f32.mrb[0].mxu0
        %v2871 = vpop.f32.mrb[0].mxu0
        %v2872 = vadd.f32 %v2732, %v2871
        %v2873 = vpop.f32.mrb[0].mxu0
        %2874 = vmatprep.mubr.bf16.mxu0 0
        %2875 = vmatmul.mubr.bf16.gmra.mrb[0].mxu0 %v2756
        %v2876 = vpop.f32.mrb[0].mxu0
        %v2877 = vadd.f32 %v2732, %v2876
        %v2878 = vpop.f32.mrb[0].mxu0
        %v2879 = vpop.f32.mrb[0].mxu0
        %v2880 = vadd.f32 %v2732, %v2879
        %v2881 = vpop.f32.mrb[0].mxu0
        %2882 = vmatprep.mubr.bf16.mxu0 0
        %2883 = vmatmul.mubr.bf16.gmra.mrb[0].mxu0 %v2759
        %v2884 = vpop.f32.mrb[0].mxu0
        %v2885 = vadd.f32 %v2732, %v2884
        %v2886 = vpop.f32.mrb[0].mxu0
        %v2887 = vpop.f32.mrb[0].mxu0
        %v2888 = vadd.f32 %v2732, %v2887
        %v2889 = vpop.f32.mrb[0].mxu0
        %2890 = vmatprep.mubr.bf16.mxu0 0
        %2891 = vmatmul.mubr.bf16.gmra.mrb[0].mxu0 %v2762
        %v2892 = vpop.f32.mrb[0].mxu0
        %v2893 = vadd.f32 %v2732, %v2892
        %v2894 = vpop.f32.mrb[0].mxu0
        %v2895 = vpop.f32.mrb[0].mxu0
        %v2896 = vadd.f32 %v2732, %v2895
        %v2897 = vpop.f32.mrb[0].mxu0
        %2898 = vmatprep.mubr.bf16.mxu0 0
        %2899 = vmatmul.mubr.bf16.gmra.mrb[0].mxu0 %v2765
        %v2900 = vpop.f32.mrb[0].mxu0
        %v2901 = vadd.f32 %v2732, %v2900
        %v2902 = vpop.f32.mrb[0].mxu0
        %v2903 = vpop.f32.mrb[0].mxu0
        %v2904 = vadd.f32 %v2732, %v2903
        %v2905 = vpop.f32.mrb[0].mxu0
        %2906 = vmatprep.mubr.bf16.mxu0 0
        %2907 = vmatmul.mubr.bf16.gmra.mrb[0].mxu0 %v2768
        %v2908 = vpop.f32.mrb[0].mxu0
        %v2909 = vadd.f32 %v2732, %v2908
        %v2910 = vpop.f32.mrb[0].mxu0
        %v2911 = vpop.f32.mrb[0].mxu0
        %v2912 = vadd.f32 %v2732, %v2911
        %v2913 = vpop.f32.mrb[0].mxu0
        %2914 = vmatprep.mubr.bf16.mxu0 0
        %2915 = vmatmul.mubr.bf16.gmra.mrb[0].mxu0 %v2771
        %v2916 = vpop.f32.mrb[0].mxu0
        %v2917 = vadd.f32 %v2732, %v2916
        %v2918 = vpop.f32.mrb[0].mxu0
        %v2919 = vpop.f32.mrb[0].mxu0
        %v2920 = vadd.f32 %v2732, %v2919
        %v2921 = vpop.f32.mrb[0].mxu0
        %2922 = vmatprep.mubr.bf16.mxu0 0
        %2923 = vmatmul.mubr.bf16.gmra.mrb[0].mxu0 %v2774
        %v2924 = vpop.f32.mrb[0].mxu0
        %v2925 = vadd.f32 %v2732, %v2924
        %v2926 = vpop.f32.mrb[0].mxu0
        %v2927 = vpop.f32.mrb[0].mxu0
        %v2928 = vadd.f32 %v2732, %v2927
        %v2929 = vpop.f32.mrb[0].mxu0
        %2930 = vmatprep.mubr.bf16.mxu0 0
        %2931 = vmatmul.mubr.bf16.gmra.mrb[0].mxu0 %v2777
        %v2932 = vpop.f32.mrb[0].mxu0
        %v2933 = vadd.f32 %v2732, %v2932
        %v2934 = vpop.f32.mrb[0].mxu0
        %v2935 = vpop.f32.mrb[0].mxu0
        %v2936 = vadd.f32 %v2732, %v2935
        %v2937 = vpop.f32.mrb[0].mxu0
        %2938 = vmatprep.mubr.bf16.mxu0 0
        %2939 = vmatmul.mubr.bf16.gmra.mrb[0].mxu0 %v2780
        %v2940 = vpop.f32.mrb[0].mxu0
        %v2941 = vadd.f32 %v2732, %v2940
        %v2942 = vpop.f32.mrb[0].mxu0
        %v2943 = vpop.f32.mrb[0].mxu0
        %v2944 = vadd.f32 %v2732, %v2943
        %v2945 = vpop.f32.mrb[0].mxu0
        %2946 = vdwg.mxu0
        %2947 = vst.msk [vmem:[#allocation3] sm:$0xff] %vm1725, -inf
        %2948 = vst.msk [vmem:[#allocation3 + $0x8] sm:$0xff] %vm1725, -inf
        %2949 = vst.msk [vmem:[#allocation3 + $0x10] sm:$0xff] %vm1725, -inf
        %2950 = vst.msk [vmem:[#allocation3 + $0x18] sm:$0x3] %vm1729, -inf
        %2951 = vst.msk [vmem:[#allocation3 + $0x20] sm:$0xff] %vm1725, -inf
        %2952 = vst.msk [vmem:[#allocation3 + $0x28] sm:$0xff] %vm1725, -inf
        %2953 = vst.msk [vmem:[#allocation3 + $0x30] sm:$0xff] %vm1725, -inf
        %2954 = vst.msk [vmem:[#allocation3 + $0x38] sm:$0x3] %vm1729, -inf
        %2955 = vst.msk [vmem:[#allocation3 + $0x40] sm:$0xff] %vm1725, -inf
        %2956 = vst.msk [vmem:[#allocation3 + $0x48] sm:$0xff] %vm1725, -inf
        %2957 = vst.msk [vmem:[#allocation3 + $0x50] sm:$0xff] %vm1725, -inf
        %2958 = vst.msk [vmem:[#allocation3 + $0x58] sm:$0x3] %vm1729, -inf
        %2959 = vst.msk [vmem:[#allocation3 + $0x60] sm:$0xff] %vm1725, -inf
        %2960 = vst.msk [vmem:[#allocation3 + $0x68] sm:$0xff] %vm1725, -inf
        %2961 = vst.msk [vmem:[#allocation3 + $0x70] sm:$0xff] %vm1725, -inf
        %2962 = vst.msk [vmem:[#allocation3 + $0x78] sm:$0x3] %vm1729, -inf
        %2963 = vst.msk [vmem:[#allocation3 + $0x80] sm:$0xff] %vm1725, -inf
        %2964 = vst.msk [vmem:[#allocation3 + $0x88] sm:$0xff] %vm1725, -inf
        %2965 = vst.msk [vmem:[#allocation3 + $0x90] sm:$0xff] %vm1725, -inf
        %2966 = vst.msk [vmem:[#allocation3 + $0x98] sm:$0x3] %vm1729, -inf
        %2967 = vst.msk [vmem:[#allocation3 + $0xa0] sm:$0xff] %vm1725, -inf
        %2968 = vst.msk [vmem:[#allocation3 + $0xa8] sm:$0xff] %vm1725, -inf
        %2969 = vst.msk [vmem:[#allocation3 + $0xb0] sm:$0xff] %vm1725, -inf
        %2970 = vst.msk [vmem:[#allocation3 + $0xb8] sm:$0x3] %vm1729, -inf
        %2971 = vst.msk [vmem:[#allocation3 + $0xc0] sm:$0xff] %vm1725, -inf
        %2972 = vst.msk [vmem:[#allocation3 + $0xc8] sm:$0xff] %vm1725, -inf
        %2973 = vst.msk [vmem:[#allocation3 + $0xd0] sm:$0xff] %vm1725, -inf
        %2974 = vst.msk [vmem:[#allocation3 + $0xd8] sm:$0x3] %vm1729, -inf
        %2975 = vst.msk [vmem:[#allocation3 + $0xe0] sm:$0xff] %vm1725, -inf
        %2976 = vst.msk [vmem:[#allocation3 + $0xe8] sm:$0xff] %vm1725, -inf
        %2977 = vst.msk [vmem:[#allocation3 + $0xf0] sm:$0xff] %vm1725, -inf
        %2978 = vst.msk [vmem:[#allocation3 + $0xf8] sm:$0x3] %vm1729, -inf
        %2979 = vst.msk [vmem:[#allocation3 + $0x100] sm:$0xff] %vm1725, -inf
        %2980 = vst.msk [vmem:[#allocation3 + $0x108] sm:$0xff] %vm1725, -inf
        %2981 = vst.msk [vmem:[#allocation3 + $0x110] sm:$0xff] %vm1725, -inf
        %2982 = vst.msk [vmem:[#allocation3 + $0x118] sm:$0x3] %vm1729, -inf
        %2983 = vst.msk [vmem:[#allocation3 + $0x120] sm:$0xff] %vm1725, -inf
        %2984 = vst.msk [vmem:[#allocation3 + $0x128] sm:$0xff] %vm1725, -inf
        %2985 = vst.msk [vmem:[#allocation3 + $0x130] sm:$0xff] %vm1725, -inf
        %2986 = vst.msk [vmem:[#allocation3 + $0x138] sm:$0x3] %vm1729, -inf
        %2987 = vst.msk [vmem:[#allocation3 + $0x140] sm:$0xff] %vm1725, -inf
        %2988 = vst.msk [vmem:[#allocation3 + $0x148] sm:$0xff] %vm1725, -inf
        %2989 = vst.msk [vmem:[#allocation3 + $0x150] sm:$0xff] %vm1725, -inf
        %2990 = vst.msk [vmem:[#allocation3 + $0x158] sm:$0x3] %vm1729, -inf
        %2991 = vst.msk [vmem:[#allocation3 + $0x160] sm:$0xff] %vm1725, -inf
        %2992 = vst.msk [vmem:[#allocation3 + $0x168] sm:$0xff] %vm1725, -inf
        %2993 = vst.msk [vmem:[#allocation3 + $0x170] sm:$0xff] %vm1725, -inf
        %2994 = vst.msk [vmem:[#allocation3 + $0x178] sm:$0x3] %vm1729, -inf
        %2995 = vst.msk [vmem:[#allocation3 + $0x180] sm:$0xff] %vm1725, -inf
        %2996 = vst.msk [vmem:[#allocation3 + $0x188] sm:$0xff] %vm1725, -inf
        %2997 = vst.msk [vmem:[#allocation3 + $0x190] sm:$0xff] %vm1725, -inf
        %2998 = vst.msk [vmem:[#allocation3 + $0x198] sm:$0x3] %vm1729, -inf
        %2999 = vst.msk [vmem:[#allocation3 + $0x1a0] sm:$0xff] %vm1725, -inf
        %3000 = vst.msk [vmem:[#allocation3 + $0x1a8] sm:$0xff] %vm1725, -inf
        %3001 = vst.msk [vmem:[#allocation3 + $0x1b0] sm:$0xff] %vm1725, -inf
        %3002 = vst.msk [vmem:[#allocation3 + $0x1b8] sm:$0x3] %vm1729, -inf
        %3003 = vst.msk [vmem:[#allocation3 + $0x1c0] sm:$0xff] %vm1725, -inf
        %3004 = vst.msk [vmem:[#allocation3 + $0x1c8] sm:$0xff] %vm1725, -inf
        %3005 = vst.msk [vmem:[#allocation3 + $0x1d0] sm:$0xff] %vm1725, -inf
        %3006 = vst.msk [vmem:[#allocation3 + $0x1d8] sm:$0x3] %vm1729, -inf
        %3007 = vst.msk [vmem:[#allocation3 + $0x1e0] sm:$0xff] %vm1725, -inf
        %3008 = vst.msk [vmem:[#allocation3 + $0x1e8] sm:$0xff] %vm1725, -inf
        %3009 = vst.msk [vmem:[#allocation3 + $0x1f0] sm:$0xff] %vm1725, -inf
        %3010 = vst.msk [vmem:[#allocation3 + $0x1f8] sm:$0x3] %vm1729, -inf
        %3011 = vst.msk [vmem:[#allocation3 + $0x200] sm:$0xff] %vm1725, -inf
        %3012 = vst.msk [vmem:[#allocation3 + $0x208] sm:$0xff] %vm1725, -inf
        %3013 = vst.msk [vmem:[#allocation3 + $0x210] sm:$0xff] %vm1725, -inf
        %3014 = vst.msk [vmem:[#allocation3 + $0x218] sm:$0x3] %vm1729, -inf
        %3015 = vst.msk [vmem:[#allocation3 + $0x220] sm:$0xff] %vm1725, -inf
        %3016 = vst.msk [vmem:[#allocation3 + $0x228] sm:$0xff] %vm1725, -inf
        %3017 = vst.msk [vmem:[#allocation3 + $0x230] sm:$0xff] %vm1725, -inf
        %3018 = vst.msk [vmem:[#allocation3 + $0x238] sm:$0x3] %vm1729, -inf
        %3019 = vst.msk [vmem:[%s1799 + $0x8] sm:$0xff] %vm1725, %v2821
        %3020 = vst.msk [vmem:[%s1799 + $0x10] sm:$0xff] %vm1725, %v2824
        %3021 = vst.msk [vmem:[%s1799 + $0x28] sm:$0xff] %vm1725, %v2829
        %3022 = vst.msk [vmem:[%s1799 + $0x30] sm:$0xff] %vm1725, %v2832
        %3023 = vst.msk [vmem:[%s1799 + $0x48] sm:$0xff] %vm1725, %v2837
        %3024 = vst.msk [vmem:[%s1799 + $0x50] sm:$0xff] %vm1725, %v2840
        %3025 = vst.msk [vmem:[%s1799 + $0x68] sm:$0xff] %vm1725, %v2845
        %3026 = vst.msk [vmem:[%s1799 + $0x70] sm:$0xff] %vm1725, %v2848
        %3027 = vst.msk [vmem:[%s1799 + $0x88] sm:$0xff] %vm1725, %v2853
        %3028 = vst.msk [vmem:[%s1799 + $0x90] sm:$0xff] %vm1725, %v2856
        %3029 = vst.msk [vmem:[%s1799 + $0xa8] sm:$0xff] %vm1725, %v2861
        %3030 = vst.msk [vmem:[%s1799 + $0xb0] sm:$0xff] %vm1725, %v2864
        %3031 = vst.msk [vmem:[%s1799 + $0xc8] sm:$0xff] %vm1725, %v2869
        %3032 = vst.msk [vmem:[%s1799 + $0xd0] sm:$0xff] %vm1725, %v2872
        %3033 = vst.msk [vmem:[%s1799 + $0xe8] sm:$0xff] %vm1725, %v2877
        %3034 = vst.msk [vmem:[%s1799 + $0xf0] sm:$0xff] %vm1725, %v2880
        %3035 = vst.msk [vmem:[%s1799 + $0x108] sm:$0xff] %vm1725, %v2885
        %3036 = vst.msk [vmem:[%s1799 + $0x110] sm:$0xff] %vm1725, %v2888
        %3037 = vst.msk [vmem:[%s1799 + $0x128] sm:$0xff] %vm1725, %v2893
        %3038 = vst.msk [vmem:[%s1799 + $0x130] sm:$0xff] %vm1725, %v2896
        %3039 = vst.msk [vmem:[%s1799 + $0x148] sm:$0xff] %vm1725, %v2901
        %3040 = vst.msk [vmem:[%s1799 + $0x150] sm:$0xff] %vm1725, %v2904
        %3041 = vst.msk [vmem:[%s1799 + $0x168] sm:$0xff] %vm1725, %v2909
        %3042 = vst.msk [vmem:[%s1799 + $0x170] sm:$0xff] %vm1725, %v2912
        %3043 = vst.msk [vmem:[%s1799 + $0x188] sm:$0xff] %vm1725, %v2917
        %3044 = vst.msk [vmem:[%s1799 + $0x190] sm:$0xff] %vm1725, %v2920
        %3045 = vst.msk [vmem:[%s1799 + $0x1a8] sm:$0xff] %vm1725, %v2925
        %3046 = vst.msk [vmem:[%s1799 + $0x1b0] sm:$0xff] %vm1725, %v2928
        %3047 = vst.msk [vmem:[%s1799 + $0x1c8] sm:$0xff] %vm1725, %v2933
        %3048 = vst.msk [vmem:[%s1799 + $0x1d0] sm:$0xff] %vm1725, %v2936
        %3049 = vst.msk [vmem:[%s1799 + $0x1e8] sm:$0xff] %vm1725, %v2941
        %3050 = vst.msk [vmem:[%s1799 + $0x1f0] sm:$0xff] %vm1725, %v2944
        %s3051 = scalar_lea.vmem [#allocation3], 7
        %v3052 = vld [vmem:[%s3051] ss:$2 sm:$0xff]
        %s3053 = scalar_lea.vmem [#allocation3], 71
        %v3054 = vld [vmem:[%s3053] ss:$2 sm:$0xff]
        %s3055 = scalar_lea.vmem [#allocation3], 135
        %v3056 = vld [vmem:[%s3055] ss:$2 sm:$0xff]
        %s3057 = scalar_lea.vmem [#allocation3], 199
        %v3058 = vld [vmem:[%s3057] ss:$2 sm:$0xff]
        %s3059 = scalar_lea.vmem [#allocation3], 263
        %v3060 = vld [vmem:[%s3059] ss:$2 sm:$0xff]
        %s3061 = scalar_lea.vmem [#allocation3], 327
        %v3062 = vld [vmem:[%s3061] ss:$2 sm:$0xff]
        %s3063 = scalar_lea.vmem [#allocation3], 391
        %v3064 = vld [vmem:[%s3063] ss:$2 sm:$0xff]
        %s3065 = scalar_lea.vmem [#allocation3], 455
        %v3066 = vld [vmem:[%s3065] ss:$2 sm:$0xff]
        %s3067 = scalar_lea.vmem [#allocation3], 8
        %v3068 = vld [vmem:[%s3067] ss:$2 sm:$0xff]
        %s3069 = scalar_lea.vmem [#allocation3], 72
        %v3070 = vld [vmem:[%s3069] ss:$2 sm:$0xff]
        %s3071 = scalar_lea.vmem [#allocation3], 136
        %v3072 = vld [vmem:[%s3071] ss:$2 sm:$0xff]
        %s3073 = scalar_lea.vmem [#allocation3], 200
        %v3074 = vld [vmem:[%s3073] ss:$2 sm:$0xff]
        %s3075 = scalar_lea.vmem [#allocation3], 264
        %v3076 = vld [vmem:[%s3075] ss:$2 sm:$0xff]
        %s3077 = scalar_lea.vmem [#allocation3], 328
        %v3078 = vld [vmem:[%s3077] ss:$2 sm:$0xff]
        %s3079 = scalar_lea.vmem [#allocation3], 392
        %v3080 = vld [vmem:[%s3079] ss:$2 sm:$0xff]
        %s3081 = scalar_lea.vmem [#allocation3], 456
        %v3082 = vld [vmem:[%s3081] ss:$2 sm:$0xff]
        %v3083 = vmax.f32 %v3052, %v3068
        %v3084 = vmax.f32 %v3054, %v3070
        %v3085 = vmax.f32 %v3056, %v3072
        %v3086 = vmax.f32 %v3058, %v3074
        %v3087 = vmax.f32 %v3060, %v3076
        %v3088 = vmax.f32 %v3062, %v3078
        %v3089 = vmax.f32 %v3064, %v3080
        %v3090 = vmax.f32 %v3066, %v3082
        %s3091 = scalar_lea.vmem [#allocation3], 9
        %v3092 = vld [vmem:[%s3091] ss:$2 sm:$0xff]
        %s3093 = scalar_lea.vmem [#allocation3], 73
        %v3094 = vld [vmem:[%s3093] ss:$2 sm:$0xff]
        %s3095 = scalar_lea.vmem [#allocation3], 137
        %v3096 = vld [vmem:[%s3095] ss:$2 sm:$0xff]
        %s3097 = scalar_lea.vmem [#allocation3], 201
        %v3098 = vld [vmem:[%s3097] ss:$2 sm:$0xff]
        %s3099 = scalar_lea.vmem [#allocation3], 265
        %v3100 = vld [vmem:[%s3099] ss:$2 sm:$0xff]
        %s3101 = scalar_lea.vmem [#allocation3], 329
        %v3102 = vld [vmem:[%s3101] ss:$2 sm:$0xff]
        %s3103 = scalar_lea.vmem [#allocation3], 393
        %v3104 = vld [vmem:[%s3103] ss:$2 sm:$0xff]
        %s3105 = scalar_lea.vmem [#allocation3], 457
        %v3106 = vld [vmem:[%s3105] ss:$2 sm:$0xff]
        %v3107 = vmax.f32 %v3083, %v3092
        %v3108 = vmax.f32 %v3084, %v3094
        %v3109 = vmax.f32 %v3085, %v3096
        %v3110 = vmax.f32 %v3086, %v3098
        %v3111 = vmax.f32 %v3087, %v3100
        %v3112 = vmax.f32 %v3088, %v3102
        %v3113 = vmax.f32 %v3089, %v3104
        %v3114 = vmax.f32 %v3090, %v3106
        %s3115 = scalar_lea.vmem %s1799, 7 [#allocation3]
        %v3116 = vld [vmem:[%s3115] ss:$2 sm:$0xff]
        %s3117 = scalar_lea.vmem %s1799, 71 [#allocation3]
        %v3118 = vld [vmem:[%s3117] ss:$2 sm:$0xff]
        %s3119 = scalar_lea.vmem %s1799, 135 [#allocation3]
        %v3120 = vld [vmem:[%s3119] ss:$2 sm:$0xff]
        %s3121 = scalar_lea.vmem %s1799, 199 [#allocation3]
        %v3122 = vld [vmem:[%s3121] ss:$2 sm:$0xff]
        %s3123 = scalar_lea.vmem %s1799, 263 [#allocation3]
        %v3124 = vld [vmem:[%s3123] ss:$2 sm:$0xff]
        %s3125 = scalar_lea.vmem %s1799, 327 [#allocation3]
        %v3126 = vld [vmem:[%s3125] ss:$2 sm:$0xff]
        %s3127 = scalar_lea.vmem %s1799, 391 [#allocation3]
        %v3128 = vld [vmem:[%s3127] ss:$2 sm:$0xff]
        %s3129 = scalar_lea.vmem %s1799, 455 [#allocation3]
        %v3130 = vld [vmem:[%s3129] ss:$2 sm:$0xff]
        %v3131 = vmax.f32 %v3107, %v3116
        %v3132 = vmax.f32 %v3108, %v3118
        %v3133 = vmax.f32 %v3109, %v3120
        %v3134 = vmax.f32 %v3110, %v3122
        %v3135 = vmax.f32 %v3111, %v3124
        %v3136 = vmax.f32 %v3112, %v3126
        %v3137 = vmax.f32 %v3113, %v3128
        %v3138 = vmax.f32 %v3114, %v3130
        %s3139 = scalar_lea.vmem %s1799, 8 [#allocation3]
        %v3140 = vld [vmem:[%s3139] ss:$2 sm:$0xff]
        %s3141 = scalar_lea.vmem %s1799, 72 [#allocation3]
        %v3142 = vld [vmem:[%s3141] ss:$2 sm:$0xff]
        %s3143 = scalar_lea.vmem %s1799, 136 [#allocation3]
        %v3144 = vld [vmem:[%s3143] ss:$2 sm:$0xff]
        %s3145 = scalar_lea.vmem %s1799, 200 [#allocation3]
        %v3146 = vld [vmem:[%s3145] ss:$2 sm:$0xff]
        %s3147 = scalar_lea.vmem %s1799, 264 [#allocation3]
        %v3148 = vld [vmem:[%s3147] ss:$2 sm:$0xff]
        %s3149 = scalar_lea.vmem %s1799, 328 [#allocation3]
        %v3150 = vld [vmem:[%s3149] ss:$2 sm:$0xff]
        %s3151 = scalar_lea.vmem %s1799, 392 [#allocation3]
        %v3152 = vld [vmem:[%s3151] ss:$2 sm:$0xff]
        %s3153 = scalar_lea.vmem %s1799, 456 [#allocation3]
        %v3154 = vld [vmem:[%s3153] ss:$2 sm:$0xff]
        %v3155 = vmax.f32 %v3131, %v3140
        %v3156 = vmax.f32 %v3132, %v3142
        %v3157 = vmax.f32 %v3133, %v3144
        %v3158 = vmax.f32 %v3134, %v3146
        %v3159 = vmax.f32 %v3135, %v3148
        %v3160 = vmax.f32 %v3136, %v3150
        %v3161 = vmax.f32 %v3137, %v3152
        %v3162 = vmax.f32 %v3138, %v3154
        %s3163 = scalar_lea.vmem %s1799, 9 [#allocation3]
        %v3164 = vld [vmem:[%s3163] ss:$2 sm:$0xff]
        %s3165 = scalar_lea.vmem %s1799, 73 [#allocation3]
        %v3166 = vld [vmem:[%s3165] ss:$2 sm:$0xff]
        %s3167 = scalar_lea.vmem %s1799, 137 [#allocation3]
        %v3168 = vld [vmem:[%s3167] ss:$2 sm:$0xff]
        %s3169 = scalar_lea.vmem %s1799, 201 [#allocation3]
        %v3170 = vld [vmem:[%s3169] ss:$2 sm:$0xff]
        %s3171 = scalar_lea.vmem %s1799, 265 [#allocation3]
        %v3172 = vld [vmem:[%s3171] ss:$2 sm:$0xff]
        %s3173 = scalar_lea.vmem %s1799, 329 [#allocation3]
        %v3174 = vld [vmem:[%s3173] ss:$2 sm:$0xff]
        %s3175 = scalar_lea.vmem %s1799, 393 [#allocation3]
        %v3176 = vld [vmem:[%s3175] ss:$2 sm:$0xff]
        %s3177 = scalar_lea.vmem %s1799, 457 [#allocation3]
        %v3178 = vld [vmem:[%s3177] ss:$2 sm:$0xff]
        %v3179 = vmax.f32 %v3155, %v3164
        %v3180 = vmax.f32 %v3156, %v3166
        %v3181 = vmax.f32 %v3157, %v3168
        %v3182 = vmax.f32 %v3158, %v3170
        %v3183 = vmax.f32 %v3159, %v3172
        %v3184 = vmax.f32 %v3160, %v3174
        %v3185 = vmax.f32 %v3161, %v3176
        %v3186 = vmax.f32 %v3162, %v3178
        %s3187 = scalar_lea.vmem %s2406, 7 [#allocation3]
        %v3188 = vld [vmem:[%s3187] ss:$2 sm:$0xff]
        %s3189 = scalar_lea.vmem %s2406, 71 [#allocation3]
        %v3190 = vld [vmem:[%s3189] ss:$2 sm:$0xff]
        %s3191 = scalar_lea.vmem %s2406, 135 [#allocation3]
        %v3192 = vld [vmem:[%s3191] ss:$2 sm:$0xff]
        %s3193 = scalar_lea.vmem %s2406, 199 [#allocation3]
        %v3194 = vld [vmem:[%s3193] ss:$2 sm:$0xff]
        %s3195 = scalar_lea.vmem %s2406, 263 [#allocation3]
        %v3196 = vld [vmem:[%s3195] ss:$2 sm:$0xff]
        %s3197 = scalar_lea.vmem %s2406, 327 [#allocation3]
        %v3198 = vld [vmem:[%s3197] ss:$2 sm:$0xff]
        %s3199 = scalar_lea.vmem %s2406, 391 [#allocation3]
        %v3200 = vld [vmem:[%s3199] ss:$2 sm:$0xff]
        %s3201 = scalar_lea.vmem %s2406, 455 [#allocation3]
        %v3202 = vld [vmem:[%s3201] ss:$2 sm:$0xff]
        %v3203 = vmax.f32 %v3179, %v3188
        %v3204 = vmax.f32 %v3180, %v3190
        %v3205 = vmax.f32 %v3181, %v3192
        %v3206 = vmax.f32 %v3182, %v3194
        %v3207 = vmax.f32 %v3183, %v3196
        %v3208 = vmax.f32 %v3184, %v3198
        %v3209 = vmax.f32 %v3185, %v3200
        %v3210 = vmax.f32 %v3186, %v3202
        %s3211 = scalar_lea.vmem %s2406, 8 [#allocation3]
        %v3212 = vld [vmem:[%s3211] ss:$2 sm:$0xff]
        %s3213 = scalar_lea.vmem %s2406, 72 [#allocation3]
        %v3214 = vld [vmem:[%s3213] ss:$2 sm:$0xff]
        %s3215 = scalar_lea.vmem %s2406, 136 [#allocation3]
        %v3216 = vld [vmem:[%s3215] ss:$2 sm:$0xff]
        %s3217 = scalar_lea.vmem %s2406, 200 [#allocation3]
        %v3218 = vld [vmem:[%s3217] ss:$2 sm:$0xff]
        %s3219 = scalar_lea.vmem %s2406, 264 [#allocation3]
        %v3220 = vld [vmem:[%s3219] ss:$2 sm:$0xff]
        %s3221 = scalar_lea.vmem %s2406, 328 [#allocation3]
        %v3222 = vld [vmem:[%s3221] ss:$2 sm:$0xff]
        %s3223 = scalar_lea.vmem %s2406, 392 [#allocation3]
        %v3224 = vld [vmem:[%s3223] ss:$2 sm:$0xff]
        %s3225 = scalar_lea.vmem %s2406, 456 [#allocation3]
        %v3226 = vld [vmem:[%s3225] ss:$2 sm:$0xff]
        %v3227 = vmax.f32 %v3203, %v3212
        %v3228 = vmax.f32 %v3204, %v3214
        %v3229 = vmax.f32 %v3205, %v3216
        %v3230 = vmax.f32 %v3206, %v3218
        %v3231 = vmax.f32 %v3207, %v3220
        %v3232 = vmax.f32 %v3208, %v3222
        %v3233 = vmax.f32 %v3209, %v3224
        %v3234 = vmax.f32 %v3210, %v3226
        %s3235 = scalar_lea.vmem %s2406, 9 [#allocation3]
        %v3236 = vld [vmem:[%s3235] ss:$2 sm:$0xff]
        %s3237 = scalar_lea.vmem %s2406, 73 [#allocation3]
        %v3238 = vld [vmem:[%s3237] ss:$2 sm:$0xff]
        %s3239 = scalar_lea.vmem %s2406, 137 [#allocation3]
        %v3240 = vld [vmem:[%s3239] ss:$2 sm:$0xff]
        %s3241 = scalar_lea.vmem %s2406, 201 [#allocation3]
        %v3242 = vld [vmem:[%s3241] ss:$2 sm:$0xff]
        %s3243 = scalar_lea.vmem %s2406, 265 [#allocation3]
        %v3244 = vld [vmem:[%s3243] ss:$2 sm:$0xff]
        %s3245 = scalar_lea.vmem %s2406, 329 [#allocation3]
        %v3246 = vld [vmem:[%s3245] ss:$2 sm:$0xff]
        %s3247 = scalar_lea.vmem %s2406, 393 [#allocation3]
        %v3248 = vld [vmem:[%s3247] ss:$2 sm:$0xff]
        %s3249 = scalar_lea.vmem %s2406, 457 [#allocation3]
        %v3250 = vld [vmem:[%s3249] ss:$2 sm:$0xff]
        %v3251 = vmax.f32 %v3227, %v3236
        %v3252 = vmax.f32 %v3228, %v3238
        %v3253 = vmax.f32 %v3229, %v3240
        %v3254 = vmax.f32 %v3230, %v3242
        %v3255 = vmax.f32 %v3231, %v3244
        %v3256 = vmax.f32 %v3232, %v3246
        %v3257 = vmax.f32 %v3233, %v3248
        %v3258 = vmax.f32 %v3234, %v3250
        %v3259 = vadd.f32 %v411, %v3251
        %v3260 = vadd.f32 %v414, %v3252
        %v3261 = vadd.f32 %v419, %v3253
        %v3262 = vadd.f32 %v422, %v3254
        %v3263 = vadd.f32 %v427, %v3255
        %v3264 = vadd.f32 %v430, %v3256
        %v3265 = vadd.f32 %v435, %v3257
        %v3266 = vadd.f32 %v438, %v3258
        %3267 = vst.msk [vmem:[%s325] sm:$0xff] %vm1725, %v3259
        %3268 = vst.msk [vmem:[%s325 + $0x8] sm:$0xff] %vm1725, %v3260
        %3269 = vst.msk [vmem:[%s325 + $0x10] sm:$0xff] %vm1725, %v3261
        %3270 = vst.msk [vmem:[%s325 + $0x18] sm:$0xff] %vm1725, %v3262
        %3271 = vst.msk [vmem:[%s325 + $0x20] sm:$0xff] %vm1725, %v3263
        %3272 = vst.msk [vmem:[%s325 + $0x28] sm:$0xff] %vm1725, %v3264
        %3273 = vst.msk [vmem:[%s325 + $0x30] sm:$0xff] %vm1725, %v3265
        %3274 = vst.msk [vmem:[%s325 + $0x38] sm:$0xff] %vm1725, %v3266
        %s3275 = sand.u32 %s225, 1
        %s3276 = scalar_lea.sflag [#allocation5], %s3275
        %s3277 = sand.u32 %s225, 1
        %s3278 = smul.addr %s3277, 64
        %s3279 = scalar_lea.vmem [#allocation4], %s3278
        // Predicated region
        $region57: #{tpu_custom_call.1} parent=55 // pred_check
          %p3280 = pneg %p235
        $region58: #{tpu_custom_call.1} parent=55 // pred_check_branch
          %3282 = sbr.rel (%p3280) target = $region60
        $region59: #{tpu_custom_call.1} parent=55 // pred_region
          %s3284 = ssub.s32 1024, 1024
          %3285 = vsyncadd %s3276, %s3284
          %s3286 = smul.addr %s23, 8
          %s3287 = smul.addr %s3286, 128
          %s3288 = scalar_lea.hbm %s9, %s3287
          %s3289 = sshll.u32 %s3279, 4
          %s3290 = int_to_ptr.vmem [resolvable:$true] %s3289
          %3295 = dma.vmem_to_hbm [thread:$0]  %s3290, 1024, %s3288, %s3276, 128, 128, 8
        $region60: #{tpu_custom_call.1} parent=55 // pred_fallthru
          _
      $region56: #{tpu_custom_call.1} parent=5 // pred_fallthru
        _
      %p3296 = scmp.le.s32.totalorder 2, %s18
      // Predicated region
      $region61: #{tpu_custom_call.1} parent=5 // pred_check
        %p3297 = pneg %p3296
      $region62: #{tpu_custom_call.1} parent=5 // pred_check_branch
        %3299 = sbr.rel (%p3297) target = $region64
      $region63: #{tpu_custom_call.1} parent=5 // pred_region
        %s3300 = ssub.s32 %s18, 2
        // Predicated region
        $region65: #{tpu_custom_call.1} parent=63 // pred_check
          %p3301 = pneg %p241
        $region66: #{tpu_custom_call.1} parent=63 // pred_check_branch
          %3303 = sbr.rel (%p3301) target = $region68
        $region67: #{tpu_custom_call.1} parent=63 // pred_region
          %s3304 = sand.u32 %s226, 1
          %s3305 = scalar_lea.sflag [#allocation5], %s3304
          %s3306 = sand.u32 %s226, 1
          %s3307 = smul.addr %s3306, 64
          %s3308 = scalar_lea.vmem [#allocation4], %s3307
          %3309 = dma.done %s3305, 1024
        $region68: #{tpu_custom_call.1} parent=63 // pred_fallthru
          _
      $region64: #{tpu_custom_call.1} parent=5 // pred_fallthru
        _
    $region6: #{tpu_custom_call.1} parent=1 // loop_footer
      %s22 = sadd.s32 1, %s18
    $region7: #{tpu_custom_call.1} parent=1 // loop_footer_branch
      %17 = sbr.rel target = $region3
    $region8: #{tpu_custom_call.1} parent=1 // loop_exit
      _
    %3310 = vsyncpa [#allocation5], 1
    %s3311 = scalar_lea.sflag [#allocation5], 1
    %3312 = vsyncpa %s3311, 1

</llo_original>
